<compile_context>
chip_gen: v7x
topology: tpu7x:2x2x1
jax: 0.10.0
libtpu: 0.0.40
codegen_flags: <defaults>
</compile_context>

<pallas_src>
import functools

import jax
import jax.numpy as jnp
import numpy as np
from jax.experimental import pallas as pl
from jax.experimental.pallas import tpu as pltpu

# Fixed geometry of the synthesized base (input 3x16x16).
H1, W1, CIN, C1 = 16, 16, 3, 8      # conv1: 3 -> 8 at 16x16
H2, W2, C2 = 8, 8, 16               # conv2: 8 -> 16 at 8x8
H3, W3 = 4, 4                        # after pool2: 4x4x16
H4, W4 = 2, 2                        # after adaptive avgpool: 2x2x16
FLAT = C2 * H4 * W4                  # 64
FC = 32
OUT_LANES = 128                      # lane-dense padded head width


# ---------------------------------------------------------------------------
# Fused Pallas kernel: one grid step == B images stacked along the row axis.
# ---------------------------------------------------------------------------
def _fused_kernel(x_ref, R1_ref, b1_ref, PW1_ref, R2_ref, b2_ref, PW2_ref,
                  AWf1_ref, bf1_ref, Wf2_ref, bf2_ref, Whp_ref, bhp_ref,
                  out_ref, s1, s2, s3):
    def mm(a, b):
        return jnp.dot(a, b, preferred_element_type=jnp.float32)

    def shifted(x, delta, period):
        # result[r, :] = x[r + delta, :] if the source row lies in the same image, else 0.
        # period (16 or 8) is a power of two, so the in-image row index is iota & (period-1).
        rolled = jnp.roll(x, -delta, axis=0)                       # rolled[r] = x[r + delta]
        pos = jax.lax.broadcasted_iota(jnp.int32, x.shape, 0) & (period - 1)
        valid = (pos >= -delta) if delta < 0 else (pos < period - delta)
        return jnp.where(valid, rolled, 0.0)

    rows = x_ref.shape[0]                 # B * 16
    B8, B4, B = rows // 2, rows // 4, rows // 16

    a0 = x_ref[...]                                        # (B*16, 48)  rows=h, cols=w*3+ci

    # conv1 3x3 pad=1 (3->8) + ReLU: sublane shifts (XLU/VPU) + block-Toeplitz matmuls (MXU).
    acc = mm(shifted(a0, -1, H1), R1_ref[0])
    acc = acc + mm(a0, R1_ref[1])
    acc = acc + mm(shifted(a0, +1, H1), R1_ref[2])
    y1 = jnp.maximum(acc + b1_ref[...], 0.0)               # (B*16, 128) rows=h, cols=w*8+co

    # maxpool 2x2: rows via strided VMEM reads, columns via selector matmuls + VPU max.
    s1[...] = y1
    r = jnp.maximum(s1[pl.ds(0, B8, stride=2), :], s1[pl.ds(1, B8, stride=2), :])
    p1 = jnp.maximum(mm(r, PW1_ref[0]), mm(r, PW1_ref[1]))  # (B*8, 64)

    # conv2 3x3 pad=1 (8->16) + ReLU -> (B*8, 128)
    acc = mm(shifted(p1, -1, H2), R2_ref[0])
    acc = acc + mm(p1, R2_ref[1])
    acc = acc + mm(shifted(p1, +1, H2), R2_ref[2])
    y2 = jnp.maximum(acc + b2_ref[...], 0.0)

    # maxpool 2x2 -> (B*4, 64)
    s2[...] = y2
    r = jnp.maximum(s2[pl.ds(0, B4, stride=2), :], s2[pl.ds(1, B4, stride=2), :])
    p2 = jnp.maximum(mm(r, PW2_ref[0]), mm(r, PW2_ref[1]))

    # adaptive avgpool 4x4 -> 2x2: row-pair sums via strided reads; the column-pair sum, the
    # 0.25 scale and the NCHW flatten permutation are pre-folded into AWf1.
    s3[...] = p2
    q_h0 = s3[pl.ds(0, B, stride=4), :] + s3[pl.ds(1, B, stride=4), :]   # (B, 64)  h4 = 0
    q_h1 = s3[pl.ds(2, B, stride=4), :] + s3[pl.ds(3, B, stride=4), :]   # (B, 64)  h4 = 1

    # classifier (Dropouts are identity at inference).
    z = jnp.maximum(mm(q_h0, AWf1_ref[0]) + mm(q_h1, AWf1_ref[1]) + bf1_ref[...], 0.0)
    z = jnp.maximum(mm(z, Wf2_ref[...]) + bf2_ref[...], 0.0)              # (B, 32)
    out_ref[...] = (mm(z, Whp_ref[...]) + bhp_ref[...]).astype(out_ref.dtype)  # (B, 128)


# ---------------------------------------------------------------------------
# One-time parameter preprocessing (host-side numpy).
# ---------------------------------------------------------------------------
def _conv_toeplitz(w_oihw, wd, cin, cout):
    """Block-Toeplitz matrices R (3, wd*cin, wd*cout): a 3x3 pad=1 conv of X (X[r, w*cin+ci] =
    x[ci, r, w]) equals sum_ki shift_rows(X, ki-1) @ R[ki]."""
    w_oihw = np.asarray(w_oihw, np.float32)
    R = np.zeros((3, wd * cin, wd * cout), np.float32)
    for ki in range(3):
        for w in range(wd):
            for kj in range(3):
                wp = w + kj - 1
                if 0 <= wp < wd:
                    R[ki, wp * cin:(wp + 1) * cin, w * cout:(w + 1) * cout] = \
                        w_oihw[:, :, ki, kj].T
    return R


def _pool_cols(win, c):
    """Even/odd column selectors (2, win*c, wout*c) for 2x2 pooling of a (rows, win*c)
    activation laid out cols = w*c + channel."""
    wout = win // 2
    PW = np.zeros((2, win * c, wout * c), np.float32)
    for k in range(wout):
        for ch in range(c):
            PW[0, (2 * k) * c + ch, k * c + ch] = 1.0
            PW[1, (2 * k + 1) * c + ch, k * c + ch] = 1.0
    return PW


def build_fused_params(params):
    R1 = _conv_toeplitz(params["conv1_w"], W1, CIN, C1)          # (3, 48, 128)
    R2 = _conv_toeplitz(params["conv2_w"], W2, C1, C2)           # (3, 64, 128)
    b1row = np.tile(np.asarray(params["conv1_b"], np.float32), W1).reshape(1, W1 * C1)
    b2row = np.tile(np.asarray(params["conv2_b"], np.float32), W2).reshape(1, W2 * C2)

    PW1 = _pool_cols(W1, C1)                                     # (2, 128, 64)
    PW2 = _pool_cols(W2, C2)                                     # (2, 128, 64)
    PW3 = _pool_cols(W3, C2)
    AW = PW3[0] + PW3[1]                                         # (64, 32) column-pair sums

    # fc1 with PyTorch NCHW flatten order (idx = c*H4*W4 + h*W4 + w) folded in, split per h,
    # then the avgpool column sum AW and the 0.25 scale folded in too.
    fc1_w = np.asarray(params["fc1_w"], np.float32)
    Wf1 = np.zeros((H4, W4 * C2, FC), np.float32)
    for h in range(H4):
        for w in range(W4):
            for c in range(C2):
                Wf1[h, w * C2 + c, :] = fc1_w[c * (H4 * W4) + h * W4 + w, :]
    AWf1 = 0.25 * np.einsum("ij,hjk->hik", AW, Wf1)              # (2, 64, 32)

    f = jnp.asarray
    return dict(
        R1=f(R1), b1=f(b1row), PW1=f(PW1),
        R2=f(R2), b2=f(b2row), PW2=f(PW2),
        AWf1=f(AWf1),
        bf1=f(np.asarray(params["fc1_b"], np.float32).reshape(1, FC)),
        Wf2=f(np.asarray(params["fc2_w"], np.float32)),
        bf2=f(np.asarray(params["fc2_b"], np.float32).reshape(1, FC)),
        Wh=f(np.asarray(params["head_w"], np.float32)),
        bh=f(np.asarray(params["head_b"], np.float32).reshape(1, -1)),
    )


_WEIGHT_ORDER = ("R1", "b1", "PW1", "R2", "b2", "PW2", "AWf1", "bf1", "Wf2", "bf2")


@functools.partial(jax.jit, static_argnames=("block_b",))
def stanford_base_forward(fused, x_nchw, block_b=16):
    n = x_nchw.shape[0]
    num_classes = fused["Wh"].shape[1]
    nc_pad = pl.cdiv(num_classes, OUT_LANES) * OUT_LANES
    B = min(block_b, n)                       # images per grid step (M-fill vs TC occupancy)
    n_pad = pl.cdiv(n, B) * B
    grid = (n_pad // B,)

    # Stage input: NCHW -> per-image (H, W*C) slabs stacked along rows -> (n_pad*16, 48).
    x = x_nchw.astype(jnp.float32)
    if n_pad != n:
        x = jnp.pad(x, ((0, n_pad - n), (0, 0), (0, 0), (0, 0)))
    x2d = jnp.transpose(x, (0, 2, 3, 1)).reshape(n_pad * H1, W1 * CIN)

    # Lane-dense head: pad to 128 output columns; slice back to num_classes below.
    Whp = jnp.pad(fused["Wh"], ((0, 0), (0, nc_pad - num_classes)))
    bhp = jnp.pad(fused["bh"], ((0, 0), (0, nc_pad - num_classes)))

    weights = [fused[k] for k in _WEIGHT_ORDER] + [Whp, bhp]
    in_specs = [pl.BlockSpec((B * H1, W1 * CIN), lambda i: (i, 0))]
    in_specs += [pl.BlockSpec(w.shape, lambda i, r=w.ndim: (0,) * r) for w in weights]

    out = pl.pallas_call(
        _fused_kernel,
        grid=grid,
        in_specs=in_specs,
        out_specs=pl.BlockSpec((B, nc_pad), lambda i: (i, 0)),
        out_shape=jax.ShapeDtypeStruct((n_pad, nc_pad), jnp.float32),
        scratch_shapes=[
            pltpu.VMEM((B * H1, W1 * C1), jnp.float32),   # conv1 output (row-pool staging)
            pltpu.VMEM((B * H2, W2 * C2), jnp.float32),   # conv2 output
            pltpu.VMEM((B * H3, W3 * C2), jnp.float32),   # pool2 output (avgpool staging)
        ],
        compiler_params=pltpu.CompilerParams(
            dimension_semantics=("parallel",)),  # shard batch blocks across v7x TensorCores
    )(x2d, *weights)
    return out[:n, :num_classes]


# ---------------------------------------------------------------------------
# Parameter init (deterministic synthesized base) + pure-JAX reference.
# ---------------------------------------------------------------------------
def init_params(num_classes=10):
    key = jax.random.PRNGKey(42)
    ks = jax.random.split(key, 10)

    def w(k, shape, fan_in):
        return (jax.random.normal(k, shape, jnp.float32) / np.sqrt(fan_in)).astype(jnp.float32)

    return {
        "conv1_w": w(ks[0], (C1, CIN, 3, 3), CIN * 9),   # OIHW
        "conv1_b": w(ks[1], (C1,), 1),
        "conv2_w": w(ks[2], (C2, C1, 3, 3), C1 * 9),
        "conv2_b": w(ks[3], (C2,), 1),
        "fc1_w": w(ks[4], (FLAT, FC), FLAT),
        "fc1_b": w(ks[5], (FC,), 1),
        "fc2_w": w(ks[6], (FC, FC), FC),
        "fc2_b": w(ks[7], (FC,), 1),
        # classifier[6] = Sequential(Dropout(0.5), Linear(in_features=FC, num_classes))
        "head_w": w(ks[8], (FC, num_classes), FC),
        "head_b": w(ks[9], (num_classes,), 1),
    }


def reference_forward(params, x_nchw):
    x = jnp.transpose(x_nchw, (0, 2, 3, 1)).astype(jnp.float32)

    def conv(x, w, b):
        y = jax.lax.conv_general_dilated(
            x, jnp.transpose(w, (2, 3, 1, 0)), (1, 1), "SAME",
            dimension_numbers=("NHWC", "HWIO", "NHWC"))
        return jnp.maximum(y + b, 0.0)

    def pool(x, fn):
        N, H, W, C = x.shape
        return fn(x.reshape(N, H // 2, 2, W // 2, 2, C), axis=(2, 4))

    x = pool(conv(x, params["conv1_w"], params["conv1_b"]), jnp.max)
    x = pool(conv(x, params["conv2_w"], params["conv2_b"]), jnp.max)
    x = pool(x, jnp.mean)
    x = jnp.transpose(x, (0, 3, 1, 2)).reshape(x.shape[0], -1)
    x = jnp.maximum(x @ params["fc1_w"] + params["fc1_b"], 0.0)
    x = jnp.maximum(x @ params["fc2_w"] + params["fc2_b"], 0.0)
    return x @ params["head_w"] + params["head_b"]


if __name__ == "__main__":
    num_classes = 10
    params = init_params(num_classes)
    fused = build_fused_params(params)

    # 20 images: exercises batch padding (block of 16 -> padded to 32 -> grid of 2 blocks).
    x = jax.random.normal(jax.random.PRNGKey(0), (20, 3, 16, 16), jnp.float32)  # NCHW

    logits = jax.block_until_ready(stanford_base_forward(fused, x))
    assert logits.shape == (20, num_classes), logits.shape

    ref = jax.block_until_ready(reference_forward(params, x))
    np.testing.assert_allclose(np.asarray(logits), np.asarray(ref), rtol=2e-3, atol=2e-3)

    print("KERNEL_OK")
</pallas_src>

<mosaic_0001>
module attributes {stable_mosaic.version = 11 : i64} {
  func.func @_fused_kernel(%arg0: i32, %arg1: memref<256x48xf32, #tpu.memory_space<vmem>>, %arg2: memref<3x48x128xf32, #tpu.memory_space<vmem>>, %arg3: memref<1x128xf32, #tpu.memory_space<vmem>>, %arg4: memref<2x128x64xf32, #tpu.memory_space<vmem>>, %arg5: memref<3x64x128xf32, #tpu.memory_space<vmem>>, %arg6: memref<1x128xf32, #tpu.memory_space<vmem>>, %arg7: memref<2x128x64xf32, #tpu.memory_space<vmem>>, %arg8: memref<2x64x32xf32, #tpu.memory_space<vmem>>, %arg9: memref<1x32xf32, #tpu.memory_space<vmem>>, %arg10: memref<32x32xf32, #tpu.memory_space<vmem>>, %arg11: memref<1x32xf32, #tpu.memory_space<vmem>>, %arg12: memref<32x128xf32, #tpu.memory_space<vmem>>, %arg13: memref<1x128xf32, #tpu.memory_space<vmem>>, %arg14: memref<16x128xf32, #tpu.memory_space<vmem>>, %arg15: memref<256x128xf32, #tpu.memory_space<vmem>>, %arg16: memref<128x128xf32, #tpu.memory_space<vmem>>, %arg17: memref<64x64xf32, #tpu.memory_space<vmem>>) attributes {dimension_semantics = [#tpu.dimension_semantics<parallel>], iteration_bounds = array<i64: 2>, scalar_prefetch = 0 : i64, scratch_operands = 3 : i64, tpu.core_type = #tpu.core_type<tc>, window_params = [{transform_indices = @transform_0, window_bounds = array<i64: 256, 48>}, {pipeline_mode = #tpu.pipeline_mode<synchronous>, transform_indices = @transform_1, window_bounds = array<i64: 3, 48, 128>}, {pipeline_mode = #tpu.pipeline_mode<synchronous>, transform_indices = @transform_2, window_bounds = array<i64: 1, 128>}, {pipeline_mode = #tpu.pipeline_mode<synchronous>, transform_indices = @transform_3, window_bounds = array<i64: 2, 128, 64>}, {pipeline_mode = #tpu.pipeline_mode<synchronous>, transform_indices = @transform_4, window_bounds = array<i64: 3, 64, 128>}, {pipeline_mode = #tpu.pipeline_mode<synchronous>, transform_indices = @transform_5, window_bounds = array<i64: 1, 128>}, {pipeline_mode = #tpu.pipeline_mode<synchronous>, transform_indices = @transform_6, window_bounds = array<i64: 2, 128, 64>}, {pipeline_mode = #tpu.pipeline_mode<synchronous>, transform_indices = @transform_7, window_bounds = array<i64: 2, 64, 32>}, {pipeline_mode = #tpu.pipeline_mode<synchronous>, transform_indices = @transform_8, window_bounds = array<i64: 1, 32>}, {pipeline_mode = #tpu.pipeline_mode<synchronous>, transform_indices = @transform_9, window_bounds = array<i64: 32, 32>}, {pipeline_mode = #tpu.pipeline_mode<synchronous>, transform_indices = @transform_10, window_bounds = array<i64: 1, 32>}, {pipeline_mode = #tpu.pipeline_mode<synchronous>, transform_indices = @transform_11, window_bounds = array<i64: 32, 128>}, {pipeline_mode = #tpu.pipeline_mode<synchronous>, transform_indices = @transform_12, window_bounds = array<i64: 1, 128>}, {transform_indices = @transform_13, window_bounds = array<i64: 16, 128>}]} {
    %c0 = arith.constant 0 : index
    %c0_0 = arith.constant 0 : index
    %0 = vector.load %arg1[%c0, %c0_0] : memref<256x48xf32, #tpu.memory_space<vmem>>, vector<256x48xf32>
    %1 = vector.extract_strided_slice %0 {offsets = [255, 0], sizes = [1, 48], strides = [1, 1]} : vector<256x48xf32> to vector<1x48xf32>
    %2 = vector.extract_strided_slice %0 {offsets = [0, 0], sizes = [255, 48], strides = [1, 1]} : vector<256x48xf32> to vector<255x48xf32>
    %3 = tpu.concatenate %1, %2 in 0 : vector<1x48xf32>, vector<255x48xf32> -> vector<256x48xf32>
    %4 = tpu.iota {dimensions = array<i32: 0>} : vector<256x48xi32>
    %c15_i32 = arith.constant 15 : i32
    %5 = vector.broadcast %c15_i32 : i32 to vector<256x48xi32>
    %6 = arith.andi %4, %5 : vector<256x48xi32>
    %c1_i32 = arith.constant 1 : i32
    %7 = vector.broadcast %c1_i32 : i32 to vector<256x48xi32>
    %8 = arith.cmpi sge, %6, %7 : vector<256x48xi32>
    %cst = arith.constant 0.000000e+00 : f32
    %9 = vector.broadcast %cst : f32 to vector<256x48xf32>
    %10 = arith.select %8, %3, %9 : vector<256x48xi1>, vector<256x48xf32>
    %c0_1 = arith.constant 0 : index
    %c0_2 = arith.constant 0 : index
    %c0_3 = arith.constant 0 : index
    %11 = vector.load %arg2[%c0_1, %c0_2, %c0_3] : memref<3x48x128xf32, #tpu.memory_space<vmem>>, vector<1x48x128xf32>
    %12 = vector.shape_cast %11 : vector<1x48x128xf32> to vector<48x128xf32>
    %cst_4 = arith.constant dense<0.000000e+00> : vector<256x128xf32>
    %13 = tpu.matmul %10, %12, %cst_4 {dimension_numbers = #tpu.dot_dimension_numbers<[1], [0], [0], [1], [0, 0, 1, 1], [], []>} : vector<256x48xf32>, vector<48x128xf32>, vector<256x128xf32> -> vector<256x128xf32>
    %c1 = arith.constant 1 : index
    %c0_5 = arith.constant 0 : index
    %c0_6 = arith.constant 0 : index
    %14 = vector.load %arg2[%c1, %c0_5, %c0_6] : memref<3x48x128xf32, #tpu.memory_space<vmem>>, vector<1x48x128xf32>
    %15 = vector.shape_cast %14 : vector<1x48x128xf32> to vector<48x128xf32>
    %cst_7 = arith.constant dense<0.000000e+00> : vector<256x128xf32>
    %16 = tpu.matmul %0, %15, %cst_7 {dimension_numbers = #tpu.dot_dimension_numbers<[1], [0], [0], [1], [0, 0, 1, 1], [], []>} : vector<256x48xf32>, vector<48x128xf32>, vector<256x128xf32> -> vector<256x128xf32>
    %17 = arith.addf %13, %16 : vector<256x128xf32>
    %18 = vector.extract_strided_slice %0 {offsets = [1, 0], sizes = [255, 48], strides = [1, 1]} : vector<256x48xf32> to vector<255x48xf32>
    %19 = vector.extract_strided_slice %0 {offsets = [0, 0], sizes = [1, 48], strides = [1, 1]} : vector<256x48xf32> to vector<1x48xf32>
    %20 = tpu.concatenate %18, %19 in 0 : vector<255x48xf32>, vector<1x48xf32> -> vector<256x48xf32>
    %21 = tpu.iota {dimensions = array<i32: 0>} : vector<256x48xi32>
    %c15_i32_8 = arith.constant 15 : i32
    %22 = vector.broadcast %c15_i32_8 : i32 to vector<256x48xi32>
    %23 = arith.andi %21, %22 : vector<256x48xi32>
    %c15_i32_9 = arith.constant 15 : i32
    %24 = vector.broadcast %c15_i32_9 : i32 to vector<256x48xi32>
    %25 = arith.cmpi slt, %23, %24 : vector<256x48xi32>
    %cst_10 = arith.constant 0.000000e+00 : f32
    %26 = vector.broadcast %cst_10 : f32 to vector<256x48xf32>
    %27 = arith.select %25, %20, %26 : vector<256x48xi1>, vector<256x48xf32>
    %c2 = arith.constant 2 : index
    %c0_11 = arith.constant 0 : index
    %c0_12 = arith.constant 0 : index
    %28 = vector.load %arg2[%c2, %c0_11, %c0_12] : memref<3x48x128xf32, #tpu.memory_space<vmem>>, vector<1x48x128xf32>
    %29 = vector.shape_cast %28 : vector<1x48x128xf32> to vector<48x128xf32>
    %cst_13 = arith.constant dense<0.000000e+00> : vector<256x128xf32>
    %30 = tpu.matmul %27, %29, %cst_13 {dimension_numbers = #tpu.dot_dimension_numbers<[1], [0], [0], [1], [0, 0, 1, 1], [], []>} : vector<256x48xf32>, vector<48x128xf32>, vector<256x128xf32> -> vector<256x128xf32>
    %31 = arith.addf %17, %30 : vector<256x128xf32>
    %c0_14 = arith.constant 0 : index
    %c0_15 = arith.constant 0 : index
    %32 = vector.load %arg3[%c0_14, %c0_15] : memref<1x128xf32, #tpu.memory_space<vmem>>, vector<1x128xf32>
    %33 = vector.broadcast %32 : vector<1x128xf32> to vector<256x128xf32>
    %34 = arith.addf %31, %33 : vector<256x128xf32>
    %cst_16 = arith.constant 0.000000e+00 : f32
    %35 = vector.broadcast %cst_16 : f32 to vector<256x128xf32>
    %36 = arith.maximumf %34, %35 : vector<256x128xf32>
    %c0_17 = arith.constant 0 : index
    %c0_18 = arith.constant 0 : index
    %37 = vector.load %arg15[%c0_17, %c0_18] : memref<256x128xf32, #tpu.memory_space<vmem>>, vector<256x128xf32>
    tpu.vector_store %arg15[%c0_17, %c0_18], %36 {strides = array<i32>} : memref<256x128xf32, #tpu.memory_space<vmem>>, vector<256x128xf32>,
    %c0_19 = arith.constant 0 : index
    %c0_20 = arith.constant 0 : index
    %38 = tpu.strided_load %arg15[%c0_19, %c0_20] {strides = array<i32: 2, 1>} : memref<256x128xf32, #tpu.memory_space<vmem>>, vector<128x128xf32>
    %c1_21 = arith.constant 1 : index
    %c0_22 = arith.constant 0 : index
    %39 = tpu.strided_load %arg15[%c1_21, %c0_22] {strides = array<i32: 2, 1>} : memref<256x128xf32, #tpu.memory_space<vmem>>, vector<128x128xf32>
    %40 = arith.maximumf %38, %39 : vector<128x128xf32>
    %c0_23 = arith.constant 0 : index
    %c0_24 = arith.constant 0 : index
    %c0_25 = arith.constant 0 : index
    %41 = vector.load %arg4[%c0_23, %c0_24, %c0_25] : memref<2x128x64xf32, #tpu.memory_space<vmem>>, vector<1x128x64xf32>
    %42 = vector.shape_cast %41 : vector<1x128x64xf32> to vector<128x64xf32>
    %cst_26 = arith.constant dense<0.000000e+00> : vector<128x64xf32>
    %43 = tpu.matmul %40, %42, %cst_26 {dimension_numbers = #tpu.dot_dimension_numbers<[1], [0], [0], [1], [0, 0, 1, 1], [], []>} : vector<128x128xf32>, vector<128x64xf32>, vector<128x64xf32> -> vector<128x64xf32>
    %c1_27 = arith.constant 1 : index
    %c0_28 = arith.constant 0 : index
    %c0_29 = arith.constant 0 : index
    %44 = vector.load %arg4[%c1_27, %c0_28, %c0_29] : memref<2x128x64xf32, #tpu.memory_space<vmem>>, vector<1x128x64xf32>
    %45 = vector.shape_cast %44 : vector<1x128x64xf32> to vector<128x64xf32>
    %cst_30 = arith.constant dense<0.000000e+00> : vector<128x64xf32>
    %46 = tpu.matmul %40, %45, %cst_30 {dimension_numbers = #tpu.dot_dimension_numbers<[1], [0], [0], [1], [0, 0, 1, 1], [], []>} : vector<128x128xf32>, vector<128x64xf32>, vector<128x64xf32> -> vector<128x64xf32>
    %47 = arith.maximumf %43, %46 : vector<128x64xf32>
    %48 = vector.extract_strided_slice %47 {offsets = [127, 0], sizes = [1, 64], strides = [1, 1]} : vector<128x64xf32> to vector<1x64xf32>
    %49 = vector.extract_strided_slice %47 {offsets = [0, 0], sizes = [127, 64], strides = [1, 1]} : vector<128x64xf32> to vector<127x64xf32>
    %50 = tpu.concatenate %48, %49 in 0 : vector<1x64xf32>, vector<127x64xf32> -> vector<128x64xf32>
    %51 = tpu.iota {dimensions = array<i32: 0>} : vector<128x64xi32>
    %c7_i32 = arith.constant 7 : i32
    %52 = vector.broadcast %c7_i32 : i32 to vector<128x64xi32>
    %53 = arith.andi %51, %52 : vector<128x64xi32>
    %c1_i32_31 = arith.constant 1 : i32
    %54 = vector.broadcast %c1_i32_31 : i32 to vector<128x64xi32>
    %55 = arith.cmpi sge, %53, %54 : vector<128x64xi32>
    %cst_32 = arith.constant 0.000000e+00 : f32
    %56 = vector.broadcast %cst_32 : f32 to vector<128x64xf32>
    %57 = arith.select %55, %50, %56 : vector<128x64xi1>, vector<128x64xf32>
    %c0_33 = arith.constant 0 : index
    %c0_34 = arith.constant 0 : index
    %c0_35 = arith.constant 0 : index
    %58 = vector.load %arg5[%c0_33, %c0_34, %c0_35] : memref<3x64x128xf32, #tpu.memory_space<vmem>>, vector<1x64x128xf32>
    %59 = vector.shape_cast %58 : vector<1x64x128xf32> to vector<64x128xf32>
    %cst_36 = arith.constant dense<0.000000e+00> : vector<128x128xf32>
    %60 = tpu.matmul %57, %59, %cst_36 {dimension_numbers = #tpu.dot_dimension_numbers<[1], [0], [0], [1], [0, 0, 1, 1], [], []>} : vector<128x64xf32>, vector<64x128xf32>, vector<128x128xf32> -> vector<128x128xf32>
    %c1_37 = arith.constant 1 : index
    %c0_38 = arith.constant 0 : index
    %c0_39 = arith.constant 0 : index
    %61 = vector.load %arg5[%c1_37, %c0_38, %c0_39] : memref<3x64x128xf32, #tpu.memory_space<vmem>>, vector<1x64x128xf32>
    %62 = vector.shape_cast %61 : vector<1x64x128xf32> to vector<64x128xf32>
    %cst_40 = arith.constant dense<0.000000e+00> : vector<128x128xf32>
    %63 = tpu.matmul %47, %62, %cst_40 {dimension_numbers = #tpu.dot_dimension_numbers<[1], [0], [0], [1], [0, 0, 1, 1], [], []>} : vector<128x64xf32>, vector<64x128xf32>, vector<128x128xf32> -> vector<128x128xf32>
    %64 = arith.addf %60, %63 : vector<128x128xf32>
    %65 = vector.extract_strided_slice %47 {offsets = [1, 0], sizes = [127, 64], strides = [1, 1]} : vector<128x64xf32> to vector<127x64xf32>
    %66 = vector.extract_strided_slice %47 {offsets = [0, 0], sizes = [1, 64], strides = [1, 1]} : vector<128x64xf32> to vector<1x64xf32>
    %67 = tpu.concatenate %65, %66 in 0 : vector<127x64xf32>, vector<1x64xf32> -> vector<128x64xf32>
    %68 = tpu.iota {dimensions = array<i32: 0>} : vector<128x64xi32>
    %c7_i32_41 = arith.constant 7 : i32
    %69 = vector.broadcast %c7_i32_41 : i32 to vector<128x64xi32>
    %70 = arith.andi %68, %69 : vector<128x64xi32>
    %c7_i32_42 = arith.constant 7 : i32
    %71 = vector.broadcast %c7_i32_42 : i32 to vector<128x64xi32>
    %72 = arith.cmpi slt, %70, %71 : vector<128x64xi32>
    %cst_43 = arith.constant 0.000000e+00 : f32
    %73 = vector.broadcast %cst_43 : f32 to vector<128x64xf32>
    %74 = arith.select %72, %67, %73 : vector<128x64xi1>, vector<128x64xf32>
    %c2_44 = arith.constant 2 : index
    %c0_45 = arith.constant 0 : index
    %c0_46 = arith.constant 0 : index
    %75 = vector.load %arg5[%c2_44, %c0_45, %c0_46] : memref<3x64x128xf32, #tpu.memory_space<vmem>>, vector<1x64x128xf32>
    %76 = vector.shape_cast %75 : vector<1x64x128xf32> to vector<64x128xf32>
    %cst_47 = arith.constant dense<0.000000e+00> : vector<128x128xf32>
    %77 = tpu.matmul %74, %76, %cst_47 {dimension_numbers = #tpu.dot_dimension_numbers<[1], [0], [0], [1], [0, 0, 1, 1], [], []>} : vector<128x64xf32>, vector<64x128xf32>, vector<128x128xf32> -> vector<128x128xf32>
    %78 = arith.addf %64, %77 : vector<128x128xf32>
    %c0_48 = arith.constant 0 : index
    %c0_49 = arith.constant 0 : index
    %79 = vector.load %arg6[%c0_48, %c0_49] : memref<1x128xf32, #tpu.memory_space<vmem>>, vector<1x128xf32>
    %80 = vector.broadcast %79 : vector<1x128xf32> to vector<128x128xf32>
    %81 = arith.addf %78, %80 : vector<128x128xf32>
    %cst_50 = arith.constant 0.000000e+00 : f32
    %82 = vector.broadcast %cst_50 : f32 to vector<128x128xf32>
    %83 = arith.maximumf %81, %82 : vector<128x128xf32>
    %c0_51 = arith.constant 0 : index
    %c0_52 = arith.constant 0 : index
    %84 = vector.load %arg16[%c0_51, %c0_52] : memref<128x128xf32, #tpu.memory_space<vmem>>, vector<128x128xf32>
    tpu.vector_store %arg16[%c0_51, %c0_52], %83 {strides = array<i32>} : memref<128x128xf32, #tpu.memory_space<vmem>>, vector<128x128xf32>,
    %c0_53 = arith.constant 0 : index
    %c0_54 = arith.constant 0 : index
    %85 = tpu.strided_load %arg16[%c0_53, %c0_54] {strides = array<i32: 2, 1>} : memref<128x128xf32, #tpu.memory_space<vmem>>, vector<64x128xf32>
    %c1_55 = arith.constant 1 : index
    %c0_56 = arith.constant 0 : index
    %86 = tpu.strided_load %arg16[%c1_55, %c0_56] {strides = array<i32: 2, 1>} : memref<128x128xf32, #tpu.memory_space<vmem>>, vector<64x128xf32>
    %87 = arith.maximumf %85, %86 : vector<64x128xf32>
    %c0_57 = arith.constant 0 : index
    %c0_58 = arith.constant 0 : index
    %c0_59 = arith.constant 0 : index
    %88 = vector.load %arg7[%c0_57, %c0_58, %c0_59] : memref<2x128x64xf32, #tpu.memory_space<vmem>>, vector<1x128x64xf32>
    %89 = vector.shape_cast %88 : vector<1x128x64xf32> to vector<128x64xf32>
    %cst_60 = arith.constant dense<0.000000e+00> : vector<64x64xf32>
    %90 = tpu.matmul %87, %89, %cst_60 {dimension_numbers = #tpu.dot_dimension_numbers<[1], [0], [0], [1], [0, 0, 1, 1], [], []>} : vector<64x128xf32>, vector<128x64xf32>, vector<64x64xf32> -> vector<64x64xf32>
    %c1_61 = arith.constant 1 : index
    %c0_62 = arith.constant 0 : index
    %c0_63 = arith.constant 0 : index
    %91 = vector.load %arg7[%c1_61, %c0_62, %c0_63] : memref<2x128x64xf32, #tpu.memory_space<vmem>>, vector<1x128x64xf32>
    %92 = vector.shape_cast %91 : vector<1x128x64xf32> to vector<128x64xf32>
    %cst_64 = arith.constant dense<0.000000e+00> : vector<64x64xf32>
    %93 = tpu.matmul %87, %92, %cst_64 {dimension_numbers = #tpu.dot_dimension_numbers<[1], [0], [0], [1], [0, 0, 1, 1], [], []>} : vector<64x128xf32>, vector<128x64xf32>, vector<64x64xf32> -> vector<64x64xf32>
    %94 = arith.maximumf %90, %93 : vector<64x64xf32>
    %c0_65 = arith.constant 0 : index
    %c0_66 = arith.constant 0 : index
    %95 = vector.load %arg17[%c0_65, %c0_66] : memref<64x64xf32, #tpu.memory_space<vmem>>, vector<64x64xf32>
    tpu.vector_store %arg17[%c0_65, %c0_66], %94 {strides = array<i32>} : memref<64x64xf32, #tpu.memory_space<vmem>>, vector<64x64xf32>,
    %c0_67 = arith.constant 0 : index
    %c0_68 = arith.constant 0 : index
    %96 = tpu.strided_load %arg17[%c0_67, %c0_68] {strides = array<i32: 4, 1>} : memref<64x64xf32, #tpu.memory_space<vmem>>, vector<16x64xf32>
    %c1_69 = arith.constant 1 : index
    %c0_70 = arith.constant 0 : index
    %97 = tpu.strided_load %arg17[%c1_69, %c0_70] {strides = array<i32: 4, 1>} : memref<64x64xf32, #tpu.memory_space<vmem>>, vector<16x64xf32>
    %98 = arith.addf %96, %97 : vector<16x64xf32>
    %c2_71 = arith.constant 2 : index
    %c0_72 = arith.constant 0 : index
    %99 = tpu.strided_load %arg17[%c2_71, %c0_72] {strides = array<i32: 4, 1>} : memref<64x64xf32, #tpu.memory_space<vmem>>, vector<16x64xf32>
    %c3 = arith.constant 3 : index
    %c0_73 = arith.constant 0 : index
    %100 = tpu.strided_load %arg17[%c3, %c0_73] {strides = array<i32: 4, 1>} : memref<64x64xf32, #tpu.memory_space<vmem>>, vector<16x64xf32>
    %101 = arith.addf %99, %100 : vector<16x64xf32>
    %c0_74 = arith.constant 0 : index
    %c0_75 = arith.constant 0 : index
    %c0_76 = arith.constant 0 : index
    %102 = vector.load %arg8[%c0_74, %c0_75, %c0_76] : memref<2x64x32xf32, #tpu.memory_space<vmem>>, vector<1x64x32xf32>
    %103 = vector.shape_cast %102 : vector<1x64x32xf32> to vector<64x32xf32>
    %cst_77 = arith.constant dense<0.000000e+00> : vector<16x32xf32>
    %104 = tpu.matmul %98, %103, %cst_77 {dimension_numbers = #tpu.dot_dimension_numbers<[1], [0], [0], [1], [0, 0, 1, 1], [], []>} : vector<16x64xf32>, vector<64x32xf32>, vector<16x32xf32> -> vector<16x32xf32>
    %c1_78 = arith.constant 1 : index
    %c0_79 = arith.constant 0 : index
    %c0_80 = arith.constant 0 : index
    %105 = vector.load %arg8[%c1_78, %c0_79, %c0_80] : memref<2x64x32xf32, #tpu.memory_space<vmem>>, vector<1x64x32xf32>
    %106 = vector.shape_cast %105 : vector<1x64x32xf32> to vector<64x32xf32>
    %cst_81 = arith.constant dense<0.000000e+00> : vector<16x32xf32>
    %107 = tpu.matmul %101, %106, %cst_81 {dimension_numbers = #tpu.dot_dimension_numbers<[1], [0], [0], [1], [0, 0, 1, 1], [], []>} : vector<16x64xf32>, vector<64x32xf32>, vector<16x32xf32> -> vector<16x32xf32>
    %108 = arith.addf %104, %107 : vector<16x32xf32>
    %c0_82 = arith.constant 0 : index
    %c0_83 = arith.constant 0 : index
    %109 = vector.load %arg9[%c0_82, %c0_83] : memref<1x32xf32, #tpu.memory_space<vmem>>, vector<1x32xf32>
    %110 = vector.broadcast %109 : vector<1x32xf32> to vector<16x32xf32>
    %111 = arith.addf %108, %110 : vector<16x32xf32>
    %cst_84 = arith.constant 0.000000e+00 : f32
    %112 = vector.broadcast %cst_84 : f32 to vector<16x32xf32>
    %113 = arith.maximumf %111, %112 : vector<16x32xf32>
    %c0_85 = arith.constant 0 : index
    %c0_86 = arith.constant 0 : index
    %114 = vector.load %arg10[%c0_85, %c0_86] : memref<32x32xf32, #tpu.memory_space<vmem>>, vector<32x32xf32>
    %cst_87 = arith.constant dense<0.000000e+00> : vector<16x32xf32>
    %115 = tpu.matmul %113, %114, %cst_87 {dimension_numbers = #tpu.dot_dimension_numbers<[1], [0], [0], [1], [0, 0, 1, 1], [], []>} : vector<16x32xf32>, vector<32x32xf32>, vector<16x32xf32> -> vector<16x32xf32>
    %c0_88 = arith.constant 0 : index
    %c0_89 = arith.constant 0 : index
    %116 = vector.load %arg11[%c0_88, %c0_89] : memref<1x32xf32, #tpu.memory_space<vmem>>, vector<1x32xf32>
    %117 = vector.broadcast %116 : vector<1x32xf32> to vector<16x32xf32>
    %118 = arith.addf %115, %117 : vector<16x32xf32>
    %cst_90 = arith.constant 0.000000e+00 : f32
    %119 = vector.broadcast %cst_90 : f32 to vector<16x32xf32>
    %120 = arith.maximumf %118, %119 : vector<16x32xf32>
    %c0_91 = arith.constant 0 : index
    %c0_92 = arith.constant 0 : index
    %121 = vector.load %arg12[%c0_91, %c0_92] : memref<32x128xf32, #tpu.memory_space<vmem>>, vector<32x128xf32>
    %cst_93 = arith.constant dense<0.000000e+00> : vector<16x128xf32>
    %122 = tpu.matmul %120, %121, %cst_93 {dimension_numbers = #tpu.dot_dimension_numbers<[1], [0], [0], [1], [0, 0, 1, 1], [], []>} : vector<16x32xf32>, vector<32x128xf32>, vector<16x128xf32> -> vector<16x128xf32>
    %c0_94 = arith.constant 0 : index
    %c0_95 = arith.constant 0 : index
    %123 = vector.load %arg13[%c0_94, %c0_95] : memref<1x128xf32, #tpu.memory_space<vmem>>, vector<1x128xf32>
    %124 = vector.broadcast %123 : vector<1x128xf32> to vector<16x128xf32>
    %125 = arith.addf %122, %124 : vector<16x128xf32>
    %c0_96 = arith.constant 0 : index
    %c0_97 = arith.constant 0 : index
    %126 = vector.load %arg14[%c0_96, %c0_97] : memref<16x128xf32, #tpu.memory_space<vmem>>, vector<16x128xf32>
    tpu.vector_store %arg14[%c0_96, %c0_97], %125 {strides = array<i32>} : memref<16x128xf32, #tpu.memory_space<vmem>>, vector<16x128xf32>,
    return
  }
  func.func @transform_0(%arg0: i32) -> (i32, i32) {
    %c0_i32 = arith.constant 0 : i32
    %c0_i32_0 = arith.constant 0 : i32
    return %arg0, %c0_i32 : i32, i32
  }
  func.func @transform_1(%arg0: i32) -> (i32, i32, i32) {
    %c0_i32 = arith.constant 0 : i32
    %c0_i32_0 = arith.constant 0 : i32
    %c0_i32_1 = arith.constant 0 : i32
    %c0_i32_2 = arith.constant 0 : i32
    return %c0_i32, %c0_i32_0, %c0_i32_1 : i32, i32, i32
  }
  func.func @transform_2(%arg0: i32) -> (i32, i32) {
    %c0_i32 = arith.constant 0 : i32
    %c0_i32_0 = arith.constant 0 : i32
    %c0_i32_1 = arith.constant 0 : i32
    return %c0_i32, %c0_i32_0 : i32, i32
  }
  func.func @transform_3(%arg0: i32) -> (i32, i32, i32) {
    %c0_i32 = arith.constant 0 : i32
    %c0_i32_0 = arith.constant 0 : i32
    %c0_i32_1 = arith.constant 0 : i32
    %c0_i32_2 = arith.constant 0 : i32
    return %c0_i32, %c0_i32_0, %c0_i32_1 : i32, i32, i32
  }
  func.func @transform_4(%arg0: i32) -> (i32, i32, i32) {
    %c0_i32 = arith.constant 0 : i32
    %c0_i32_0 = arith.constant 0 : i32
    %c0_i32_1 = arith.constant 0 : i32
    %c0_i32_2 = arith.constant 0 : i32
    return %c0_i32, %c0_i32_0, %c0_i32_1 : i32, i32, i32
  }
  func.func @transform_5(%arg0: i32) -> (i32, i32) {
    %c0_i32 = arith.constant 0 : i32
    %c0_i32_0 = arith.constant 0 : i32
    %c0_i32_1 = arith.constant 0 : i32
    return %c0_i32, %c0_i32_0 : i32, i32
  }
  func.func @transform_6(%arg0: i32) -> (i32, i32, i32) {
    %c0_i32 = arith.constant 0 : i32
    %c0_i32_0 = arith.constant 0 : i32
    %c0_i32_1 = arith.constant 0 : i32
    %c0_i32_2 = arith.constant 0 : i32
    return %c0_i32, %c0_i32_0, %c0_i32_1 : i32, i32, i32
  }
  func.func @transform_7(%arg0: i32) -> (i32, i32, i32) {
    %c0_i32 = arith.constant 0 : i32
    %c0_i32_0 = arith.constant 0 : i32
    %c0_i32_1 = arith.constant 0 : i32
    %c0_i32_2 = arith.constant 0 : i32
    return %c0_i32, %c0_i32_0, %c0_i32_1 : i32, i32, i32
  }
  func.func @transform_8(%arg0: i32) -> (i32, i32) {
    %c0_i32 = arith.constant 0 : i32
    %c0_i32_0 = arith.constant 0 : i32
    %c0_i32_1 = arith.constant 0 : i32
    return %c0_i32, %c0_i32_0 : i32, i32
  }
  func.func @transform_9(%arg0: i32) -> (i32, i32) {
    %c0_i32 = arith.constant 0 : i32
    %c0_i32_0 = arith.constant 0 : i32
    %c0_i32_1 = arith.constant 0 : i32
    return %c0_i32, %c0_i32_0 : i32, i32
  }
  func.func @transform_10(%arg0: i32) -> (i32, i32) {
    %c0_i32 = arith.constant 0 : i32
    %c0_i32_0 = arith.constant 0 : i32
    %c0_i32_1 = arith.constant 0 : i32
    return %c0_i32, %c0_i32_0 : i32, i32
  }
  func.func @transform_11(%arg0: i32) -> (i32, i32) {
    %c0_i32 = arith.constant 0 : i32
    %c0_i32_0 = arith.constant 0 : i32
    %c0_i32_1 = arith.constant 0 : i32
    return %c0_i32, %c0_i32_0 : i32, i32
  }
  func.func @transform_12(%arg0: i32) -> (i32, i32) {
    %c0_i32 = arith.constant 0 : i32
    %c0_i32_0 = arith.constant 0 : i32
    %c0_i32_1 = arith.constant 0 : i32
    return %c0_i32, %c0_i32_0 : i32, i32
  }
  func.func @transform_13(%arg0: i32) -> (i32, i32) {
    %c0_i32 = arith.constant 0 : i32
    %c0_i32_0 = arith.constant 0 : i32
    return %arg0, %c0_i32 : i32, i32
  }
}

</mosaic_0001>

<llo_original>
// kernel: stanford_base_forward.1
$region0: #{stanford_base_forward.1}
  #allocation0 [shape = 'u32[]', space=smem, size = 0x4, offset = 0x4, fixed_abs, tag = 'smem constant byte address 0x4 - core index']
  #allocation1 [shape = 'u32[144,128]{1,0:T(1,128)}', space=vmem, size = 0x12000, scoped, tag = 'internal scratch']
  #allocation2 [shape = 'f32[256,128]{1,0:T(8,128)}', space=vmem, size = 0x20000, scoped, tag = 'scratch operand']
  #allocation3 [shape = 'f32[128,128]{1,0:T(8,128)}', space=vmem, size = 0x10000, scoped, tag = 'scratch operand']
  #allocation4 [shape = 'f32[64,64]{1,0:T(8,128)}', space=vmem, size = 0x8000, scoped, tag = 'scratch operand']
  %s0 = inlined_call_operand.vmem [shape: f32[512,48], index: 0, kind: input, shape index: {}]
  %s1 = inlined_call_operand.vmem [shape: f32[3,48,128], index: 1, kind: input, shape index: {}]
  %s2 = inlined_call_operand.vmem [shape: f32[1,128], index: 2, kind: input, shape index: {}]
  %s3 = inlined_call_operand.vmem [shape: f32[2,128,64], index: 3, kind: input, shape index: {}]
  %s4 = inlined_call_operand.vmem [shape: f32[3,64,128], index: 4, kind: input, shape index: {}]
  %s5 = inlined_call_operand.vmem [shape: f32[1,128], index: 5, kind: input, shape index: {}]
  %s6 = inlined_call_operand.vmem [shape: f32[2,128,64], index: 6, kind: input, shape index: {}]
  %s7 = inlined_call_operand.vmem [shape: f32[2,64,32], index: 7, kind: input, shape index: {}]
  %s8 = inlined_call_operand.vmem [shape: f32[1,32], index: 8, kind: input, shape index: {}]
  %s9 = inlined_call_operand.vmem [shape: f32[32,32], index: 9, kind: input, shape index: {}]
  %s10 = inlined_call_operand.vmem [shape: f32[1,32], index: 10, kind: input, shape index: {}]
  %s11 = inlined_call_operand.vmem [shape: f32[32,128], index: 11, kind: input, shape index: {}]
  %s12 = inlined_call_operand.vmem [shape: f32[1,128], index: 12, kind: input, shape index: {}]
  %s13 = inlined_call_operand.vmem [shape: f32[32,128], index: 13, kind: output, shape index: {}]
  %s14 = sld [smem:[#allocation0]]
  $region85: #{stanford_base_forward.1} parent=0
    _
  %s16 = ssub.s32 1, %s14
  %s17 = scalar_select 0, %s16, %s14
  loop: start=0, step=1, limit=4
  $region2: #{stanford_base_forward.1} parent=0 // loop_pre_header
    _
  $region3: #{stanford_base_forward.1} parent=0 // loop_header
    %s19 = sphi 0, %s23
    %p20 = scmp.ge.s32.totalorder %s19, 4
    %s29 = sphi 0, %s31
    %s32 = sphi 0, %s29
    %s33 = sphi 0, %s32
    %s49 = sphi 0, %s33
    %s53 = sphi 0, %s53
    %s55 = sphi 0, %s53
    %s56 = sphi 0, %s55
    %s70 = sphi 0, %s56
    %s74 = sphi 0, %s74
    %s76 = sphi 0, %s74
    %s77 = sphi 0, %s76
    %s91 = sphi 0, %s77
    %s95 = sphi 0, %s95
    %s97 = sphi 0, %s95
    %s98 = sphi 0, %s97
    %s112 = sphi 0, %s98
    %s116 = sphi 0, %s116
    %s118 = sphi 0, %s116
    %s119 = sphi 0, %s118
    %s133 = sphi 0, %s119
    %s137 = sphi 0, %s137
    %s139 = sphi 0, %s137
    %s140 = sphi 0, %s139
    %s154 = sphi 0, %s140
    %s158 = sphi 0, %s158
    %s160 = sphi 0, %s158
    %s161 = sphi 0, %s160
    %s175 = sphi 0, %s161
    %s179 = sphi 0, %s179
    %s181 = sphi 0, %s179
    %s182 = sphi 0, %s181
    %s196 = sphi 0, %s182
    %s200 = sphi 0, %s200
    %s202 = sphi 0, %s200
    %s203 = sphi 0, %s202
    %s217 = sphi 0, %s203
    %s221 = sphi 0, %s221
    %s223 = sphi 0, %s221
    %s224 = sphi 0, %s223
    %s238 = sphi 0, %s224
    %s242 = sphi 0, %s242
    %s244 = sphi 0, %s242
    %s245 = sphi 0, %s244
    %s259 = sphi 0, %s245
    %s263 = sphi 0, %s263
    %s265 = sphi 0, %s263
    %s266 = sphi 0, %s265
    %s280 = sphi 0, %s266
    %s284 = sphi 0, %s284
    %s286 = sphi 0, %s284
    %s287 = sphi 0, %s286
    %s301 = sphi 0, %s287
    %s307 = sphi 0, %s309
    %s310 = sphi 0, %s307
    %s311 = sphi 0, %s310
    %s327 = sphi 0, %s311
  $region4: #{stanford_base_forward.1} parent=0 // loop_header_branch
    %22 = sbr.rel (%p20) target = $region8
  $region5: #{stanford_base_forward.1} parent=0 // loop_body
    %s24 = ssub.s32 %s19, 1
    %s25 = ssub.s32 %s19, 2
    %s26 = sadd.s32 %s19, 1
    %s27 = ssub.s32 %s19, %s26
    %p28 = scmp.eq.s32.totalorder %s27, 0
    %s30 = sadd.s32 %s29, 1
    %s31 = scalar_select %p28, %s29, %s30
    %p34 = pneg %p28
    %p35 = scmp.eq.s32.totalorder %s19, 1
    %p36 = por %p34, %p35
    %p37 = scmp.ne.s32.totalorder %s29, %s32
    %p38 = scmp.eq.s32.totalorder %s19, 0
    %p39 = por %p37, %p38
    %p40 = scmp.ne.s32.totalorder %s29, %s32
    %p41 = scmp.eq.s32.totalorder %s24, 1
    %p42 = por %p40, %p41
    %p43 = scmp.ne.s32.totalorder %s32, %s33
    %p44 = scmp.eq.s32.totalorder %s24, 0
    %p45 = por %p43, %p44
    %p46 = scmp.ne.s32.totalorder %s32, %s33
    %p47 = scmp.eq.s32.totalorder %s25, 1
    %p48 = por %p46, %p47
    %p50 = scmp.ne.s32.totalorder %s33, %s49
    %p51 = scmp.eq.s32.totalorder %s25, 0
    %p52 = por %p50, %p51
    %s54 = sadd.s32 %s53, 1
    %p57 = scmp.eq.s32.totalorder %s19, 1
    %p58 = scmp.ne.s32.totalorder %s53, %s55
    %p59 = scmp.eq.s32.totalorder %s19, 0
    %p60 = por %p58, %p59
    %p61 = scmp.ne.s32.totalorder %s53, %s55
    %p62 = scmp.eq.s32.totalorder %s24, 1
    %p63 = por %p61, %p62
    %p64 = scmp.ne.s32.totalorder %s55, %s56
    %p65 = scmp.eq.s32.totalorder %s24, 0
    %p66 = por %p64, %p65
    %p67 = scmp.ne.s32.totalorder %s55, %s56
    %p68 = scmp.eq.s32.totalorder %s25, 1
    %p69 = por %p67, %p68
    %p71 = scmp.ne.s32.totalorder %s56, %s70
    %p72 = scmp.eq.s32.totalorder %s25, 0
    %p73 = por %p71, %p72
    %s75 = sadd.s32 %s74, 1
    %p78 = scmp.eq.s32.totalorder %s19, 1
    %p79 = scmp.ne.s32.totalorder %s74, %s76
    %p80 = scmp.eq.s32.totalorder %s19, 0
    %p81 = por %p79, %p80
    %p82 = scmp.ne.s32.totalorder %s74, %s76
    %p83 = scmp.eq.s32.totalorder %s24, 1
    %p84 = por %p82, %p83
    %p85 = scmp.ne.s32.totalorder %s76, %s77
    %p86 = scmp.eq.s32.totalorder %s24, 0
    %p87 = por %p85, %p86
    %p88 = scmp.ne.s32.totalorder %s76, %s77
    %p89 = scmp.eq.s32.totalorder %s25, 1
    %p90 = por %p88, %p89
    %p92 = scmp.ne.s32.totalorder %s77, %s91
    %p93 = scmp.eq.s32.totalorder %s25, 0
    %p94 = por %p92, %p93
    %s96 = sadd.s32 %s95, 1
    %p99 = scmp.eq.s32.totalorder %s19, 1
    %p100 = scmp.ne.s32.totalorder %s95, %s97
    %p101 = scmp.eq.s32.totalorder %s19, 0
    %p102 = por %p100, %p101
    %p103 = scmp.ne.s32.totalorder %s95, %s97
    %p104 = scmp.eq.s32.totalorder %s24, 1
    %p105 = por %p103, %p104
    %p106 = scmp.ne.s32.totalorder %s97, %s98
    %p107 = scmp.eq.s32.totalorder %s24, 0
    %p108 = por %p106, %p107
    %p109 = scmp.ne.s32.totalorder %s97, %s98
    %p110 = scmp.eq.s32.totalorder %s25, 1
    %p111 = por %p109, %p110
    %p113 = scmp.ne.s32.totalorder %s98, %s112
    %p114 = scmp.eq.s32.totalorder %s25, 0
    %p115 = por %p113, %p114
    %s117 = sadd.s32 %s116, 1
    %p120 = scmp.eq.s32.totalorder %s19, 1
    %p121 = scmp.ne.s32.totalorder %s116, %s118
    %p122 = scmp.eq.s32.totalorder %s19, 0
    %p123 = por %p121, %p122
    %p124 = scmp.ne.s32.totalorder %s116, %s118
    %p125 = scmp.eq.s32.totalorder %s24, 1
    %p126 = por %p124, %p125
    %p127 = scmp.ne.s32.totalorder %s118, %s119
    %p128 = scmp.eq.s32.totalorder %s24, 0
    %p129 = por %p127, %p128
    %p130 = scmp.ne.s32.totalorder %s118, %s119
    %p131 = scmp.eq.s32.totalorder %s25, 1
    %p132 = por %p130, %p131
    %p134 = scmp.ne.s32.totalorder %s119, %s133
    %p135 = scmp.eq.s32.totalorder %s25, 0
    %p136 = por %p134, %p135
    %s138 = sadd.s32 %s137, 1
    %p141 = scmp.eq.s32.totalorder %s19, 1
    %p142 = scmp.ne.s32.totalorder %s137, %s139
    %p143 = scmp.eq.s32.totalorder %s19, 0
    %p144 = por %p142, %p143
    %p145 = scmp.ne.s32.totalorder %s137, %s139
    %p146 = scmp.eq.s32.totalorder %s24, 1
    %p147 = por %p145, %p146
    %p148 = scmp.ne.s32.totalorder %s139, %s140
    %p149 = scmp.eq.s32.totalorder %s24, 0
    %p150 = por %p148, %p149
    %p151 = scmp.ne.s32.totalorder %s139, %s140
    %p152 = scmp.eq.s32.totalorder %s25, 1
    %p153 = por %p151, %p152
    %p155 = scmp.ne.s32.totalorder %s140, %s154
    %p156 = scmp.eq.s32.totalorder %s25, 0
    %p157 = por %p155, %p156
    %s159 = sadd.s32 %s158, 1
    %p162 = scmp.eq.s32.totalorder %s19, 1
    %p163 = scmp.ne.s32.totalorder %s158, %s160
    %p164 = scmp.eq.s32.totalorder %s19, 0
    %p165 = por %p163, %p164
    %p166 = scmp.ne.s32.totalorder %s158, %s160
    %p167 = scmp.eq.s32.totalorder %s24, 1
    %p168 = por %p166, %p167
    %p169 = scmp.ne.s32.totalorder %s160, %s161
    %p170 = scmp.eq.s32.totalorder %s24, 0
    %p171 = por %p169, %p170
    %p172 = scmp.ne.s32.totalorder %s160, %s161
    %p173 = scmp.eq.s32.totalorder %s25, 1
    %p174 = por %p172, %p173
    %p176 = scmp.ne.s32.totalorder %s161, %s175
    %p177 = scmp.eq.s32.totalorder %s25, 0
    %p178 = por %p176, %p177
    %s180 = sadd.s32 %s179, 1
    %p183 = scmp.eq.s32.totalorder %s19, 1
    %p184 = scmp.ne.s32.totalorder %s179, %s181
    %p185 = scmp.eq.s32.totalorder %s19, 0
    %p186 = por %p184, %p185
    %p187 = scmp.ne.s32.totalorder %s179, %s181
    %p188 = scmp.eq.s32.totalorder %s24, 1
    %p189 = por %p187, %p188
    %p190 = scmp.ne.s32.totalorder %s181, %s182
    %p191 = scmp.eq.s32.totalorder %s24, 0
    %p192 = por %p190, %p191
    %p193 = scmp.ne.s32.totalorder %s181, %s182
    %p194 = scmp.eq.s32.totalorder %s25, 1
    %p195 = por %p193, %p194
    %p197 = scmp.ne.s32.totalorder %s182, %s196
    %p198 = scmp.eq.s32.totalorder %s25, 0
    %p199 = por %p197, %p198
    %s201 = sadd.s32 %s200, 1
    %p204 = scmp.eq.s32.totalorder %s19, 1
    %p205 = scmp.ne.s32.totalorder %s200, %s202
    %p206 = scmp.eq.s32.totalorder %s19, 0
    %p207 = por %p205, %p206
    %p208 = scmp.ne.s32.totalorder %s200, %s202
    %p209 = scmp.eq.s32.totalorder %s24, 1
    %p210 = por %p208, %p209
    %p211 = scmp.ne.s32.totalorder %s202, %s203
    %p212 = scmp.eq.s32.totalorder %s24, 0
    %p213 = por %p211, %p212
    %p214 = scmp.ne.s32.totalorder %s202, %s203
    %p215 = scmp.eq.s32.totalorder %s25, 1
    %p216 = por %p214, %p215
    %p218 = scmp.ne.s32.totalorder %s203, %s217
    %p219 = scmp.eq.s32.totalorder %s25, 0
    %p220 = por %p218, %p219
    %s222 = sadd.s32 %s221, 1
    %p225 = scmp.eq.s32.totalorder %s19, 1
    %p226 = scmp.ne.s32.totalorder %s221, %s223
    %p227 = scmp.eq.s32.totalorder %s19, 0
    %p228 = por %p226, %p227
    %p229 = scmp.ne.s32.totalorder %s221, %s223
    %p230 = scmp.eq.s32.totalorder %s24, 1
    %p231 = por %p229, %p230
    %p232 = scmp.ne.s32.totalorder %s223, %s224
    %p233 = scmp.eq.s32.totalorder %s24, 0
    %p234 = por %p232, %p233
    %p235 = scmp.ne.s32.totalorder %s223, %s224
    %p236 = scmp.eq.s32.totalorder %s25, 1
    %p237 = por %p235, %p236
    %p239 = scmp.ne.s32.totalorder %s224, %s238
    %p240 = scmp.eq.s32.totalorder %s25, 0
    %p241 = por %p239, %p240
    %s243 = sadd.s32 %s242, 1
    %p246 = scmp.eq.s32.totalorder %s19, 1
    %p247 = scmp.ne.s32.totalorder %s242, %s244
    %p248 = scmp.eq.s32.totalorder %s19, 0
    %p249 = por %p247, %p248
    %p250 = scmp.ne.s32.totalorder %s242, %s244
    %p251 = scmp.eq.s32.totalorder %s24, 1
    %p252 = por %p250, %p251
    %p253 = scmp.ne.s32.totalorder %s244, %s245
    %p254 = scmp.eq.s32.totalorder %s24, 0
    %p255 = por %p253, %p254
    %p256 = scmp.ne.s32.totalorder %s244, %s245
    %p257 = scmp.eq.s32.totalorder %s25, 1
    %p258 = por %p256, %p257
    %p260 = scmp.ne.s32.totalorder %s245, %s259
    %p261 = scmp.eq.s32.totalorder %s25, 0
    %p262 = por %p260, %p261
    %s264 = sadd.s32 %s263, 1
    %p267 = scmp.eq.s32.totalorder %s19, 1
    %p268 = scmp.ne.s32.totalorder %s263, %s265
    %p269 = scmp.eq.s32.totalorder %s19, 0
    %p270 = por %p268, %p269
    %p271 = scmp.ne.s32.totalorder %s263, %s265
    %p272 = scmp.eq.s32.totalorder %s24, 1
    %p273 = por %p271, %p272
    %p274 = scmp.ne.s32.totalorder %s265, %s266
    %p275 = scmp.eq.s32.totalorder %s24, 0
    %p276 = por %p274, %p275
    %p277 = scmp.ne.s32.totalorder %s265, %s266
    %p278 = scmp.eq.s32.totalorder %s25, 1
    %p279 = por %p277, %p278
    %p281 = scmp.ne.s32.totalorder %s266, %s280
    %p282 = scmp.eq.s32.totalorder %s25, 0
    %p283 = por %p281, %p282
    %s285 = sadd.s32 %s284, 1
    %p288 = scmp.eq.s32.totalorder %s19, 1
    %p289 = scmp.ne.s32.totalorder %s284, %s286
    %p290 = scmp.eq.s32.totalorder %s19, 0
    %p291 = por %p289, %p290
    %p292 = scmp.ne.s32.totalorder %s284, %s286
    %p293 = scmp.eq.s32.totalorder %s24, 1
    %p294 = por %p292, %p293
    %p295 = scmp.ne.s32.totalorder %s286, %s287
    %p296 = scmp.eq.s32.totalorder %s24, 0
    %p297 = por %p295, %p296
    %p298 = scmp.ne.s32.totalorder %s286, %s287
    %p299 = scmp.eq.s32.totalorder %s25, 1
    %p300 = por %p298, %p299
    %p302 = scmp.ne.s32.totalorder %s287, %s301
    %p303 = scmp.eq.s32.totalorder %s25, 0
    %p304 = por %p302, %p303
    %s305 = ssub.s32 %s19, %s26
    %p306 = scmp.eq.s32.totalorder %s305, 0
    %s308 = sadd.s32 %s307, 1
    %s309 = scalar_select %p306, %s307, %s308
    %p312 = pneg %p306
    %p313 = scmp.eq.s32.totalorder %s19, 1
    %p314 = por %p312, %p313
    %p315 = scmp.ne.s32.totalorder %s307, %s310
    %p316 = scmp.eq.s32.totalorder %s19, 0
    %p317 = por %p315, %p316
    %p318 = scmp.ne.s32.totalorder %s307, %s310
    %p319 = scmp.eq.s32.totalorder %s24, 1
    %p320 = por %p318, %p319
    %p321 = scmp.ne.s32.totalorder %s310, %s311
    %p322 = scmp.eq.s32.totalorder %s24, 0
    %p323 = por %p321, %p322
    %p324 = scmp.ne.s32.totalorder %s310, %s311
    %p325 = scmp.eq.s32.totalorder %s25, 1
    %p326 = por %p324, %p325
    %p328 = scmp.ne.s32.totalorder %s311, %s327
    %p329 = scmp.eq.s32.totalorder %s25, 0
    %p330 = por %p328, %p329
    %p331 = scmp.le.s32.totalorder 1, %s19
    %p332 = scmp.lt.s32.totalorder %s19, 3
    %p333 = pnand %p331, %p332
    %p334 = pneg %p333
    // Predicated region
    $region9: #{stanford_base_forward.1} parent=5 // pred_check
      _
    $region10: #{stanford_base_forward.1} parent=5 // pred_check_branch
      %336 = sbr.rel (%p333) target = $region12
    $region11: #{stanford_base_forward.1} parent=5 // pred_region
      %s337 = ssub.s32 %s19, 1
      // Predicated region
      $region13: #{stanford_base_forward.1} parent=11 // pred_check
        %p338 = pneg %p66
      $region14: #{stanford_base_forward.1} parent=11 // pred_check_branch
        %340 = sbr.rel (%p338) target = $region16
      $region15: #{stanford_base_forward.1} parent=11 // pred_region
        _
      $region16: #{stanford_base_forward.1} parent=11 // pred_fallthru
        _
      // Predicated region
      $region17: #{stanford_base_forward.1} parent=11 // pred_check
        %p341 = pneg %p87
      $region18: #{stanford_base_forward.1} parent=11 // pred_check_branch
        %343 = sbr.rel (%p341) target = $region20
      $region19: #{stanford_base_forward.1} parent=11 // pred_region
        _
      $region20: #{stanford_base_forward.1} parent=11 // pred_fallthru
        _
      // Predicated region
      $region21: #{stanford_base_forward.1} parent=11 // pred_check
        %p344 = pneg %p108
      $region22: #{stanford_base_forward.1} parent=11 // pred_check_branch
        %346 = sbr.rel (%p344) target = $region24
      $region23: #{stanford_base_forward.1} parent=11 // pred_region
        _
      $region24: #{stanford_base_forward.1} parent=11 // pred_fallthru
        _
      // Predicated region
      $region25: #{stanford_base_forward.1} parent=11 // pred_check
        %p347 = pneg %p129
      $region26: #{stanford_base_forward.1} parent=11 // pred_check_branch
        %349 = sbr.rel (%p347) target = $region28
      $region27: #{stanford_base_forward.1} parent=11 // pred_region
        _
      $region28: #{stanford_base_forward.1} parent=11 // pred_fallthru
        _
      // Predicated region
      $region29: #{stanford_base_forward.1} parent=11 // pred_check
        %p350 = pneg %p150
      $region30: #{stanford_base_forward.1} parent=11 // pred_check_branch
        %352 = sbr.rel (%p350) target = $region32
      $region31: #{stanford_base_forward.1} parent=11 // pred_region
        _
      $region32: #{stanford_base_forward.1} parent=11 // pred_fallthru
        _
      // Predicated region
      $region33: #{stanford_base_forward.1} parent=11 // pred_check
        %p353 = pneg %p171
      $region34: #{stanford_base_forward.1} parent=11 // pred_check_branch
        %355 = sbr.rel (%p353) target = $region36
      $region35: #{stanford_base_forward.1} parent=11 // pred_region
        _
      $region36: #{stanford_base_forward.1} parent=11 // pred_fallthru
        _
      // Predicated region
      $region37: #{stanford_base_forward.1} parent=11 // pred_check
        %p356 = pneg %p192
      $region38: #{stanford_base_forward.1} parent=11 // pred_check_branch
        %358 = sbr.rel (%p356) target = $region40
      $region39: #{stanford_base_forward.1} parent=11 // pred_region
        _
      $region40: #{stanford_base_forward.1} parent=11 // pred_fallthru
        _
      // Predicated region
      $region41: #{stanford_base_forward.1} parent=11 // pred_check
        %p359 = pneg %p213
      $region42: #{stanford_base_forward.1} parent=11 // pred_check_branch
        %361 = sbr.rel (%p359) target = $region44
      $region43: #{stanford_base_forward.1} parent=11 // pred_region
        _
      $region44: #{stanford_base_forward.1} parent=11 // pred_fallthru
        _
      // Predicated region
      $region45: #{stanford_base_forward.1} parent=11 // pred_check
        %p362 = pneg %p234
      $region46: #{stanford_base_forward.1} parent=11 // pred_check_branch
        %364 = sbr.rel (%p362) target = $region48
      $region47: #{stanford_base_forward.1} parent=11 // pred_region
        _
      $region48: #{stanford_base_forward.1} parent=11 // pred_fallthru
        _
      // Predicated region
      $region49: #{stanford_base_forward.1} parent=11 // pred_check
        %p365 = pneg %p255
      $region50: #{stanford_base_forward.1} parent=11 // pred_check_branch
        %367 = sbr.rel (%p365) target = $region52
      $region51: #{stanford_base_forward.1} parent=11 // pred_region
        _
      $region52: #{stanford_base_forward.1} parent=11 // pred_fallthru
        _
      // Predicated region
      $region53: #{stanford_base_forward.1} parent=11 // pred_check
        %p368 = pneg %p276
      $region54: #{stanford_base_forward.1} parent=11 // pred_check_branch
        %370 = sbr.rel (%p368) target = $region56
      $region55: #{stanford_base_forward.1} parent=11 // pred_region
        _
      $region56: #{stanford_base_forward.1} parent=11 // pred_fallthru
        _
      // Predicated region
      $region57: #{stanford_base_forward.1} parent=11 // pred_check
        %p371 = pneg %p297
      $region58: #{stanford_base_forward.1} parent=11 // pred_check_branch
        %373 = sbr.rel (%p371) target = $region60
      $region59: #{stanford_base_forward.1} parent=11 // pred_region
        _
      $region60: #{stanford_base_forward.1} parent=11 // pred_fallthru
        _
    $region12: #{stanford_base_forward.1} parent=5 // pred_fallthru
      _
    %p374 = scmp.lt.s32.totalorder %s19, 2
    // Predicated region
    $region61: #{stanford_base_forward.1} parent=5 // pred_check
      %p375 = pneg %p374
    $region62: #{stanford_base_forward.1} parent=5 // pred_check_branch
      %377 = sbr.rel (%p375) target = $region64
    $region63: #{stanford_base_forward.1} parent=5 // pred_region
      // Predicated region
      $region65: #{stanford_base_forward.1} parent=63 // pred_check
        %p378 = pneg %p39
      $region66: #{stanford_base_forward.1} parent=63 // pred_check_branch
        %380 = sbr.rel (%p378) target = $region68
      $region67: #{stanford_base_forward.1} parent=63 // pred_region
        %s381 = smul.u32 32, %s19
        %p382 = scmp.lt.s32.totalorder %s381, 63
        %s383 = scalar_select %p382, %s381, 63
        %s384 = smul.addr %s383, 8
        %s385 = scalar_lea.vmem %s0, %s384
        %s386 = smul.u32 32, %s19
      $region68: #{stanford_base_forward.1} parent=63 // pred_fallthru
        _
    $region64: #{stanford_base_forward.1} parent=5 // pred_fallthru
      _
    %p387 = scmp.le.s32.totalorder 1, %s19
    %p388 = scmp.lt.s32.totalorder %s19, 3
    %p389 = pnand %p387, %p388
    %p390 = pneg %p389
    // Predicated region
    $region69: #{stanford_base_forward.1} parent=5 // pred_check
      _
    $region70: #{stanford_base_forward.1} parent=5 // pred_check_branch
      %392 = sbr.rel (%p389) target = $region72
    $region71: #{stanford_base_forward.1} parent=5 // pred_region
      %s393 = ssub.s32 %s19, 1
      %s394 = smul.u32 32, %s24
      %p395 = scmp.lt.s32.totalorder %s394, 63
      %s396 = scalar_select %p395, %s394, 63
      %s397 = smul.addr %s396, 8
      %s398 = scalar_lea.vmem %s0, %s397
      %p399 = pneg %p45
      %p400 = pneg %p42
      %p401 = pneg %p66
      %p402 = pneg %p63
      %p403 = pneg %p87
      %p404 = pneg %p84
      %p405 = pneg %p108
      %p406 = pneg %p105
      %p407 = pneg %p129
      %p408 = pneg %p126
      %p409 = pneg %p150
      %p410 = pneg %p147
      %p411 = pneg %p171
      %p412 = pneg %p168
      %p413 = pneg %p192
      %p414 = pneg %p189
      %p415 = pneg %p213
      %p416 = pneg %p210
      %p417 = pneg %p234
      %p418 = pneg %p231
      %p419 = pneg %p255
      %p420 = pneg %p252
      %p421 = pneg %p276
      %p422 = pneg %p273
      %p423 = pneg %p297
      %p424 = pneg %p294
      %p425 = pneg %p323
      %p426 = pneg %p320
      %s427 = smul.u32 2, %s24
      %p428 = scmp.lt.s32.totalorder %s427, 3
      %s429 = scalar_select %p428, %s427, 3
      %s430 = smul.addr %s429, 8
      %s431 = scalar_lea.vmem %s13, %s430
      %s432 = smul.u32 32, %s24
      %p433 = scmp.lt.s32.totalorder %s432, 63
      %s434 = scalar_select %p433, %s432, 63
      %s435 = smul.addr %s434, 8
      %s436 = scalar_lea.vmem %s0, %s435
      %s437 = smul.u32 32, %s24
      %s438 = smul.u32 2, %s24
      %p439 = scmp.lt.s32.totalorder %s438, 3
      %s440 = scalar_select %p439, %s438, 3
      %s441 = smul.addr %s440, 8
      %s442 = scalar_lea.vmem %s13, %s441
      %s443 = smul.u32 2, %s24
      %v444 = vld [vmem:[%s436] sm:$0xff]
      %v445 = vld [vmem:[%s436 + $0x8] sm:$0xff]
      %v446 = vld [vmem:[%s436 + $0x10] sm:$0xff]
      %v447 = vld [vmem:[%s436 + $0x18] sm:$0xff]
      %v448 = vld [vmem:[%s436 + $0x20] sm:$0xff]
      %v449 = vld [vmem:[%s436 + $0x28] sm:$0xff]
      %v450 = vld [vmem:[%s436 + $0x30] sm:$0xff]
      %v451 = vld [vmem:[%s436 + $0x38] sm:$0xff]
      %v452 = vld [vmem:[%s436 + $0x40] sm:$0xff]
      %v453 = vld [vmem:[%s436 + $0x48] sm:$0xff]
      %v454 = vld [vmem:[%s436 + $0x50] sm:$0xff]
      %v455 = vld [vmem:[%s436 + $0x58] sm:$0xff]
      %v456 = vld [vmem:[%s436 + $0x60] sm:$0xff]
      %v457 = vld [vmem:[%s436 + $0x68] sm:$0xff]
      %v458 = vld [vmem:[%s436 + $0x70] sm:$0xff]
      %v459 = vld [vmem:[%s436 + $0x78] sm:$0xff]
      %v460 = vld [vmem:[%s436 + $0x80] sm:$0xff]
      %v461 = vld [vmem:[%s436 + $0x88] sm:$0xff]
      %v462 = vld [vmem:[%s436 + $0x90] sm:$0xff]
      %v463 = vld [vmem:[%s436 + $0x98] sm:$0xff]
      %v464 = vld [vmem:[%s436 + $0xa0] sm:$0xff]
      %v465 = vld [vmem:[%s436 + $0xa8] sm:$0xff]
      %v466 = vld [vmem:[%s436 + $0xb0] sm:$0xff]
      %v467 = vld [vmem:[%s436 + $0xb8] sm:$0xff]
      %v468 = vld [vmem:[%s436 + $0xc0] sm:$0xff]
      %v469 = vld [vmem:[%s436 + $0xc8] sm:$0xff]
      %v470 = vld [vmem:[%s436 + $0xd0] sm:$0xff]
      %v471 = vld [vmem:[%s436 + $0xd8] sm:$0xff]
      %v472 = vld [vmem:[%s436 + $0xe0] sm:$0xff]
      %v473 = vld [vmem:[%s436 + $0xe8] sm:$0xff]
      %v474 = vld [vmem:[%s436 + $0xf0] sm:$0xff]
      %v475 = vld [vmem:[%s436 + $0xf8] sm:$0xff]
      %v477 = vrot.slane %v475, 7
      %vm510 = vcmask 1040384
      %v511 = vrot.slane %v444, 7
      %v512 = vrot.slane %v445, 7
      %v513 = vsel %vm510, %v511, %v512
      %v514 = vrot.slane %v446, 7
      %v515 = vsel %vm510, %v512, %v514
      %v516 = vrot.slane %v447, 7
      %v517 = vsel %vm510, %v514, %v516
      %v518 = vrot.slane %v448, 7
      %v519 = vsel %vm510, %v516, %v518
      %v520 = vrot.slane %v449, 7
      %v521 = vsel %vm510, %v518, %v520
      %v522 = vrot.slane %v450, 7
      %v523 = vsel %vm510, %v520, %v522
      %v524 = vrot.slane %v451, 7
      %v525 = vsel %vm510, %v522, %v524
      %v526 = vrot.slane %v452, 7
      %v527 = vsel %vm510, %v524, %v526
      %v528 = vrot.slane %v453, 7
      %v529 = vsel %vm510, %v526, %v528
      %v530 = vrot.slane %v454, 7
      %v531 = vsel %vm510, %v528, %v530
      %v532 = vrot.slane %v455, 7
      %v533 = vsel %vm510, %v530, %v532
      %v534 = vrot.slane %v456, 7
      %v535 = vsel %vm510, %v532, %v534
      %v536 = vrot.slane %v457, 7
      %v537 = vsel %vm510, %v534, %v536
      %v538 = vrot.slane %v458, 7
      %v539 = vsel %vm510, %v536, %v538
      %v540 = vrot.slane %v459, 7
      %v541 = vsel %vm510, %v538, %v540
      %v542 = vrot.slane %v460, 7
      %v543 = vsel %vm510, %v540, %v542
      %v544 = vrot.slane %v461, 7
      %v545 = vsel %vm510, %v542, %v544
      %v546 = vrot.slane %v462, 7
      %v547 = vsel %vm510, %v544, %v546
      %v548 = vrot.slane %v463, 7
      %v549 = vsel %vm510, %v546, %v548
      %v550 = vrot.slane %v464, 7
      %v551 = vsel %vm510, %v548, %v550
      %v552 = vrot.slane %v465, 7
      %v553 = vsel %vm510, %v550, %v552
      %v554 = vrot.slane %v466, 7
      %v555 = vsel %vm510, %v552, %v554
      %v556 = vrot.slane %v467, 7
      %v557 = vsel %vm510, %v554, %v556
      %v558 = vrot.slane %v468, 7
      %v559 = vsel %vm510, %v556, %v558
      %v560 = vrot.slane %v469, 7
      %v561 = vsel %vm510, %v558, %v560
      %v562 = vrot.slane %v470, 7
      %v563 = vsel %vm510, %v560, %v562
      %v564 = vrot.slane %v471, 7
      %v565 = vsel %vm510, %v562, %v564
      %v566 = vrot.slane %v472, 7
      %v567 = vsel %vm510, %v564, %v566
      %v568 = vrot.slane %v473, 7
      %v569 = vsel %vm510, %v566, %v568
      %v570 = vrot.slane %v474, 7
      %v571 = vsel %vm510, %v568, %v570
      %v572 = vsel %vm510, %v570, %v477
      %v605 = vsel %vm510, %v477, %v511
      %v606 = vlaneseq
      %v607 = vshrl.u32 %v606, 7
      %v608 = vadd.s32 %v607, 8
      %v609 = vadd.s32 %v607, 16
      %v610 = vadd.s32 %v607, 24
      %v611 = vadd.s32 %v607, 32
      %v612 = vadd.s32 %v607, 40
      %v613 = vadd.s32 %v607, 48
      %v614 = vadd.s32 %v607, 56
      %v615 = vadd.s32 %v607, 64
      %v616 = vadd.s32 %v607, 72
      %v617 = vadd.s32 %v607, 80
      %v618 = vadd.s32 %v607, 88
      %v619 = vadd.s32 %v607, 96
      %v620 = vadd.s32 %v607, 104
      %v621 = vadd.s32 %v607, 112
      %v622 = vadd.s32 %v607, 120
      %v623 = vadd.s32 %v607, 128
      %v624 = vadd.s32 %v607, 136
      %v625 = vadd.s32 %v607, 144
      %v626 = vadd.s32 %v607, 152
      %v627 = vadd.s32 %v607, 160
      %v628 = vadd.s32 %v607, 168
      %v629 = vadd.s32 %v607, 176
      %v630 = vadd.s32 %v607, 184
      %v631 = vadd.s32 %v607, 192
      %v632 = vadd.s32 %v607, 200
      %v633 = vadd.s32 %v607, 208
      %v634 = vadd.s32 %v607, 216
      %v635 = vadd.s32 %v607, 224
      %v636 = vadd.s32 %v607, 232
      %v637 = vadd.s32 %v607, 240
      %v638 = vadd.s32 %v607, 248
      %v639 = vand.u32 %v607, 15
      %v640 = vand.u32 %v608, 15
      %v641 = vand.u32 %v609, 15
      %v642 = vand.u32 %v610, 15
      %v643 = vand.u32 %v611, 15
      %v644 = vand.u32 %v612, 15
      %v645 = vand.u32 %v613, 15
      %v646 = vand.u32 %v614, 15
      %v647 = vand.u32 %v615, 15
      %v648 = vand.u32 %v616, 15
      %v649 = vand.u32 %v617, 15
      %v650 = vand.u32 %v618, 15
      %v651 = vand.u32 %v619, 15
      %v652 = vand.u32 %v620, 15
      %v653 = vand.u32 %v621, 15
      %v654 = vand.u32 %v622, 15
      %v655 = vand.u32 %v623, 15
      %v656 = vand.u32 %v624, 15
      %v657 = vand.u32 %v625, 15
      %v658 = vand.u32 %v626, 15
      %v659 = vand.u32 %v627, 15
      %v660 = vand.u32 %v628, 15
      %v661 = vand.u32 %v629, 15
      %v662 = vand.u32 %v630, 15
      %v663 = vand.u32 %v631, 15
      %v664 = vand.u32 %v632, 15
      %v665 = vand.u32 %v633, 15
      %v666 = vand.u32 %v634, 15
      %v667 = vand.u32 %v635, 15
      %v668 = vand.u32 %v636, 15
      %v669 = vand.u32 %v637, 15
      %v670 = vand.u32 %v638, 15
      %vm671 = vcmp.ge.s32.totalorder %v639, 1
      %vm672 = vcmp.ge.s32.totalorder %v640, 1
      %vm673 = vcmp.ge.s32.totalorder %v641, 1
      %vm674 = vcmp.ge.s32.totalorder %v642, 1
      %vm675 = vcmp.ge.s32.totalorder %v643, 1
      %vm676 = vcmp.ge.s32.totalorder %v644, 1
      %vm677 = vcmp.ge.s32.totalorder %v645, 1
      %vm678 = vcmp.ge.s32.totalorder %v646, 1
      %vm679 = vcmp.ge.s32.totalorder %v647, 1
      %vm680 = vcmp.ge.s32.totalorder %v648, 1
      %vm681 = vcmp.ge.s32.totalorder %v649, 1
      %vm682 = vcmp.ge.s32.totalorder %v650, 1
      %vm683 = vcmp.ge.s32.totalorder %v651, 1
      %vm684 = vcmp.ge.s32.totalorder %v652, 1
      %vm685 = vcmp.ge.s32.totalorder %v653, 1
      %vm686 = vcmp.ge.s32.totalorder %v654, 1
      %vm687 = vcmp.ge.s32.totalorder %v655, 1
      %vm688 = vcmp.ge.s32.totalorder %v656, 1
      %vm689 = vcmp.ge.s32.totalorder %v657, 1
      %vm690 = vcmp.ge.s32.totalorder %v658, 1
      %vm691 = vcmp.ge.s32.totalorder %v659, 1
      %vm692 = vcmp.ge.s32.totalorder %v660, 1
      %vm693 = vcmp.ge.s32.totalorder %v661, 1
      %vm694 = vcmp.ge.s32.totalorder %v662, 1
      %vm695 = vcmp.ge.s32.totalorder %v663, 1
      %vm696 = vcmp.ge.s32.totalorder %v664, 1
      %vm697 = vcmp.ge.s32.totalorder %v665, 1
      %vm698 = vcmp.ge.s32.totalorder %v666, 1
      %vm699 = vcmp.ge.s32.totalorder %v667, 1
      %vm700 = vcmp.ge.s32.totalorder %v668, 1
      %vm701 = vcmp.ge.s32.totalorder %v669, 1
      %vm702 = vcmp.ge.s32.totalorder %v670, 1
      %v703 = vsel %vm671, %v605, 0.0
      %v704 = vsel %vm672, %v513, 0.0
      %v705 = vsel %vm673, %v515, 0.0
      %v706 = vsel %vm674, %v517, 0.0
      %v707 = vsel %vm675, %v519, 0.0
      %v708 = vsel %vm676, %v521, 0.0
      %v709 = vsel %vm677, %v523, 0.0
      %v710 = vsel %vm678, %v525, 0.0
      %v711 = vsel %vm679, %v527, 0.0
      %v712 = vsel %vm680, %v529, 0.0
      %v713 = vsel %vm681, %v531, 0.0
      %v714 = vsel %vm682, %v533, 0.0
      %v715 = vsel %vm683, %v535, 0.0
      %v716 = vsel %vm684, %v537, 0.0
      %v717 = vsel %vm685, %v539, 0.0
      %v718 = vsel %vm686, %v541, 0.0
      %v719 = vsel %vm687, %v543, 0.0
      %v720 = vsel %vm688, %v545, 0.0
      %v721 = vsel %vm689, %v547, 0.0
      %v722 = vsel %vm690, %v549, 0.0
      %v723 = vsel %vm691, %v551, 0.0
      %v724 = vsel %vm692, %v553, 0.0
      %v725 = vsel %vm693, %v555, 0.0
      %v726 = vsel %vm694, %v557, 0.0
      %v727 = vsel %vm695, %v559, 0.0
      %v728 = vsel %vm696, %v561, 0.0
      %v729 = vsel %vm697, %v563, 0.0
      %v730 = vsel %vm698, %v565, 0.0
      %v731 = vsel %vm699, %v567, 0.0
      %v732 = vsel %vm700, %v569, 0.0
      %v733 = vsel %vm701, %v571, 0.0
      %v734 = vsel %vm702, %v572, 0.0
      %v735 = vld [vmem:[%s1] sm:$0xff]
      %v736 = vld [vmem:[%s1 + $0x8] sm:$0xff]
      %v737 = vld [vmem:[%s1 + $0x10] sm:$0xff]
      %v738 = vld [vmem:[%s1 + $0x18] sm:$0xff]
      %v739 = vld [vmem:[%s1 + $0x20] sm:$0xff]
      %v740 = vld [vmem:[%s1 + $0x28] sm:$0xff]
      %s741 = scalar_lea.vmem %s1, 48
      %v742 = vld [vmem:[%s741] sm:$0xff]
      %v743 = vld [vmem:[%s741 + $0x8] sm:$0xff]
      %v744 = vld [vmem:[%s741 + $0x10] sm:$0xff]
      %v745 = vld [vmem:[%s741 + $0x18] sm:$0xff]
      %v746 = vld [vmem:[%s741 + $0x20] sm:$0xff]
      %v747 = vld [vmem:[%s741 + $0x28] sm:$0xff]
      %vm748 = vcmask 392192
      %v749 = vsel %vm748, %v444, 0
      %v751 = vsel %vm748, %v445, 0
      %v753 = vsel %vm748, %v446, 0
      %v755 = vsel %vm748, %v447, 0
      %v757 = vsel %vm748, %v448, 0
      %v759 = vsel %vm748, %v449, 0
      %v761 = vsel %vm748, %v450, 0
      %v763 = vsel %vm748, %v451, 0
      %v765 = vsel %vm748, %v452, 0
      %v767 = vsel %vm748, %v453, 0
      %v769 = vsel %vm748, %v454, 0
      %v771 = vsel %vm748, %v455, 0
      %v773 = vsel %vm748, %v456, 0
      %v775 = vsel %vm748, %v457, 0
      %v777 = vsel %vm748, %v458, 0
      %v779 = vsel %vm748, %v459, 0
      %v781 = vsel %vm748, %v460, 0
      %v783 = vsel %vm748, %v461, 0
      %v785 = vsel %vm748, %v462, 0
      %v787 = vsel %vm748, %v463, 0
      %v789 = vsel %vm748, %v464, 0
      %v791 = vsel %vm748, %v465, 0
      %v793 = vsel %vm748, %v466, 0
      %v795 = vsel %vm748, %v467, 0
      %v797 = vsel %vm748, %v468, 0
      %v799 = vsel %vm748, %v469, 0
      %v801 = vsel %vm748, %v470, 0
      %v803 = vsel %vm748, %v471, 0
      %v805 = vsel %vm748, %v472, 0
      %v807 = vsel %vm748, %v473, 0
      %v809 = vsel %vm748, %v474, 0
      %v811 = vsel %vm748, %v475, 0
      %813 = vmatprep.subr.mxu0 0.0
      %814 = vmatpush1.msra.mxu0 %v742
      %815 = vmatprep.subr.mxu0 0.0
      %816 = vmatpush1.msra.mxu0 %v743
      %817 = vmatprep.subr.mxu0 0.0
      %818 = vmatpush1.msra.mxu0 %v744
      %819 = vmatprep.subr.mxu0 0.0
      %820 = vmatpush1.msra.mxu0 %v745
      %821 = vmatprep.subr.mxu0 0.0
      %822 = vmatpush1.msra.mxu0 %v746
      %823 = vmatprep.subr.mxu0 0.0
      %824 = vmatpush1.msra.mxu0 %v747
      %825 = vmatprep.subr.mxu0 0.0
      %826 = vmatpush1.msra.mxu0 0.0
      %827 = vmatprep.subr.mxu0 0.0
      %828 = vmatpush1.msra.mxu0 0.0
      %829 = vmatprep.subr.mxu0 0.0
      %830 = vmatpush1.msra.mxu0 0.0
      %831 = vmatprep.subr.mxu0 0.0
      %832 = vmatpush1.msra.mxu0 0.0
      %833 = vmatprep.subr.mxu0 0.0
      %834 = vmatpush1.msra.mxu0 0.0
      %835 = vmatprep.subr.mxu0 0.0
      %836 = vmatpush1.msra.mxu0 0.0
      %837 = vmatprep.subr.mxu0 0.0
      %838 = vmatpush1.msra.mxu0 0.0
      %839 = vmatprep.subr.mxu0 0.0
      %840 = vmatpush1.msra.mxu0 0.0
      %841 = vmatprep.subr.mxu0 0.0
      %842 = vmatpush1.msra.mxu0 0.0
      %843 = vmatprep.subr.mxu0 0.0
      %844 = vmatpush1.msra.mxu0 0.0
      %845 = vmatprep.subr.mxu0 0.0
      %846 = vmatpush1.msra.mxu0 0.0
      %847 = vmatprep.subr.mxu0 0.0
      %848 = vmatpush1.msra.mxu0 0.0
      %849 = vmatprep.subr.mxu0 0.0
      %850 = vmatpush1.msra.mxu0 0.0
      %851 = vmatprep.subr.mxu0 0.0
      %852 = vmatpush1.msra.mxu0 0.0
      %853 = vmatprep.subr.mxu0 0.0
      %854 = vmatpush1.msra.mxu0 0.0
      %855 = vmatprep.subr.mxu0 0.0
      %856 = vmatpush1.msra.mxu0 0.0
      %857 = vmatprep.subr.mxu0 0.0
      %858 = vmatpush1.msra.mxu0 0.0
      %859 = vmatprep.subr.mxu0 0.0
      %860 = vmatpush1.msra.mxu0 0.0
      %861 = vmatprep.subr.mxu0 0.0
      %862 = vmatpush1.msra.mxu0 0.0
      %863 = vmatprep.subr.mxu0 0.0
      %864 = vmatpush1.msra.mxu0 0.0
      %865 = vmatprep.subr.mxu0 0.0
      %866 = vmatpush1.msra.mxu0 0.0
      %867 = vmatprep.subr.mxu0 0.0
      %868 = vmatpush1.msra.mxu0 0.0
      %869 = vmatprep.subr.mxu0 0.0
      %870 = vmatpush1.msra.mxu0 0.0
      %871 = vmatprep.subr.mxu0 0.0
      %872 = vmatpush1.msra.mxu0 0.0
      %873 = vmatprep.subr.mxu0 0.0
      %874 = vmatpush1.msra.mxu0 0.0
      %875 = vmatprep.subr.mxu0 0.0
      %876 = vmatpush1.msra.mxu0 0.0
      %877 = vmatprep.mubr.f32.mxu0 0.0
      %878 = vmatmul.mubr.f32.gmra.mrb[0].mxu0 %v749
      %v879 = vpop.f32.mrb[0].mxu0
      %v880 = vadd.f32 0.0, %v879
      %v881 = vpop.f32.mrb[0].mxu0
      %882 = vmatprep.mubr.f32.mxu0 0.0
      %883 = vmatmul.mubr.f32.gmra.mrb[0].mxu0 %v751
      %v884 = vpop.f32.mrb[0].mxu0
      %v885 = vadd.f32 0.0, %v884
      %v886 = vpop.f32.mrb[0].mxu0
      %887 = vmatprep.mubr.f32.mxu0 0.0
      %888 = vmatmul.mubr.f32.gmra.mrb[0].mxu0 %v753
      %v889 = vpop.f32.mrb[0].mxu0
      %v890 = vadd.f32 0.0, %v889
      %v891 = vpop.f32.mrb[0].mxu0
      %892 = vmatprep.mubr.f32.mxu0 0.0
      %893 = vmatmul.mubr.f32.gmra.mrb[0].mxu0 %v755
      %v894 = vpop.f32.mrb[0].mxu0
      %v895 = vadd.f32 0.0, %v894
      %v896 = vpop.f32.mrb[0].mxu0
      %897 = vmatprep.mubr.f32.mxu0 0.0
      %898 = vmatmul.mubr.f32.gmra.mrb[0].mxu0 %v757
      %v899 = vpop.f32.mrb[0].mxu0
      %v900 = vadd.f32 0.0, %v899
      %v901 = vpop.f32.mrb[0].mxu0
      %902 = vmatprep.mubr.f32.mxu0 0.0
      %903 = vmatmul.mubr.f32.gmra.mrb[0].mxu0 %v759
      %v904 = vpop.f32.mrb[0].mxu0
      %v905 = vadd.f32 0.0, %v904
      %v906 = vpop.f32.mrb[0].mxu0
      %907 = vmatprep.mubr.f32.mxu0 0.0
      %908 = vmatmul.mubr.f32.gmra.mrb[0].mxu0 %v761
      %v909 = vpop.f32.mrb[0].mxu0
      %v910 = vadd.f32 0.0, %v909
      %v911 = vpop.f32.mrb[0].mxu0
      %912 = vmatprep.mubr.f32.mxu0 0.0
      %913 = vmatmul.mubr.f32.gmra.mrb[0].mxu0 %v763
      %v914 = vpop.f32.mrb[0].mxu0
      %v915 = vadd.f32 0.0, %v914
      %v916 = vpop.f32.mrb[0].mxu0
      %917 = vmatprep.mubr.f32.mxu0 0.0
      %918 = vmatmul.mubr.f32.gmra.mrb[0].mxu0 %v765
      %v919 = vpop.f32.mrb[0].mxu0
      %v920 = vadd.f32 0.0, %v919
      %v921 = vpop.f32.mrb[0].mxu0
      %922 = vmatprep.mubr.f32.mxu0 0.0
      %923 = vmatmul.mubr.f32.gmra.mrb[0].mxu0 %v767
      %v924 = vpop.f32.mrb[0].mxu0
      %v925 = vadd.f32 0.0, %v924
      %v926 = vpop.f32.mrb[0].mxu0
      %927 = vmatprep.mubr.f32.mxu0 0.0
      %928 = vmatmul.mubr.f32.gmra.mrb[0].mxu0 %v769
      %v929 = vpop.f32.mrb[0].mxu0
      %v930 = vadd.f32 0.0, %v929
      %v931 = vpop.f32.mrb[0].mxu0
      %932 = vmatprep.mubr.f32.mxu0 0.0
      %933 = vmatmul.mubr.f32.gmra.mrb[0].mxu0 %v771
      %v934 = vpop.f32.mrb[0].mxu0
      %v935 = vadd.f32 0.0, %v934
      %v936 = vpop.f32.mrb[0].mxu0
      %937 = vmatprep.mubr.f32.mxu0 0.0
      %938 = vmatmul.mubr.f32.gmra.mrb[0].mxu0 %v773
      %v939 = vpop.f32.mrb[0].mxu0
      %v940 = vadd.f32 0.0, %v939
      %v941 = vpop.f32.mrb[0].mxu0
      %942 = vmatprep.mubr.f32.mxu0 0.0
      %943 = vmatmul.mubr.f32.gmra.mrb[0].mxu0 %v775
      %v944 = vpop.f32.mrb[0].mxu0
      %v945 = vadd.f32 0.0, %v944
      %v946 = vpop.f32.mrb[0].mxu0
      %947 = vmatprep.mubr.f32.mxu0 0.0
      %948 = vmatmul.mubr.f32.gmra.mrb[0].mxu0 %v777
      %v949 = vpop.f32.mrb[0].mxu0
      %v950 = vadd.f32 0.0, %v949
      %v951 = vpop.f32.mrb[0].mxu0
      %952 = vmatprep.mubr.f32.mxu0 0.0
      %953 = vmatmul.mubr.f32.gmra.mrb[0].mxu0 %v779
      %v954 = vpop.f32.mrb[0].mxu0
      %v955 = vadd.f32 0.0, %v954
      %v956 = vpop.f32.mrb[0].mxu0
      %957 = vmatprep.mubr.f32.mxu0 0.0
      %958 = vmatmul.mubr.f32.gmra.mrb[0].mxu0 %v781
      %v959 = vpop.f32.mrb[0].mxu0
      %v960 = vadd.f32 0.0, %v959
      %v961 = vpop.f32.mrb[0].mxu0
      %962 = vmatprep.mubr.f32.mxu0 0.0
      %963 = vmatmul.mubr.f32.gmra.mrb[0].mxu0 %v783
      %v964 = vpop.f32.mrb[0].mxu0
      %v965 = vadd.f32 0.0, %v964
      %v966 = vpop.f32.mrb[0].mxu0
      %967 = vmatprep.mubr.f32.mxu0 0.0
      %968 = vmatmul.mubr.f32.gmra.mrb[0].mxu0 %v785
      %v969 = vpop.f32.mrb[0].mxu0
      %v970 = vadd.f32 0.0, %v969
      %v971 = vpop.f32.mrb[0].mxu0
      %972 = vmatprep.mubr.f32.mxu0 0.0
      %973 = vmatmul.mubr.f32.gmra.mrb[0].mxu0 %v787
      %v974 = vpop.f32.mrb[0].mxu0
      %v975 = vadd.f32 0.0, %v974
      %v976 = vpop.f32.mrb[0].mxu0
      %977 = vmatprep.mubr.f32.mxu0 0.0
      %978 = vmatmul.mubr.f32.gmra.mrb[0].mxu0 %v789
      %v979 = vpop.f32.mrb[0].mxu0
      %v980 = vadd.f32 0.0, %v979
      %v981 = vpop.f32.mrb[0].mxu0
      %982 = vmatprep.mubr.f32.mxu0 0.0
      %983 = vmatmul.mubr.f32.gmra.mrb[0].mxu0 %v791
      %v984 = vpop.f32.mrb[0].mxu0
      %v985 = vadd.f32 0.0, %v984
      %v986 = vpop.f32.mrb[0].mxu0
      %987 = vmatprep.mubr.f32.mxu0 0.0
      %988 = vmatmul.mubr.f32.gmra.mrb[0].mxu0 %v793
      %v989 = vpop.f32.mrb[0].mxu0
      %v990 = vadd.f32 0.0, %v989
      %v991 = vpop.f32.mrb[0].mxu0
      %992 = vmatprep.mubr.f32.mxu0 0.0
      %993 = vmatmul.mubr.f32.gmra.mrb[0].mxu0 %v795
      %v994 = vpop.f32.mrb[0].mxu0
      %v995 = vadd.f32 0.0, %v994
      %v996 = vpop.f32.mrb[0].mxu0
      %997 = vmatprep.mubr.f32.mxu0 0.0
      %998 = vmatmul.mubr.f32.gmra.mrb[0].mxu0 %v797
      %v999 = vpop.f32.mrb[0].mxu0
      %v1000 = vadd.f32 0.0, %v999
      %v1001 = vpop.f32.mrb[0].mxu0
      %1002 = vmatprep.mubr.f32.mxu0 0.0
      %1003 = vmatmul.mubr.f32.gmra.mrb[0].mxu0 %v799
      %v1004 = vpop.f32.mrb[0].mxu0
      %v1005 = vadd.f32 0.0, %v1004
      %v1006 = vpop.f32.mrb[0].mxu0
      %1007 = vmatprep.mubr.f32.mxu0 0.0
      %1008 = vmatmul.mubr.f32.gmra.mrb[0].mxu0 %v801
      %v1009 = vpop.f32.mrb[0].mxu0
      %v1010 = vadd.f32 0.0, %v1009
      %v1011 = vpop.f32.mrb[0].mxu0
      %1012 = vmatprep.mubr.f32.mxu0 0.0
      %1013 = vmatmul.mubr.f32.gmra.mrb[0].mxu0 %v803
      %v1014 = vpop.f32.mrb[0].mxu0
      %v1015 = vadd.f32 0.0, %v1014
      %v1016 = vpop.f32.mrb[0].mxu0
      %1017 = vmatprep.mubr.f32.mxu0 0.0
      %1018 = vmatmul.mubr.f32.gmra.mrb[0].mxu0 %v805
      %v1019 = vpop.f32.mrb[0].mxu0
      %v1020 = vadd.f32 0.0, %v1019
      %v1021 = vpop.f32.mrb[0].mxu0
      %1022 = vmatprep.mubr.f32.mxu0 0.0
      %1023 = vmatmul.mubr.f32.gmra.mrb[0].mxu0 %v807
      %v1024 = vpop.f32.mrb[0].mxu0
      %v1025 = vadd.f32 0.0, %v1024
      %v1026 = vpop.f32.mrb[0].mxu0
      %1027 = vmatprep.mubr.f32.mxu0 0.0
      %1028 = vmatmul.mubr.f32.gmra.mrb[0].mxu0 %v809
      %v1029 = vpop.f32.mrb[0].mxu0
      %v1030 = vadd.f32 0.0, %v1029
      %v1031 = vpop.f32.mrb[0].mxu0
      %1032 = vmatprep.mubr.f32.mxu0 0.0
      %1033 = vmatmul.mubr.f32.gmra.mrb[0].mxu0 %v811
      %v1034 = vpop.f32.mrb[0].mxu0
      %v1035 = vadd.f32 0.0, %v1034
      %v1036 = vpop.f32.mrb[0].mxu0
      %1037 = vdwg.mxu0
      %v1039 = vsel %vm748, %v703, 0
      %v1042 = vsel %vm748, %v704, 0
      %v1045 = vsel %vm748, %v705, 0
      %v1048 = vsel %vm748, %v706, 0
      %v1051 = vsel %vm748, %v707, 0
      %v1054 = vsel %vm748, %v708, 0
      %v1057 = vsel %vm748, %v709, 0
      %v1060 = vsel %vm748, %v710, 0
      %v1063 = vsel %vm748, %v711, 0
      %v1066 = vsel %vm748, %v712, 0
      %v1069 = vsel %vm748, %v713, 0
      %v1072 = vsel %vm748, %v714, 0
      %v1075 = vsel %vm748, %v715, 0
      %v1078 = vsel %vm748, %v716, 0
      %v1081 = vsel %vm748, %v717, 0
      %v1084 = vsel %vm748, %v718, 0
      %v1087 = vsel %vm748, %v719, 0
      %v1090 = vsel %vm748, %v720, 0
      %v1093 = vsel %vm748, %v721, 0
      %v1096 = vsel %vm748, %v722, 0
      %v1099 = vsel %vm748, %v723, 0
      %v1102 = vsel %vm748, %v724, 0
      %v1105 = vsel %vm748, %v725, 0
      %v1108 = vsel %vm748, %v726, 0
      %v1111 = vsel %vm748, %v727, 0
      %v1114 = vsel %vm748, %v728, 0
      %v1117 = vsel %vm748, %v729, 0
      %v1120 = vsel %vm748, %v730, 0
      %v1123 = vsel %vm748, %v731, 0
      %v1126 = vsel %vm748, %v732, 0
      %v1129 = vsel %vm748, %v733, 0
      %v1132 = vsel %vm748, %v734, 0
      %1134 = vmatprep.subr.mxu0 0.0
      %1135 = vmatpush1.msra.mxu0 %v735
      %1136 = vmatprep.subr.mxu0 0.0
      %1137 = vmatpush1.msra.mxu0 %v736
      %1138 = vmatprep.subr.mxu0 0.0
      %1139 = vmatpush1.msra.mxu0 %v737
      %1140 = vmatprep.subr.mxu0 0.0
      %1141 = vmatpush1.msra.mxu0 %v738
      %1142 = vmatprep.subr.mxu0 0.0
      %1143 = vmatpush1.msra.mxu0 %v739
      %1144 = vmatprep.subr.mxu0 0.0
      %1145 = vmatpush1.msra.mxu0 %v740
      %1146 = vmatprep.subr.mxu0 0.0
      %1147 = vmatpush1.msra.mxu0 0.0
      %1148 = vmatprep.subr.mxu0 0.0
      %1149 = vmatpush1.msra.mxu0 0.0
      %1150 = vmatprep.subr.mxu0 0.0
      %1151 = vmatpush1.msra.mxu0 0.0
      %1152 = vmatprep.subr.mxu0 0.0
      %1153 = vmatpush1.msra.mxu0 0.0
      %1154 = vmatprep.subr.mxu0 0.0
      %1155 = vmatpush1.msra.mxu0 0.0
      %1156 = vmatprep.subr.mxu0 0.0
      %1157 = vmatpush1.msra.mxu0 0.0
      %1158 = vmatprep.subr.mxu0 0.0
      %1159 = vmatpush1.msra.mxu0 0.0
      %1160 = vmatprep.subr.mxu0 0.0
      %1161 = vmatpush1.msra.mxu0 0.0
      %1162 = vmatprep.subr.mxu0 0.0
      %1163 = vmatpush1.msra.mxu0 0.0
      %1164 = vmatprep.subr.mxu0 0.0
      %1165 = vmatpush1.msra.mxu0 0.0
      %1166 = vmatprep.subr.mxu0 0.0
      %1167 = vmatpush1.msra.mxu0 0.0
      %1168 = vmatprep.subr.mxu0 0.0
      %1169 = vmatpush1.msra.mxu0 0.0
      %1170 = vmatprep.subr.mxu0 0.0
      %1171 = vmatpush1.msra.mxu0 0.0
      %1172 = vmatprep.subr.mxu0 0.0
      %1173 = vmatpush1.msra.mxu0 0.0
      %1174 = vmatprep.subr.mxu0 0.0
      %1175 = vmatpush1.msra.mxu0 0.0
      %1176 = vmatprep.subr.mxu0 0.0
      %1177 = vmatpush1.msra.mxu0 0.0
      %1178 = vmatprep.subr.mxu0 0.0
      %1179 = vmatpush1.msra.mxu0 0.0
      %1180 = vmatprep.subr.mxu0 0.0
      %1181 = vmatpush1.msra.mxu0 0.0
      %1182 = vmatprep.subr.mxu0 0.0
      %1183 = vmatpush1.msra.mxu0 0.0
      %1184 = vmatprep.subr.mxu0 0.0
      %1185 = vmatpush1.msra.mxu0 0.0
      %1186 = vmatprep.subr.mxu0 0.0
      %1187 = vmatpush1.msra.mxu0 0.0
      %1188 = vmatprep.subr.mxu0 0.0
      %1189 = vmatpush1.msra.mxu0 0.0
      %1190 = vmatprep.subr.mxu0 0.0
      %1191 = vmatpush1.msra.mxu0 0.0
      %1192 = vmatprep.subr.mxu0 0.0
      %1193 = vmatpush1.msra.mxu0 0.0
      %1194 = vmatprep.subr.mxu0 0.0
      %1195 = vmatpush1.msra.mxu0 0.0
      %1196 = vmatprep.subr.mxu0 0.0
      %1197 = vmatpush1.msra.mxu0 0.0
      %1198 = vmatprep.mubr.f32.mxu0 0.0
      %1199 = vmatmul.mubr.f32.gmra.mrb[0].mxu0 %v1039
      %v1200 = vpop.f32.mrb[0].mxu0
      %v1201 = vadd.f32 %v880, %v1200
      %v1202 = vpop.f32.mrb[0].mxu0
      %1203 = vmatprep.mubr.f32.mxu0 0.0
      %1204 = vmatmul.mubr.f32.gmra.mrb[0].mxu0 %v1042
      %v1205 = vpop.f32.mrb[0].mxu0
      %v1206 = vadd.f32 %v885, %v1205
      %v1207 = vpop.f32.mrb[0].mxu0
      %1208 = vmatprep.mubr.f32.mxu0 0.0
      %1209 = vmatmul.mubr.f32.gmra.mrb[0].mxu0 %v1045
      %v1210 = vpop.f32.mrb[0].mxu0
      %v1211 = vadd.f32 %v890, %v1210
      %v1212 = vpop.f32.mrb[0].mxu0
      %1213 = vmatprep.mubr.f32.mxu0 0.0
      %1214 = vmatmul.mubr.f32.gmra.mrb[0].mxu0 %v1048
      %v1215 = vpop.f32.mrb[0].mxu0
      %v1216 = vadd.f32 %v895, %v1215
      %v1217 = vpop.f32.mrb[0].mxu0
      %1218 = vmatprep.mubr.f32.mxu0 0.0
      %1219 = vmatmul.mubr.f32.gmra.mrb[0].mxu0 %v1051
      %v1220 = vpop.f32.mrb[0].mxu0
      %v1221 = vadd.f32 %v900, %v1220
      %v1222 = vpop.f32.mrb[0].mxu0
      %1223 = vmatprep.mubr.f32.mxu0 0.0
      %1224 = vmatmul.mubr.f32.gmra.mrb[0].mxu0 %v1054
      %v1225 = vpop.f32.mrb[0].mxu0
      %v1226 = vadd.f32 %v905, %v1225
      %v1227 = vpop.f32.mrb[0].mxu0
      %1228 = vmatprep.mubr.f32.mxu0 0.0
      %1229 = vmatmul.mubr.f32.gmra.mrb[0].mxu0 %v1057
      %v1230 = vpop.f32.mrb[0].mxu0
      %v1231 = vadd.f32 %v910, %v1230
      %v1232 = vpop.f32.mrb[0].mxu0
      %1233 = vmatprep.mubr.f32.mxu0 0.0
      %1234 = vmatmul.mubr.f32.gmra.mrb[0].mxu0 %v1060
      %v1235 = vpop.f32.mrb[0].mxu0
      %v1236 = vadd.f32 %v915, %v1235
      %v1237 = vpop.f32.mrb[0].mxu0
      %1238 = vmatprep.mubr.f32.mxu0 0.0
      %1239 = vmatmul.mubr.f32.gmra.mrb[0].mxu0 %v1063
      %v1240 = vpop.f32.mrb[0].mxu0
      %v1241 = vadd.f32 %v920, %v1240
      %v1242 = vpop.f32.mrb[0].mxu0
      %1243 = vmatprep.mubr.f32.mxu0 0.0
      %1244 = vmatmul.mubr.f32.gmra.mrb[0].mxu0 %v1066
      %v1245 = vpop.f32.mrb[0].mxu0
      %v1246 = vadd.f32 %v925, %v1245
      %v1247 = vpop.f32.mrb[0].mxu0
      %1248 = vmatprep.mubr.f32.mxu0 0.0
      %1249 = vmatmul.mubr.f32.gmra.mrb[0].mxu0 %v1069
      %v1250 = vpop.f32.mrb[0].mxu0
      %v1251 = vadd.f32 %v930, %v1250
      %v1252 = vpop.f32.mrb[0].mxu0
      %1253 = vmatprep.mubr.f32.mxu0 0.0
      %1254 = vmatmul.mubr.f32.gmra.mrb[0].mxu0 %v1072
      %v1255 = vpop.f32.mrb[0].mxu0
      %v1256 = vadd.f32 %v935, %v1255
      %v1257 = vpop.f32.mrb[0].mxu0
      %1258 = vmatprep.mubr.f32.mxu0 0.0
      %1259 = vmatmul.mubr.f32.gmra.mrb[0].mxu0 %v1075
      %v1260 = vpop.f32.mrb[0].mxu0
      %v1261 = vadd.f32 %v940, %v1260
      %v1262 = vpop.f32.mrb[0].mxu0
      %1263 = vmatprep.mubr.f32.mxu0 0.0
      %1264 = vmatmul.mubr.f32.gmra.mrb[0].mxu0 %v1078
      %v1265 = vpop.f32.mrb[0].mxu0
      %v1266 = vadd.f32 %v945, %v1265
      %v1267 = vpop.f32.mrb[0].mxu0
      %1268 = vmatprep.mubr.f32.mxu0 0.0
      %1269 = vmatmul.mubr.f32.gmra.mrb[0].mxu0 %v1081
      %v1270 = vpop.f32.mrb[0].mxu0
      %v1271 = vadd.f32 %v950, %v1270
      %v1272 = vpop.f32.mrb[0].mxu0
      %1273 = vmatprep.mubr.f32.mxu0 0.0
      %1274 = vmatmul.mubr.f32.gmra.mrb[0].mxu0 %v1084
      %v1275 = vpop.f32.mrb[0].mxu0
      %v1276 = vadd.f32 %v955, %v1275
      %v1277 = vpop.f32.mrb[0].mxu0
      %1278 = vmatprep.mubr.f32.mxu0 0.0
      %1279 = vmatmul.mubr.f32.gmra.mrb[0].mxu0 %v1087
      %v1280 = vpop.f32.mrb[0].mxu0
      %v1281 = vadd.f32 %v960, %v1280
      %v1282 = vpop.f32.mrb[0].mxu0
      %1283 = vmatprep.mubr.f32.mxu0 0.0
      %1284 = vmatmul.mubr.f32.gmra.mrb[0].mxu0 %v1090
      %v1285 = vpop.f32.mrb[0].mxu0
      %v1286 = vadd.f32 %v965, %v1285
      %v1287 = vpop.f32.mrb[0].mxu0
      %1288 = vmatprep.mubr.f32.mxu0 0.0
      %1289 = vmatmul.mubr.f32.gmra.mrb[0].mxu0 %v1093
      %v1290 = vpop.f32.mrb[0].mxu0
      %v1291 = vadd.f32 %v970, %v1290
      %v1292 = vpop.f32.mrb[0].mxu0
      %1293 = vmatprep.mubr.f32.mxu0 0.0
      %1294 = vmatmul.mubr.f32.gmra.mrb[0].mxu0 %v1096
      %v1295 = vpop.f32.mrb[0].mxu0
      %v1296 = vadd.f32 %v975, %v1295
      %v1297 = vpop.f32.mrb[0].mxu0
      %1298 = vmatprep.mubr.f32.mxu0 0.0
      %1299 = vmatmul.mubr.f32.gmra.mrb[0].mxu0 %v1099
      %v1300 = vpop.f32.mrb[0].mxu0
      %v1301 = vadd.f32 %v980, %v1300
      %v1302 = vpop.f32.mrb[0].mxu0
      %1303 = vmatprep.mubr.f32.mxu0 0.0
      %1304 = vmatmul.mubr.f32.gmra.mrb[0].mxu0 %v1102
      %v1305 = vpop.f32.mrb[0].mxu0
      %v1306 = vadd.f32 %v985, %v1305
      %v1307 = vpop.f32.mrb[0].mxu0
      %1308 = vmatprep.mubr.f32.mxu0 0.0
      %1309 = vmatmul.mubr.f32.gmra.mrb[0].mxu0 %v1105
      %v1310 = vpop.f32.mrb[0].mxu0
      %v1311 = vadd.f32 %v990, %v1310
      %v1312 = vpop.f32.mrb[0].mxu0
      %1313 = vmatprep.mubr.f32.mxu0 0.0
      %1314 = vmatmul.mubr.f32.gmra.mrb[0].mxu0 %v1108
      %v1315 = vpop.f32.mrb[0].mxu0
      %v1316 = vadd.f32 %v995, %v1315
      %v1317 = vpop.f32.mrb[0].mxu0
      %1318 = vmatprep.mubr.f32.mxu0 0.0
      %1319 = vmatmul.mubr.f32.gmra.mrb[0].mxu0 %v1111
      %v1320 = vpop.f32.mrb[0].mxu0
      %v1321 = vadd.f32 %v1000, %v1320
      %v1322 = vpop.f32.mrb[0].mxu0
      %1323 = vmatprep.mubr.f32.mxu0 0.0
      %1324 = vmatmul.mubr.f32.gmra.mrb[0].mxu0 %v1114
      %v1325 = vpop.f32.mrb[0].mxu0
      %v1326 = vadd.f32 %v1005, %v1325
      %v1327 = vpop.f32.mrb[0].mxu0
      %1328 = vmatprep.mubr.f32.mxu0 0.0
      %1329 = vmatmul.mubr.f32.gmra.mrb[0].mxu0 %v1117
      %v1330 = vpop.f32.mrb[0].mxu0
      %v1331 = vadd.f32 %v1010, %v1330
      %v1332 = vpop.f32.mrb[0].mxu0
      %1333 = vmatprep.mubr.f32.mxu0 0.0
      %1334 = vmatmul.mubr.f32.gmra.mrb[0].mxu0 %v1120
      %v1335 = vpop.f32.mrb[0].mxu0
      %v1336 = vadd.f32 %v1015, %v1335
      %v1337 = vpop.f32.mrb[0].mxu0
      %1338 = vmatprep.mubr.f32.mxu0 0.0
      %1339 = vmatmul.mubr.f32.gmra.mrb[0].mxu0 %v1123
      %v1340 = vpop.f32.mrb[0].mxu0
      %v1341 = vadd.f32 %v1020, %v1340
      %v1342 = vpop.f32.mrb[0].mxu0
      %1343 = vmatprep.mubr.f32.mxu0 0.0
      %1344 = vmatmul.mubr.f32.gmra.mrb[0].mxu0 %v1126
      %v1345 = vpop.f32.mrb[0].mxu0
      %v1346 = vadd.f32 %v1025, %v1345
      %v1347 = vpop.f32.mrb[0].mxu0
      %1348 = vmatprep.mubr.f32.mxu0 0.0
      %1349 = vmatmul.mubr.f32.gmra.mrb[0].mxu0 %v1129
      %v1350 = vpop.f32.mrb[0].mxu0
      %v1351 = vadd.f32 %v1030, %v1350
      %v1352 = vpop.f32.mrb[0].mxu0
      %1353 = vmatprep.mubr.f32.mxu0 0.0
      %1354 = vmatmul.mubr.f32.gmra.mrb[0].mxu0 %v1132
      %v1355 = vpop.f32.mrb[0].mxu0
      %v1356 = vadd.f32 %v1035, %v1355
      %v1357 = vpop.f32.mrb[0].mxu0
      %1358 = vdwg.mxu0
      %vm1359 = vcmask 1046528
      %v1360 = vrot.slane %v444, 1
      %v1361 = vrot.slane %v445, 1
      %v1362 = vsel %vm1359, %v1360, %v1361
      %v1363 = vrot.slane %v446, 1
      %v1364 = vsel %vm1359, %v1361, %v1363
      %v1365 = vrot.slane %v447, 1
      %v1366 = vsel %vm1359, %v1363, %v1365
      %v1367 = vrot.slane %v448, 1
      %v1368 = vsel %vm1359, %v1365, %v1367
      %v1369 = vrot.slane %v449, 1
      %v1370 = vsel %vm1359, %v1367, %v1369
      %v1371 = vrot.slane %v450, 1
      %v1372 = vsel %vm1359, %v1369, %v1371
      %v1373 = vrot.slane %v451, 1
      %v1374 = vsel %vm1359, %v1371, %v1373
      %v1375 = vrot.slane %v452, 1
      %v1376 = vsel %vm1359, %v1373, %v1375
      %v1377 = vrot.slane %v453, 1
      %v1378 = vsel %vm1359, %v1375, %v1377
      %v1379 = vrot.slane %v454, 1
      %v1380 = vsel %vm1359, %v1377, %v1379
      %v1381 = vrot.slane %v455, 1
      %v1382 = vsel %vm1359, %v1379, %v1381
      %v1383 = vrot.slane %v456, 1
      %v1384 = vsel %vm1359, %v1381, %v1383
      %v1385 = vrot.slane %v457, 1
      %v1386 = vsel %vm1359, %v1383, %v1385
      %v1387 = vrot.slane %v458, 1
      %v1388 = vsel %vm1359, %v1385, %v1387
      %v1389 = vrot.slane %v459, 1
      %v1390 = vsel %vm1359, %v1387, %v1389
      %v1391 = vrot.slane %v460, 1
      %v1392 = vsel %vm1359, %v1389, %v1391
      %v1393 = vrot.slane %v461, 1
      %v1394 = vsel %vm1359, %v1391, %v1393
      %v1395 = vrot.slane %v462, 1
      %v1396 = vsel %vm1359, %v1393, %v1395
      %v1397 = vrot.slane %v463, 1
      %v1398 = vsel %vm1359, %v1395, %v1397
      %v1399 = vrot.slane %v464, 1
      %v1400 = vsel %vm1359, %v1397, %v1399
      %v1401 = vrot.slane %v465, 1
      %v1402 = vsel %vm1359, %v1399, %v1401
      %v1403 = vrot.slane %v466, 1
      %v1404 = vsel %vm1359, %v1401, %v1403
      %v1405 = vrot.slane %v467, 1
      %v1406 = vsel %vm1359, %v1403, %v1405
      %v1407 = vrot.slane %v468, 1
      %v1408 = vsel %vm1359, %v1405, %v1407
      %v1409 = vrot.slane %v469, 1
      %v1410 = vsel %vm1359, %v1407, %v1409
      %v1411 = vrot.slane %v470, 1
      %v1412 = vsel %vm1359, %v1409, %v1411
      %v1413 = vrot.slane %v471, 1
      %v1414 = vsel %vm1359, %v1411, %v1413
      %v1415 = vrot.slane %v472, 1
      %v1416 = vsel %vm1359, %v1413, %v1415
      %v1417 = vrot.slane %v473, 1
      %v1418 = vsel %vm1359, %v1415, %v1417
      %v1419 = vrot.slane %v474, 1
      %v1420 = vsel %vm1359, %v1417, %v1419
      %v1421 = vrot.slane %v475, 1
      %v1422 = vsel %vm1359, %v1419, %v1421
      %v1456 = vsel %vm1359, %v1421, %v1360
      %vm1457 = vcmp.lt.s32.totalorder %v639, 15
      %vm1458 = vcmp.lt.s32.totalorder %v640, 15
      %vm1459 = vcmp.lt.s32.totalorder %v641, 15
      %vm1460 = vcmp.lt.s32.totalorder %v642, 15
      %vm1461 = vcmp.lt.s32.totalorder %v643, 15
      %vm1462 = vcmp.lt.s32.totalorder %v644, 15
      %vm1463 = vcmp.lt.s32.totalorder %v645, 15
      %vm1464 = vcmp.lt.s32.totalorder %v646, 15
      %vm1465 = vcmp.lt.s32.totalorder %v647, 15
      %vm1466 = vcmp.lt.s32.totalorder %v648, 15
      %vm1467 = vcmp.lt.s32.totalorder %v649, 15
      %vm1468 = vcmp.lt.s32.totalorder %v650, 15
      %vm1469 = vcmp.lt.s32.totalorder %v651, 15
      %vm1470 = vcmp.lt.s32.totalorder %v652, 15
      %vm1471 = vcmp.lt.s32.totalorder %v653, 15
      %vm1472 = vcmp.lt.s32.totalorder %v654, 15
      %vm1473 = vcmp.lt.s32.totalorder %v655, 15
      %vm1474 = vcmp.lt.s32.totalorder %v656, 15
      %vm1475 = vcmp.lt.s32.totalorder %v657, 15
      %vm1476 = vcmp.lt.s32.totalorder %v658, 15
      %vm1477 = vcmp.lt.s32.totalorder %v659, 15
      %vm1478 = vcmp.lt.s32.totalorder %v660, 15
      %vm1479 = vcmp.lt.s32.totalorder %v661, 15
      %vm1480 = vcmp.lt.s32.totalorder %v662, 15
      %vm1481 = vcmp.lt.s32.totalorder %v663, 15
      %vm1482 = vcmp.lt.s32.totalorder %v664, 15
      %vm1483 = vcmp.lt.s32.totalorder %v665, 15
      %vm1484 = vcmp.lt.s32.totalorder %v666, 15
      %vm1485 = vcmp.lt.s32.totalorder %v667, 15
      %vm1486 = vcmp.lt.s32.totalorder %v668, 15
      %vm1487 = vcmp.lt.s32.totalorder %v669, 15
      %vm1488 = vcmp.lt.s32.totalorder %v670, 15
      %v1489 = vsel %vm1457, %v1362, 0.0
      %v1490 = vsel %vm1458, %v1364, 0.0
      %v1491 = vsel %vm1459, %v1366, 0.0
      %v1492 = vsel %vm1460, %v1368, 0.0
      %v1493 = vsel %vm1461, %v1370, 0.0
      %v1494 = vsel %vm1462, %v1372, 0.0
      %v1495 = vsel %vm1463, %v1374, 0.0
      %v1496 = vsel %vm1464, %v1376, 0.0
      %v1497 = vsel %vm1465, %v1378, 0.0
      %v1498 = vsel %vm1466, %v1380, 0.0
      %v1499 = vsel %vm1467, %v1382, 0.0
      %v1500 = vsel %vm1468, %v1384, 0.0
      %v1501 = vsel %vm1469, %v1386, 0.0
      %v1502 = vsel %vm1470, %v1388, 0.0
      %v1503 = vsel %vm1471, %v1390, 0.0
      %v1504 = vsel %vm1472, %v1392, 0.0
      %v1505 = vsel %vm1473, %v1394, 0.0
      %v1506 = vsel %vm1474, %v1396, 0.0
      %v1507 = vsel %vm1475, %v1398, 0.0
      %v1508 = vsel %vm1476, %v1400, 0.0
      %v1509 = vsel %vm1477, %v1402, 0.0
      %v1510 = vsel %vm1478, %v1404, 0.0
      %v1511 = vsel %vm1479, %v1406, 0.0
      %v1512 = vsel %vm1480, %v1408, 0.0
      %v1513 = vsel %vm1481, %v1410, 0.0
      %v1514 = vsel %vm1482, %v1412, 0.0
      %v1515 = vsel %vm1483, %v1414, 0.0
      %v1516 = vsel %vm1484, %v1416, 0.0
      %v1517 = vsel %vm1485, %v1418, 0.0
      %v1518 = vsel %vm1486, %v1420, 0.0
      %v1519 = vsel %vm1487, %v1422, 0.0
      %v1520 = vsel %vm1488, %v1456, 0.0
      %s1521 = scalar_lea.vmem %s1, 96
      %v1522 = vld [vmem:[%s1521] sm:$0xff]
      %v1523 = vld [vmem:[%s1521 + $0x8] sm:$0xff]
      %v1524 = vld [vmem:[%s1521 + $0x10] sm:$0xff]
      %v1525 = vld [vmem:[%s1521 + $0x18] sm:$0xff]
      %v1526 = vld [vmem:[%s1521 + $0x20] sm:$0xff]
      %v1527 = vld [vmem:[%s1521 + $0x28] sm:$0xff]
      %v1529 = vsel %vm748, %v1489, 0
      %v1532 = vsel %vm748, %v1490, 0
      %v1535 = vsel %vm748, %v1491, 0
      %v1538 = vsel %vm748, %v1492, 0
      %v1541 = vsel %vm748, %v1493, 0
      %v1544 = vsel %vm748, %v1494, 0
      %v1547 = vsel %vm748, %v1495, 0
      %v1550 = vsel %vm748, %v1496, 0
      %v1553 = vsel %vm748, %v1497, 0
      %v1556 = vsel %vm748, %v1498, 0
      %v1559 = vsel %vm748, %v1499, 0
      %v1562 = vsel %vm748, %v1500, 0
      %v1565 = vsel %vm748, %v1501, 0
      %v1568 = vsel %vm748, %v1502, 0
      %v1571 = vsel %vm748, %v1503, 0
      %v1574 = vsel %vm748, %v1504, 0
      %v1577 = vsel %vm748, %v1505, 0
      %v1580 = vsel %vm748, %v1506, 0
      %v1583 = vsel %vm748, %v1507, 0
      %v1586 = vsel %vm748, %v1508, 0
      %v1589 = vsel %vm748, %v1509, 0
      %v1592 = vsel %vm748, %v1510, 0
      %v1595 = vsel %vm748, %v1511, 0
      %v1598 = vsel %vm748, %v1512, 0
      %v1601 = vsel %vm748, %v1513, 0
      %v1604 = vsel %vm748, %v1514, 0
      %v1607 = vsel %vm748, %v1515, 0
      %v1610 = vsel %vm748, %v1516, 0
      %v1613 = vsel %vm748, %v1517, 0
      %v1616 = vsel %vm748, %v1518, 0
      %v1619 = vsel %vm748, %v1519, 0
      %v1622 = vsel %vm748, %v1520, 0
      %1624 = vmatprep.subr.mxu0 0.0
      %1625 = vmatpush1.msra.mxu0 %v1522
      %1626 = vmatprep.subr.mxu0 0.0
      %1627 = vmatpush1.msra.mxu0 %v1523
      %1628 = vmatprep.subr.mxu0 0.0
      %1629 = vmatpush1.msra.mxu0 %v1524
      %1630 = vmatprep.subr.mxu0 0.0
      %1631 = vmatpush1.msra.mxu0 %v1525
      %1632 = vmatprep.subr.mxu0 0.0
      %1633 = vmatpush1.msra.mxu0 %v1526
      %1634 = vmatprep.subr.mxu0 0.0
      %1635 = vmatpush1.msra.mxu0 %v1527
      %1636 = vmatprep.subr.mxu0 0.0
      %1637 = vmatpush1.msra.mxu0 0.0
      %1638 = vmatprep.subr.mxu0 0.0
      %1639 = vmatpush1.msra.mxu0 0.0
      %1640 = vmatprep.subr.mxu0 0.0
      %1641 = vmatpush1.msra.mxu0 0.0
      %1642 = vmatprep.subr.mxu0 0.0
      %1643 = vmatpush1.msra.mxu0 0.0
      %1644 = vmatprep.subr.mxu0 0.0
      %1645 = vmatpush1.msra.mxu0 0.0
      %1646 = vmatprep.subr.mxu0 0.0
      %1647 = vmatpush1.msra.mxu0 0.0
      %1648 = vmatprep.subr.mxu0 0.0
      %1649 = vmatpush1.msra.mxu0 0.0
      %1650 = vmatprep.subr.mxu0 0.0
      %1651 = vmatpush1.msra.mxu0 0.0
      %1652 = vmatprep.subr.mxu0 0.0
      %1653 = vmatpush1.msra.mxu0 0.0
      %1654 = vmatprep.subr.mxu0 0.0
      %1655 = vmatpush1.msra.mxu0 0.0
      %1656 = vmatprep.subr.mxu0 0.0
      %1657 = vmatpush1.msra.mxu0 0.0
      %1658 = vmatprep.subr.mxu0 0.0
      %1659 = vmatpush1.msra.mxu0 0.0
      %1660 = vmatprep.subr.mxu0 0.0
      %1661 = vmatpush1.msra.mxu0 0.0
      %1662 = vmatprep.subr.mxu0 0.0
      %1663 = vmatpush1.msra.mxu0 0.0
      %1664 = vmatprep.subr.mxu0 0.0
      %1665 = vmatpush1.msra.mxu0 0.0
      %1666 = vmatprep.subr.mxu0 0.0
      %1667 = vmatpush1.msra.mxu0 0.0
      %1668 = vmatprep.subr.mxu0 0.0
      %1669 = vmatpush1.msra.mxu0 0.0
      %1670 = vmatprep.subr.mxu0 0.0
      %1671 = vmatpush1.msra.mxu0 0.0
      %1672 = vmatprep.subr.mxu0 0.0
      %1673 = vmatpush1.msra.mxu0 0.0
      %1674 = vmatprep.subr.mxu0 0.0
      %1675 = vmatpush1.msra.mxu0 0.0
      %1676 = vmatprep.subr.mxu0 0.0
      %1677 = vmatpush1.msra.mxu0 0.0
      %1678 = vmatprep.subr.mxu0 0.0
      %1679 = vmatpush1.msra.mxu0 0.0
      %1680 = vmatprep.subr.mxu0 0.0
      %1681 = vmatpush1.msra.mxu0 0.0
      %1682 = vmatprep.subr.mxu0 0.0
      %1683 = vmatpush1.msra.mxu0 0.0
      %1684 = vmatprep.subr.mxu0 0.0
      %1685 = vmatpush1.msra.mxu0 0.0
      %1686 = vmatprep.subr.mxu0 0.0
      %1687 = vmatpush1.msra.mxu0 0.0
      %1688 = vmatprep.mubr.f32.mxu0 0.0
      %1689 = vmatmul.mubr.f32.gmra.mrb[0].mxu0 %v1529
      %v1690 = vpop.f32.mrb[0].mxu0
      %v1691 = vadd.f32 0.0, %v1690
      %v1692 = vpop.f32.mrb[0].mxu0
      %1693 = vmatprep.mubr.f32.mxu0 0.0
      %1694 = vmatmul.mubr.f32.gmra.mrb[0].mxu0 %v1532
      %v1695 = vpop.f32.mrb[0].mxu0
      %v1696 = vadd.f32 0.0, %v1695
      %v1697 = vpop.f32.mrb[0].mxu0
      %1698 = vmatprep.mubr.f32.mxu0 0.0
      %1699 = vmatmul.mubr.f32.gmra.mrb[0].mxu0 %v1535
      %v1700 = vpop.f32.mrb[0].mxu0
      %v1701 = vadd.f32 0.0, %v1700
      %v1702 = vpop.f32.mrb[0].mxu0
      %1703 = vmatprep.mubr.f32.mxu0 0.0
      %1704 = vmatmul.mubr.f32.gmra.mrb[0].mxu0 %v1538
      %v1705 = vpop.f32.mrb[0].mxu0
      %v1706 = vadd.f32 0.0, %v1705
      %v1707 = vpop.f32.mrb[0].mxu0
      %1708 = vmatprep.mubr.f32.mxu0 0.0
      %1709 = vmatmul.mubr.f32.gmra.mrb[0].mxu0 %v1541
      %v1710 = vpop.f32.mrb[0].mxu0
      %v1711 = vadd.f32 0.0, %v1710
      %v1712 = vpop.f32.mrb[0].mxu0
      %1713 = vmatprep.mubr.f32.mxu0 0.0
      %1714 = vmatmul.mubr.f32.gmra.mrb[0].mxu0 %v1544
      %v1715 = vpop.f32.mrb[0].mxu0
      %v1716 = vadd.f32 0.0, %v1715
      %v1717 = vpop.f32.mrb[0].mxu0
      %1718 = vmatprep.mubr.f32.mxu0 0.0
      %1719 = vmatmul.mubr.f32.gmra.mrb[0].mxu0 %v1547
      %v1720 = vpop.f32.mrb[0].mxu0
      %v1721 = vadd.f32 0.0, %v1720
      %v1722 = vpop.f32.mrb[0].mxu0
      %1723 = vmatprep.mubr.f32.mxu0 0.0
      %1724 = vmatmul.mubr.f32.gmra.mrb[0].mxu0 %v1550
      %v1725 = vpop.f32.mrb[0].mxu0
      %v1726 = vadd.f32 0.0, %v1725
      %v1727 = vpop.f32.mrb[0].mxu0
      %1728 = vmatprep.mubr.f32.mxu0 0.0
      %1729 = vmatmul.mubr.f32.gmra.mrb[0].mxu0 %v1553
      %v1730 = vpop.f32.mrb[0].mxu0
      %v1731 = vadd.f32 0.0, %v1730
      %v1732 = vpop.f32.mrb[0].mxu0
      %1733 = vmatprep.mubr.f32.mxu0 0.0
      %1734 = vmatmul.mubr.f32.gmra.mrb[0].mxu0 %v1556
      %v1735 = vpop.f32.mrb[0].mxu0
      %v1736 = vadd.f32 0.0, %v1735
      %v1737 = vpop.f32.mrb[0].mxu0
      %1738 = vmatprep.mubr.f32.mxu0 0.0
      %1739 = vmatmul.mubr.f32.gmra.mrb[0].mxu0 %v1559
      %v1740 = vpop.f32.mrb[0].mxu0
      %v1741 = vadd.f32 0.0, %v1740
      %v1742 = vpop.f32.mrb[0].mxu0
      %1743 = vmatprep.mubr.f32.mxu0 0.0
      %1744 = vmatmul.mubr.f32.gmra.mrb[0].mxu0 %v1562
      %v1745 = vpop.f32.mrb[0].mxu0
      %v1746 = vadd.f32 0.0, %v1745
      %v1747 = vpop.f32.mrb[0].mxu0
      %1748 = vmatprep.mubr.f32.mxu0 0.0
      %1749 = vmatmul.mubr.f32.gmra.mrb[0].mxu0 %v1565
      %v1750 = vpop.f32.mrb[0].mxu0
      %v1751 = vadd.f32 0.0, %v1750
      %v1752 = vpop.f32.mrb[0].mxu0
      %1753 = vmatprep.mubr.f32.mxu0 0.0
      %1754 = vmatmul.mubr.f32.gmra.mrb[0].mxu0 %v1568
      %v1755 = vpop.f32.mrb[0].mxu0
      %v1756 = vadd.f32 0.0, %v1755
      %v1757 = vpop.f32.mrb[0].mxu0
      %1758 = vmatprep.mubr.f32.mxu0 0.0
      %1759 = vmatmul.mubr.f32.gmra.mrb[0].mxu0 %v1571
      %v1760 = vpop.f32.mrb[0].mxu0
      %v1761 = vadd.f32 0.0, %v1760
      %v1762 = vpop.f32.mrb[0].mxu0
      %1763 = vmatprep.mubr.f32.mxu0 0.0
      %1764 = vmatmul.mubr.f32.gmra.mrb[0].mxu0 %v1574
      %v1765 = vpop.f32.mrb[0].mxu0
      %v1766 = vadd.f32 0.0, %v1765
      %v1767 = vpop.f32.mrb[0].mxu0
      %1768 = vmatprep.mubr.f32.mxu0 0.0
      %1769 = vmatmul.mubr.f32.gmra.mrb[0].mxu0 %v1577
      %v1770 = vpop.f32.mrb[0].mxu0
      %v1771 = vadd.f32 0.0, %v1770
      %v1772 = vpop.f32.mrb[0].mxu0
      %1773 = vmatprep.mubr.f32.mxu0 0.0
      %1774 = vmatmul.mubr.f32.gmra.mrb[0].mxu0 %v1580
      %v1775 = vpop.f32.mrb[0].mxu0
      %v1776 = vadd.f32 0.0, %v1775
      %v1777 = vpop.f32.mrb[0].mxu0
      %1778 = vmatprep.mubr.f32.mxu0 0.0
      %1779 = vmatmul.mubr.f32.gmra.mrb[0].mxu0 %v1583
      %v1780 = vpop.f32.mrb[0].mxu0
      %v1781 = vadd.f32 0.0, %v1780
      %v1782 = vpop.f32.mrb[0].mxu0
      %1783 = vmatprep.mubr.f32.mxu0 0.0
      %1784 = vmatmul.mubr.f32.gmra.mrb[0].mxu0 %v1586
      %v1785 = vpop.f32.mrb[0].mxu0
      %v1786 = vadd.f32 0.0, %v1785
      %v1787 = vpop.f32.mrb[0].mxu0
      %1788 = vmatprep.mubr.f32.mxu0 0.0
      %1789 = vmatmul.mubr.f32.gmra.mrb[0].mxu0 %v1589
      %v1790 = vpop.f32.mrb[0].mxu0
      %v1791 = vadd.f32 0.0, %v1790
      %v1792 = vpop.f32.mrb[0].mxu0
      %1793 = vmatprep.mubr.f32.mxu0 0.0
      %1794 = vmatmul.mubr.f32.gmra.mrb[0].mxu0 %v1592
      %v1795 = vpop.f32.mrb[0].mxu0
      %v1796 = vadd.f32 0.0, %v1795
      %v1797 = vpop.f32.mrb[0].mxu0
      %1798 = vmatprep.mubr.f32.mxu0 0.0
      %1799 = vmatmul.mubr.f32.gmra.mrb[0].mxu0 %v1595
      %v1800 = vpop.f32.mrb[0].mxu0
      %v1801 = vadd.f32 0.0, %v1800
      %v1802 = vpop.f32.mrb[0].mxu0
      %1803 = vmatprep.mubr.f32.mxu0 0.0
      %1804 = vmatmul.mubr.f32.gmra.mrb[0].mxu0 %v1598
      %v1805 = vpop.f32.mrb[0].mxu0
      %v1806 = vadd.f32 0.0, %v1805
      %v1807 = vpop.f32.mrb[0].mxu0
      %1808 = vmatprep.mubr.f32.mxu0 0.0
      %1809 = vmatmul.mubr.f32.gmra.mrb[0].mxu0 %v1601
      %v1810 = vpop.f32.mrb[0].mxu0
      %v1811 = vadd.f32 0.0, %v1810
      %v1812 = vpop.f32.mrb[0].mxu0
      %1813 = vmatprep.mubr.f32.mxu0 0.0
      %1814 = vmatmul.mubr.f32.gmra.mrb[0].mxu0 %v1604
      %v1815 = vpop.f32.mrb[0].mxu0
      %v1816 = vadd.f32 0.0, %v1815
      %v1817 = vpop.f32.mrb[0].mxu0
      %1818 = vmatprep.mubr.f32.mxu0 0.0
      %1819 = vmatmul.mubr.f32.gmra.mrb[0].mxu0 %v1607
      %v1820 = vpop.f32.mrb[0].mxu0
      %v1821 = vadd.f32 0.0, %v1820
      %v1822 = vpop.f32.mrb[0].mxu0
      %1823 = vmatprep.mubr.f32.mxu0 0.0
      %1824 = vmatmul.mubr.f32.gmra.mrb[0].mxu0 %v1610
      %v1825 = vpop.f32.mrb[0].mxu0
      %v1826 = vadd.f32 0.0, %v1825
      %v1827 = vpop.f32.mrb[0].mxu0
      %1828 = vmatprep.mubr.f32.mxu0 0.0
      %1829 = vmatmul.mubr.f32.gmra.mrb[0].mxu0 %v1613
      %v1830 = vpop.f32.mrb[0].mxu0
      %v1831 = vadd.f32 0.0, %v1830
      %v1832 = vpop.f32.mrb[0].mxu0
      %1833 = vmatprep.mubr.f32.mxu0 0.0
      %1834 = vmatmul.mubr.f32.gmra.mrb[0].mxu0 %v1616
      %v1835 = vpop.f32.mrb[0].mxu0
      %v1836 = vadd.f32 0.0, %v1835
      %v1837 = vpop.f32.mrb[0].mxu0
      %1838 = vmatprep.mubr.f32.mxu0 0.0
      %1839 = vmatmul.mubr.f32.gmra.mrb[0].mxu0 %v1619
      %v1840 = vpop.f32.mrb[0].mxu0
      %v1841 = vadd.f32 0.0, %v1840
      %v1842 = vpop.f32.mrb[0].mxu0
      %1843 = vmatprep.mubr.f32.mxu0 0.0
      %1844 = vmatmul.mubr.f32.gmra.mrb[0].mxu0 %v1622
      %v1845 = vpop.f32.mrb[0].mxu0
      %v1846 = vadd.f32 0.0, %v1845
      %v1847 = vpop.f32.mrb[0].mxu0
      %1848 = vdwg.mxu0
      %v1849 = vadd.f32 %v1201, %v1691
      %v1850 = vadd.f32 %v1206, %v1696
      %v1851 = vadd.f32 %v1211, %v1701
      %v1852 = vadd.f32 %v1216, %v1706
      %v1853 = vadd.f32 %v1221, %v1711
      %v1854 = vadd.f32 %v1226, %v1716
      %v1855 = vadd.f32 %v1231, %v1721
      %v1856 = vadd.f32 %v1236, %v1726
      %v1857 = vadd.f32 %v1241, %v1731
      %v1858 = vadd.f32 %v1246, %v1736
      %v1859 = vadd.f32 %v1251, %v1741
      %v1860 = vadd.f32 %v1256, %v1746
      %v1861 = vadd.f32 %v1261, %v1751
      %v1862 = vadd.f32 %v1266, %v1756
      %v1863 = vadd.f32 %v1271, %v1761
      %v1864 = vadd.f32 %v1276, %v1766
      %v1865 = vadd.f32 %v1281, %v1771
      %v1866 = vadd.f32 %v1286, %v1776
      %v1867 = vadd.f32 %v1291, %v1781
      %v1868 = vadd.f32 %v1296, %v1786
      %v1869 = vadd.f32 %v1301, %v1791
      %v1870 = vadd.f32 %v1306, %v1796
      %v1871 = vadd.f32 %v1311, %v1801
      %v1872 = vadd.f32 %v1316, %v1806
      %v1873 = vadd.f32 %v1321, %v1811
      %v1874 = vadd.f32 %v1326, %v1816
      %v1875 = vadd.f32 %v1331, %v1821
      %v1876 = vadd.f32 %v1336, %v1826
      %v1877 = vadd.f32 %v1341, %v1831
      %v1878 = vadd.f32 %v1346, %v1836
      %v1879 = vadd.f32 %v1351, %v1841
      %v1880 = vadd.f32 %v1356, %v1846
      %v1881 = vld [vmem:[%s2] sm:$0x1]
      %v1883 = vlaneseq
      %v1884 = vshrl.u32 %v1883, 7
      %v1885 = vsub.s32 0, %v1884
      %v1886 = vrot.slane %v1881, %v1885
      %v1888 = vadd.f32 %v1849, %v1886
      %v1889 = vadd.f32 %v1850, %v1886
      %v1890 = vadd.f32 %v1851, %v1886
      %v1891 = vadd.f32 %v1852, %v1886
      %v1892 = vadd.f32 %v1853, %v1886
      %v1893 = vadd.f32 %v1854, %v1886
      %v1894 = vadd.f32 %v1855, %v1886
      %v1895 = vadd.f32 %v1856, %v1886
      %v1896 = vadd.f32 %v1857, %v1886
      %v1897 = vadd.f32 %v1858, %v1886
      %v1898 = vadd.f32 %v1859, %v1886
      %v1899 = vadd.f32 %v1860, %v1886
      %v1900 = vadd.f32 %v1861, %v1886
      %v1901 = vadd.f32 %v1862, %v1886
      %v1902 = vadd.f32 %v1863, %v1886
      %v1903 = vadd.f32 %v1864, %v1886
      %v1904 = vadd.f32 %v1865, %v1886
      %v1905 = vadd.f32 %v1866, %v1886
      %v1906 = vadd.f32 %v1867, %v1886
      %v1907 = vadd.f32 %v1868, %v1886
      %v1908 = vadd.f32 %v1869, %v1886
      %v1909 = vadd.f32 %v1870, %v1886
      %v1910 = vadd.f32 %v1871, %v1886
      %v1911 = vadd.f32 %v1872, %v1886
      %v1912 = vadd.f32 %v1873, %v1886
      %v1913 = vadd.f32 %v1874, %v1886
      %v1914 = vadd.f32 %v1875, %v1886
      %v1915 = vadd.f32 %v1876, %v1886
      %v1916 = vadd.f32 %v1877, %v1886
      %v1917 = vadd.f32 %v1878, %v1886
      %v1918 = vadd.f32 %v1879, %v1886
      %v1919 = vadd.f32 %v1880, %v1886
      %v1920 = vmax.f32 %v1888, 0.0
      %v1921 = vmax.f32 %v1889, 0.0
      %v1922 = vmax.f32 %v1890, 0.0
      %v1923 = vmax.f32 %v1891, 0.0
      %v1924 = vmax.f32 %v1892, 0.0
      %v1925 = vmax.f32 %v1893, 0.0
      %v1926 = vmax.f32 %v1894, 0.0
      %v1927 = vmax.f32 %v1895, 0.0
      %v1928 = vmax.f32 %v1896, 0.0
      %v1929 = vmax.f32 %v1897, 0.0
      %v1930 = vmax.f32 %v1898, 0.0
      %v1931 = vmax.f32 %v1899, 0.0
      %v1932 = vmax.f32 %v1900, 0.0
      %v1933 = vmax.f32 %v1901, 0.0
      %v1934 = vmax.f32 %v1902, 0.0
      %v1935 = vmax.f32 %v1903, 0.0
      %v1936 = vmax.f32 %v1904, 0.0
      %v1937 = vmax.f32 %v1905, 0.0
      %v1938 = vmax.f32 %v1906, 0.0
      %v1939 = vmax.f32 %v1907, 0.0
      %v1940 = vmax.f32 %v1908, 0.0
      %v1941 = vmax.f32 %v1909, 0.0
      %v1942 = vmax.f32 %v1910, 0.0
      %v1943 = vmax.f32 %v1911, 0.0
      %v1944 = vmax.f32 %v1912, 0.0
      %v1945 = vmax.f32 %v1913, 0.0
      %v1946 = vmax.f32 %v1914, 0.0
      %v1947 = vmax.f32 %v1915, 0.0
      %v1948 = vmax.f32 %v1916, 0.0
      %v1949 = vmax.f32 %v1917, 0.0
      %v1950 = vmax.f32 %v1918, 0.0
      %v1951 = vmax.f32 %v1919, 0.0
      %1952 = vst [vmem:[#allocation2] sm:$0xff] %v1920
      %1953 = vst [vmem:[#allocation2 + $0x8] sm:$0xff] %v1921
      %1954 = vst [vmem:[#allocation2 + $0x10] sm:$0xff] %v1922
      %1955 = vst [vmem:[#allocation2 + $0x18] sm:$0xff] %v1923
      %1956 = vst [vmem:[#allocation2 + $0x20] sm:$0xff] %v1924
      %1957 = vst [vmem:[#allocation2 + $0x28] sm:$0xff] %v1925
      %1958 = vst [vmem:[#allocation2 + $0x30] sm:$0xff] %v1926
      %1959 = vst [vmem:[#allocation2 + $0x38] sm:$0xff] %v1927
      %1960 = vst [vmem:[#allocation2 + $0x40] sm:$0xff] %v1928
      %1961 = vst [vmem:[#allocation2 + $0x48] sm:$0xff] %v1929
      %1962 = vst [vmem:[#allocation2 + $0x50] sm:$0xff] %v1930
      %1963 = vst [vmem:[#allocation2 + $0x58] sm:$0xff] %v1931
      %1964 = vst [vmem:[#allocation2 + $0x60] sm:$0xff] %v1932
      %1965 = vst [vmem:[#allocation2 + $0x68] sm:$0xff] %v1933
      %1966 = vst [vmem:[#allocation2 + $0x70] sm:$0xff] %v1934
      %1967 = vst [vmem:[#allocation2 + $0x78] sm:$0xff] %v1935
      %1968 = vst [vmem:[#allocation2 + $0x80] sm:$0xff] %v1936
      %1969 = vst [vmem:[#allocation2 + $0x88] sm:$0xff] %v1937
      %1970 = vst [vmem:[#allocation2 + $0x90] sm:$0xff] %v1938
      %1971 = vst [vmem:[#allocation2 + $0x98] sm:$0xff] %v1939
      %1972 = vst [vmem:[#allocation2 + $0xa0] sm:$0xff] %v1940
      %1973 = vst [vmem:[#allocation2 + $0xa8] sm:$0xff] %v1941
      %1974 = vst [vmem:[#allocation2 + $0xb0] sm:$0xff] %v1942
      %1975 = vst [vmem:[#allocation2 + $0xb8] sm:$0xff] %v1943
      %1976 = vst [vmem:[#allocation2 + $0xc0] sm:$0xff] %v1944
      %1977 = vst [vmem:[#allocation2 + $0xc8] sm:$0xff] %v1945
      %1978 = vst [vmem:[#allocation2 + $0xd0] sm:$0xff] %v1946
      %1979 = vst [vmem:[#allocation2 + $0xd8] sm:$0xff] %v1947
      %1980 = vst [vmem:[#allocation2 + $0xe0] sm:$0xff] %v1948
      %1981 = vst [vmem:[#allocation2 + $0xe8] sm:$0xff] %v1949
      %1982 = vst [vmem:[#allocation2 + $0xf0] sm:$0xff] %v1950
      %1983 = vst [vmem:[#allocation2 + $0xf8] sm:$0xff] %v1951
      %v1984 = vld [vmem:[#allocation2] ss:$2 sm:$0xff]
      %s1985 = scalar_lea.vmem [#allocation2], 16
      %v1986 = vld [vmem:[%s1985] ss:$2 sm:$0xff]
      %s1987 = scalar_lea.vmem [#allocation2], 32
      %v1988 = vld [vmem:[%s1987] ss:$2 sm:$0xff]
      %s1989 = scalar_lea.vmem [#allocation2], 48
      %v1990 = vld [vmem:[%s1989] ss:$2 sm:$0xff]
      %s1991 = scalar_lea.vmem [#allocation2], 64
      %v1992 = vld [vmem:[%s1991] ss:$2 sm:$0xff]
      %s1993 = scalar_lea.vmem [#allocation2], 80
      %v1994 = vld [vmem:[%s1993] ss:$2 sm:$0xff]
      %s1995 = scalar_lea.vmem [#allocation2], 96
      %v1996 = vld [vmem:[%s1995] ss:$2 sm:$0xff]
      %s1997 = scalar_lea.vmem [#allocation2], 112
      %v1998 = vld [vmem:[%s1997] ss:$2 sm:$0xff]
      %s1999 = scalar_lea.vmem [#allocation2], 128
      %v2000 = vld [vmem:[%s1999] ss:$2 sm:$0xff]
      %s2001 = scalar_lea.vmem [#allocation2], 144
      %v2002 = vld [vmem:[%s2001] ss:$2 sm:$0xff]
      %s2003 = scalar_lea.vmem [#allocation2], 160
      %v2004 = vld [vmem:[%s2003] ss:$2 sm:$0xff]
      %s2005 = scalar_lea.vmem [#allocation2], 176
      %v2006 = vld [vmem:[%s2005] ss:$2 sm:$0xff]
      %s2007 = scalar_lea.vmem [#allocation2], 192
      %v2008 = vld [vmem:[%s2007] ss:$2 sm:$0xff]
      %s2009 = scalar_lea.vmem [#allocation2], 208
      %v2010 = vld [vmem:[%s2009] ss:$2 sm:$0xff]
      %s2011 = scalar_lea.vmem [#allocation2], 224
      %v2012 = vld [vmem:[%s2011] ss:$2 sm:$0xff]
      %s2013 = scalar_lea.vmem [#allocation2], 240
      %v2014 = vld [vmem:[%s2013] ss:$2 sm:$0xff]
      %s2015 = scalar_lea.vmem [#allocation2], 1
      %v2016 = vld [vmem:[%s2015] ss:$2 sm:$0xff]
      %s2017 = scalar_lea.vmem [#allocation2], 17
      %v2018 = vld [vmem:[%s2017] ss:$2 sm:$0xff]
      %s2019 = scalar_lea.vmem [#allocation2], 33
      %v2020 = vld [vmem:[%s2019] ss:$2 sm:$0xff]
      %s2021 = scalar_lea.vmem [#allocation2], 49
      %v2022 = vld [vmem:[%s2021] ss:$2 sm:$0xff]
      %s2023 = scalar_lea.vmem [#allocation2], 65
      %v2024 = vld [vmem:[%s2023] ss:$2 sm:$0xff]
      %s2025 = scalar_lea.vmem [#allocation2], 81
      %v2026 = vld [vmem:[%s2025] ss:$2 sm:$0xff]
      %s2027 = scalar_lea.vmem [#allocation2], 97
      %v2028 = vld [vmem:[%s2027] ss:$2 sm:$0xff]
      %s2029 = scalar_lea.vmem [#allocation2], 113
      %v2030 = vld [vmem:[%s2029] ss:$2 sm:$0xff]
      %s2031 = scalar_lea.vmem [#allocation2], 129
      %v2032 = vld [vmem:[%s2031] ss:$2 sm:$0xff]
      %s2033 = scalar_lea.vmem [#allocation2], 145
      %v2034 = vld [vmem:[%s2033] ss:$2 sm:$0xff]
      %s2035 = scalar_lea.vmem [#allocation2], 161
      %v2036 = vld [vmem:[%s2035] ss:$2 sm:$0xff]
      %s2037 = scalar_lea.vmem [#allocation2], 177
      %v2038 = vld [vmem:[%s2037] ss:$2 sm:$0xff]
      %s2039 = scalar_lea.vmem [#allocation2], 193
      %v2040 = vld [vmem:[%s2039] ss:$2 sm:$0xff]
      %s2041 = scalar_lea.vmem [#allocation2], 209
      %v2042 = vld [vmem:[%s2041] ss:$2 sm:$0xff]
      %s2043 = scalar_lea.vmem [#allocation2], 225
      %v2044 = vld [vmem:[%s2043] ss:$2 sm:$0xff]
      %s2045 = scalar_lea.vmem [#allocation2], 241
      %v2046 = vld [vmem:[%s2045] ss:$2 sm:$0xff]
      %v2047 = vmax.f32 %v1984, %v2016
      %v2048 = vmax.f32 %v1986, %v2018
      %v2049 = vmax.f32 %v1988, %v2020
      %v2050 = vmax.f32 %v1990, %v2022
      %v2051 = vmax.f32 %v1992, %v2024
      %v2052 = vmax.f32 %v1994, %v2026
      %v2053 = vmax.f32 %v1996, %v2028
      %v2054 = vmax.f32 %v1998, %v2030
      %v2055 = vmax.f32 %v2000, %v2032
      %v2056 = vmax.f32 %v2002, %v2034
      %v2057 = vmax.f32 %v2004, %v2036
      %v2058 = vmax.f32 %v2006, %v2038
      %v2059 = vmax.f32 %v2008, %v2040
      %v2060 = vmax.f32 %v2010, %v2042
      %v2061 = vmax.f32 %v2012, %v2044
      %v2062 = vmax.f32 %v2014, %v2046
      %v2063 = vld [vmem:[%s3] sm:$0xff]
      %v2064 = vld [vmem:[%s3 + $0x8] sm:$0xff]
      %v2065 = vld [vmem:[%s3 + $0x10] sm:$0xff]
      %v2066 = vld [vmem:[%s3 + $0x18] sm:$0xff]
      %v2067 = vld [vmem:[%s3 + $0x20] sm:$0xff]
      %v2068 = vld [vmem:[%s3 + $0x28] sm:$0xff]
      %v2069 = vld [vmem:[%s3 + $0x30] sm:$0xff]
      %v2070 = vld [vmem:[%s3 + $0x38] sm:$0xff]
      %v2071 = vld [vmem:[%s3 + $0x40] sm:$0xff]
      %v2072 = vld [vmem:[%s3 + $0x48] sm:$0xff]
      %v2073 = vld [vmem:[%s3 + $0x50] sm:$0xff]
      %v2074 = vld [vmem:[%s3 + $0x58] sm:$0xff]
      %v2075 = vld [vmem:[%s3 + $0x60] sm:$0xff]
      %v2076 = vld [vmem:[%s3 + $0x68] sm:$0xff]
      %v2077 = vld [vmem:[%s3 + $0x70] sm:$0xff]
      %v2078 = vld [vmem:[%s3 + $0x78] sm:$0xff]
      %2079 = vmatprep.subr.mxu0 0.0
      %2080 = vmatpush1.msra.mxu0 %v2063
      %2081 = vmatprep.subr.mxu0 0.0
      %2082 = vmatpush1.msra.mxu0 %v2064
      %2083 = vmatprep.subr.mxu0 0.0
      %2084 = vmatpush1.msra.mxu0 %v2065
      %2085 = vmatprep.subr.mxu0 0.0
      %2086 = vmatpush1.msra.mxu0 %v2066
      %2087 = vmatprep.subr.mxu0 0.0
      %2088 = vmatpush1.msra.mxu0 %v2067
      %2089 = vmatprep.subr.mxu0 0.0
      %2090 = vmatpush1.msra.mxu0 %v2068
      %2091 = vmatprep.subr.mxu0 0.0
      %2092 = vmatpush1.msra.mxu0 %v2069
      %2093 = vmatprep.subr.mxu0 0.0
      %2094 = vmatpush1.msra.mxu0 %v2070
      %2095 = vmatprep.subr.mxu0 0.0
      %2096 = vmatpush1.msra.mxu0 %v2071
      %2097 = vmatprep.subr.mxu0 0.0
      %2098 = vmatpush1.msra.mxu0 %v2072
      %2099 = vmatprep.subr.mxu0 0.0
      %2100 = vmatpush1.msra.mxu0 %v2073
      %2101 = vmatprep.subr.mxu0 0.0
      %2102 = vmatpush1.msra.mxu0 %v2074
      %2103 = vmatprep.subr.mxu0 0.0
      %2104 = vmatpush1.msra.mxu0 %v2075
      %2105 = vmatprep.subr.mxu0 0.0
      %2106 = vmatpush1.msra.mxu0 %v2076
      %2107 = vmatprep.subr.mxu0 0.0
      %2108 = vmatpush1.msra.mxu0 %v2077
      %2109 = vmatprep.subr.mxu0 0.0
      %2110 = vmatpush1.msra.mxu0 %v2078
      %2111 = vmatprep.subr.mxu0 0.0
      %2112 = vmatpush1.msra.mxu0 0.0
      %2113 = vmatprep.subr.mxu0 0.0
      %2114 = vmatpush1.msra.mxu0 0.0
      %2115 = vmatprep.subr.mxu0 0.0
      %2116 = vmatpush1.msra.mxu0 0.0
      %2117 = vmatprep.subr.mxu0 0.0
      %2118 = vmatpush1.msra.mxu0 0.0
      %2119 = vmatprep.subr.mxu0 0.0
      %2120 = vmatpush1.msra.mxu0 0.0
      %2121 = vmatprep.subr.mxu0 0.0
      %2122 = vmatpush1.msra.mxu0 0.0
      %2123 = vmatprep.subr.mxu0 0.0
      %2124 = vmatpush1.msra.mxu0 0.0
      %2125 = vmatprep.subr.mxu0 0.0
      %2126 = vmatpush1.msra.mxu0 0.0
      %2127 = vmatprep.subr.mxu0 0.0
      %2128 = vmatpush1.msra.mxu0 0.0
      %2129 = vmatprep.subr.mxu0 0.0
      %2130 = vmatpush1.msra.mxu0 0.0
      %2131 = vmatprep.subr.mxu0 0.0
      %2132 = vmatpush1.msra.mxu0 0.0
      %2133 = vmatprep.subr.mxu0 0.0
      %2134 = vmatpush1.msra.mxu0 0.0
      %2135 = vmatprep.subr.mxu0 0.0
      %2136 = vmatpush1.msra.mxu0 0.0
      %2137 = vmatprep.subr.mxu0 0.0
      %2138 = vmatpush1.msra.mxu0 0.0
      %2139 = vmatprep.subr.mxu0 0.0
      %2140 = vmatpush1.msra.mxu0 0.0
      %2141 = vmatprep.subr.mxu0 0.0
      %2142 = vmatpush1.msra.mxu0 0.0
      %2143 = vmatprep.mubr.f32.mxu0 0.0
      %2144 = vmatmul.mubr.f32.gmra.mrb[0].mxu0 %v2047
      %v2145 = vpop.f32.mrb[0].mxu0
      %v2146 = vadd.f32 0.0, %v2145
      %v2147 = vpop.f32.mrb[0].mxu0
      %2148 = vmatprep.mubr.f32.mxu0 0.0
      %2149 = vmatmul.mubr.f32.gmra.mrb[0].mxu0 %v2048
      %v2150 = vpop.f32.mrb[0].mxu0
      %v2151 = vadd.f32 0.0, %v2150
      %v2152 = vpop.f32.mrb[0].mxu0
      %2153 = vmatprep.mubr.f32.mxu0 0.0
      %2154 = vmatmul.mubr.f32.gmra.mrb[0].mxu0 %v2049
      %v2155 = vpop.f32.mrb[0].mxu0
      %v2156 = vadd.f32 0.0, %v2155
      %v2157 = vpop.f32.mrb[0].mxu0
      %2158 = vmatprep.mubr.f32.mxu0 0.0
      %2159 = vmatmul.mubr.f32.gmra.mrb[0].mxu0 %v2050
      %v2160 = vpop.f32.mrb[0].mxu0
      %v2161 = vadd.f32 0.0, %v2160
      %v2162 = vpop.f32.mrb[0].mxu0
      %2163 = vmatprep.mubr.f32.mxu0 0.0
      %2164 = vmatmul.mubr.f32.gmra.mrb[0].mxu0 %v2051
      %v2165 = vpop.f32.mrb[0].mxu0
      %v2166 = vadd.f32 0.0, %v2165
      %v2167 = vpop.f32.mrb[0].mxu0
      %2168 = vmatprep.mubr.f32.mxu0 0.0
      %2169 = vmatmul.mubr.f32.gmra.mrb[0].mxu0 %v2052
      %v2170 = vpop.f32.mrb[0].mxu0
      %v2171 = vadd.f32 0.0, %v2170
      %v2172 = vpop.f32.mrb[0].mxu0
      %2173 = vmatprep.mubr.f32.mxu0 0.0
      %2174 = vmatmul.mubr.f32.gmra.mrb[0].mxu0 %v2053
      %v2175 = vpop.f32.mrb[0].mxu0
      %v2176 = vadd.f32 0.0, %v2175
      %v2177 = vpop.f32.mrb[0].mxu0
      %2178 = vmatprep.mubr.f32.mxu0 0.0
      %2179 = vmatmul.mubr.f32.gmra.mrb[0].mxu0 %v2054
      %v2180 = vpop.f32.mrb[0].mxu0
      %v2181 = vadd.f32 0.0, %v2180
      %v2182 = vpop.f32.mrb[0].mxu0
      %2183 = vmatprep.mubr.f32.mxu0 0.0
      %2184 = vmatmul.mubr.f32.gmra.mrb[0].mxu0 %v2055
      %v2185 = vpop.f32.mrb[0].mxu0
      %v2186 = vadd.f32 0.0, %v2185
      %v2187 = vpop.f32.mrb[0].mxu0
      %2188 = vmatprep.mubr.f32.mxu0 0.0
      %2189 = vmatmul.mubr.f32.gmra.mrb[0].mxu0 %v2056
      %v2190 = vpop.f32.mrb[0].mxu0
      %v2191 = vadd.f32 0.0, %v2190
      %v2192 = vpop.f32.mrb[0].mxu0
      %2193 = vmatprep.mubr.f32.mxu0 0.0
      %2194 = vmatmul.mubr.f32.gmra.mrb[0].mxu0 %v2057
      %v2195 = vpop.f32.mrb[0].mxu0
      %v2196 = vadd.f32 0.0, %v2195
      %v2197 = vpop.f32.mrb[0].mxu0
      %2198 = vmatprep.mubr.f32.mxu0 0.0
      %2199 = vmatmul.mubr.f32.gmra.mrb[0].mxu0 %v2058
      %v2200 = vpop.f32.mrb[0].mxu0
      %v2201 = vadd.f32 0.0, %v2200
      %v2202 = vpop.f32.mrb[0].mxu0
      %2203 = vmatprep.mubr.f32.mxu0 0.0
      %2204 = vmatmul.mubr.f32.gmra.mrb[0].mxu0 %v2059
      %v2205 = vpop.f32.mrb[0].mxu0
      %v2206 = vadd.f32 0.0, %v2205
      %v2207 = vpop.f32.mrb[0].mxu0
      %2208 = vmatprep.mubr.f32.mxu0 0.0
      %2209 = vmatmul.mubr.f32.gmra.mrb[0].mxu0 %v2060
      %v2210 = vpop.f32.mrb[0].mxu0
      %v2211 = vadd.f32 0.0, %v2210
      %v2212 = vpop.f32.mrb[0].mxu0
      %2213 = vmatprep.mubr.f32.mxu0 0.0
      %2214 = vmatmul.mubr.f32.gmra.mrb[0].mxu0 %v2061
      %v2215 = vpop.f32.mrb[0].mxu0
      %v2216 = vadd.f32 0.0, %v2215
      %v2217 = vpop.f32.mrb[0].mxu0
      %2218 = vmatprep.mubr.f32.mxu0 0.0
      %2219 = vmatmul.mubr.f32.gmra.mrb[0].mxu0 %v2062
      %v2220 = vpop.f32.mrb[0].mxu0
      %v2221 = vadd.f32 0.0, %v2220
      %v2222 = vpop.f32.mrb[0].mxu0
      %2223 = vdwg.mxu0
      %s2224 = scalar_lea.vmem %s3, 128
      %v2225 = vld [vmem:[%s2224] sm:$0xff]
      %v2226 = vld [vmem:[%s2224 + $0x8] sm:$0xff]
      %v2227 = vld [vmem:[%s2224 + $0x10] sm:$0xff]
      %v2228 = vld [vmem:[%s2224 + $0x18] sm:$0xff]
      %v2229 = vld [vmem:[%s2224 + $0x20] sm:$0xff]
      %v2230 = vld [vmem:[%s2224 + $0x28] sm:$0xff]
      %v2231 = vld [vmem:[%s2224 + $0x30] sm:$0xff]
      %v2232 = vld [vmem:[%s2224 + $0x38] sm:$0xff]
      %v2233 = vld [vmem:[%s2224 + $0x40] sm:$0xff]
      %v2234 = vld [vmem:[%s2224 + $0x48] sm:$0xff]
      %v2235 = vld [vmem:[%s2224 + $0x50] sm:$0xff]
      %v2236 = vld [vmem:[%s2224 + $0x58] sm:$0xff]
      %v2237 = vld [vmem:[%s2224 + $0x60] sm:$0xff]
      %v2238 = vld [vmem:[%s2224 + $0x68] sm:$0xff]
      %v2239 = vld [vmem:[%s2224 + $0x70] sm:$0xff]
      %v2240 = vld [vmem:[%s2224 + $0x78] sm:$0xff]
      %2241 = vmatprep.subr.mxu0 0.0
      %2242 = vmatpush1.msra.mxu0 %v2225
      %2243 = vmatprep.subr.mxu0 0.0
      %2244 = vmatpush1.msra.mxu0 %v2226
      %2245 = vmatprep.subr.mxu0 0.0
      %2246 = vmatpush1.msra.mxu0 %v2227
      %2247 = vmatprep.subr.mxu0 0.0
      %2248 = vmatpush1.msra.mxu0 %v2228
      %2249 = vmatprep.subr.mxu0 0.0
      %2250 = vmatpush1.msra.mxu0 %v2229
      %2251 = vmatprep.subr.mxu0 0.0
      %2252 = vmatpush1.msra.mxu0 %v2230
      %2253 = vmatprep.subr.mxu0 0.0
      %2254 = vmatpush1.msra.mxu0 %v2231
      %2255 = vmatprep.subr.mxu0 0.0
      %2256 = vmatpush1.msra.mxu0 %v2232
      %2257 = vmatprep.subr.mxu0 0.0
      %2258 = vmatpush1.msra.mxu0 %v2233
      %2259 = vmatprep.subr.mxu0 0.0
      %2260 = vmatpush1.msra.mxu0 %v2234
      %2261 = vmatprep.subr.mxu0 0.0
      %2262 = vmatpush1.msra.mxu0 %v2235
      %2263 = vmatprep.subr.mxu0 0.0
      %2264 = vmatpush1.msra.mxu0 %v2236
      %2265 = vmatprep.subr.mxu0 0.0
      %2266 = vmatpush1.msra.mxu0 %v2237
      %2267 = vmatprep.subr.mxu0 0.0
      %2268 = vmatpush1.msra.mxu0 %v2238
      %2269 = vmatprep.subr.mxu0 0.0
      %2270 = vmatpush1.msra.mxu0 %v2239
      %2271 = vmatprep.subr.mxu0 0.0
      %2272 = vmatpush1.msra.mxu0 %v2240
      %2273 = vmatprep.subr.mxu0 0.0
      %2274 = vmatpush1.msra.mxu0 0.0
      %2275 = vmatprep.subr.mxu0 0.0
      %2276 = vmatpush1.msra.mxu0 0.0
      %2277 = vmatprep.subr.mxu0 0.0
      %2278 = vmatpush1.msra.mxu0 0.0
      %2279 = vmatprep.subr.mxu0 0.0
      %2280 = vmatpush1.msra.mxu0 0.0
      %2281 = vmatprep.subr.mxu0 0.0
      %2282 = vmatpush1.msra.mxu0 0.0
      %2283 = vmatprep.subr.mxu0 0.0
      %2284 = vmatpush1.msra.mxu0 0.0
      %2285 = vmatprep.subr.mxu0 0.0
      %2286 = vmatpush1.msra.mxu0 0.0
      %2287 = vmatprep.subr.mxu0 0.0
      %2288 = vmatpush1.msra.mxu0 0.0
      %2289 = vmatprep.subr.mxu0 0.0
      %2290 = vmatpush1.msra.mxu0 0.0
      %2291 = vmatprep.subr.mxu0 0.0
      %2292 = vmatpush1.msra.mxu0 0.0
      %2293 = vmatprep.subr.mxu0 0.0
      %2294 = vmatpush1.msra.mxu0 0.0
      %2295 = vmatprep.subr.mxu0 0.0
      %2296 = vmatpush1.msra.mxu0 0.0
      %2297 = vmatprep.subr.mxu0 0.0
      %2298 = vmatpush1.msra.mxu0 0.0
      %2299 = vmatprep.subr.mxu0 0.0
      %2300 = vmatpush1.msra.mxu0 0.0
      %2301 = vmatprep.subr.mxu0 0.0
      %2302 = vmatpush1.msra.mxu0 0.0
      %2303 = vmatprep.subr.mxu0 0.0
      %2304 = vmatpush1.msra.mxu0 0.0
      %2305 = vmatprep.mubr.f32.mxu0 0.0
      %2306 = vmatmul.mubr.f32.gmra.mrb[0].mxu0 %v2047
      %v2307 = vpop.f32.mrb[0].mxu0
      %v2308 = vadd.f32 0.0, %v2307
      %v2309 = vpop.f32.mrb[0].mxu0
      %2310 = vmatprep.mubr.f32.mxu0 0.0
      %2311 = vmatmul.mubr.f32.gmra.mrb[0].mxu0 %v2048
      %v2312 = vpop.f32.mrb[0].mxu0
      %v2313 = vadd.f32 0.0, %v2312
      %v2314 = vpop.f32.mrb[0].mxu0
      %2315 = vmatprep.mubr.f32.mxu0 0.0
      %2316 = vmatmul.mubr.f32.gmra.mrb[0].mxu0 %v2049
      %v2317 = vpop.f32.mrb[0].mxu0
      %v2318 = vadd.f32 0.0, %v2317
      %v2319 = vpop.f32.mrb[0].mxu0
      %2320 = vmatprep.mubr.f32.mxu0 0.0
      %2321 = vmatmul.mubr.f32.gmra.mrb[0].mxu0 %v2050
      %v2322 = vpop.f32.mrb[0].mxu0
      %v2323 = vadd.f32 0.0, %v2322
      %v2324 = vpop.f32.mrb[0].mxu0
      %2325 = vmatprep.mubr.f32.mxu0 0.0
      %2326 = vmatmul.mubr.f32.gmra.mrb[0].mxu0 %v2051
      %v2327 = vpop.f32.mrb[0].mxu0
      %v2328 = vadd.f32 0.0, %v2327
      %v2329 = vpop.f32.mrb[0].mxu0
      %2330 = vmatprep.mubr.f32.mxu0 0.0
      %2331 = vmatmul.mubr.f32.gmra.mrb[0].mxu0 %v2052
      %v2332 = vpop.f32.mrb[0].mxu0
      %v2333 = vadd.f32 0.0, %v2332
      %v2334 = vpop.f32.mrb[0].mxu0
      %2335 = vmatprep.mubr.f32.mxu0 0.0
      %2336 = vmatmul.mubr.f32.gmra.mrb[0].mxu0 %v2053
      %v2337 = vpop.f32.mrb[0].mxu0
      %v2338 = vadd.f32 0.0, %v2337
      %v2339 = vpop.f32.mrb[0].mxu0
      %2340 = vmatprep.mubr.f32.mxu0 0.0
      %2341 = vmatmul.mubr.f32.gmra.mrb[0].mxu0 %v2054
      %v2342 = vpop.f32.mrb[0].mxu0
      %v2343 = vadd.f32 0.0, %v2342
      %v2344 = vpop.f32.mrb[0].mxu0
      %2345 = vmatprep.mubr.f32.mxu0 0.0
      %2346 = vmatmul.mubr.f32.gmra.mrb[0].mxu0 %v2055
      %v2347 = vpop.f32.mrb[0].mxu0
      %v2348 = vadd.f32 0.0, %v2347
      %v2349 = vpop.f32.mrb[0].mxu0
      %2350 = vmatprep.mubr.f32.mxu0 0.0
      %2351 = vmatmul.mubr.f32.gmra.mrb[0].mxu0 %v2056
      %v2352 = vpop.f32.mrb[0].mxu0
      %v2353 = vadd.f32 0.0, %v2352
      %v2354 = vpop.f32.mrb[0].mxu0
      %2355 = vmatprep.mubr.f32.mxu0 0.0
      %2356 = vmatmul.mubr.f32.gmra.mrb[0].mxu0 %v2057
      %v2357 = vpop.f32.mrb[0].mxu0
      %v2358 = vadd.f32 0.0, %v2357
      %v2359 = vpop.f32.mrb[0].mxu0
      %2360 = vmatprep.mubr.f32.mxu0 0.0
      %2361 = vmatmul.mubr.f32.gmra.mrb[0].mxu0 %v2058
      %v2362 = vpop.f32.mrb[0].mxu0
      %v2363 = vadd.f32 0.0, %v2362
      %v2364 = vpop.f32.mrb[0].mxu0
      %2365 = vmatprep.mubr.f32.mxu0 0.0
      %2366 = vmatmul.mubr.f32.gmra.mrb[0].mxu0 %v2059
      %v2367 = vpop.f32.mrb[0].mxu0
      %v2368 = vadd.f32 0.0, %v2367
      %v2369 = vpop.f32.mrb[0].mxu0
      %2370 = vmatprep.mubr.f32.mxu0 0.0
      %2371 = vmatmul.mubr.f32.gmra.mrb[0].mxu0 %v2060
      %v2372 = vpop.f32.mrb[0].mxu0
      %v2373 = vadd.f32 0.0, %v2372
      %v2374 = vpop.f32.mrb[0].mxu0
      %2375 = vmatprep.mubr.f32.mxu0 0.0
      %2376 = vmatmul.mubr.f32.gmra.mrb[0].mxu0 %v2061
      %v2377 = vpop.f32.mrb[0].mxu0
      %v2378 = vadd.f32 0.0, %v2377
      %v2379 = vpop.f32.mrb[0].mxu0
      %2380 = vmatprep.mubr.f32.mxu0 0.0
      %2381 = vmatmul.mubr.f32.gmra.mrb[0].mxu0 %v2062
      %v2382 = vpop.f32.mrb[0].mxu0
      %v2383 = vadd.f32 0.0, %v2382
      %v2384 = vpop.f32.mrb[0].mxu0
      %2385 = vdwg.mxu0
      %v2386 = vmax.f32 %v2146, %v2308
      %v2387 = vmax.f32 %v2151, %v2313
      %v2388 = vmax.f32 %v2156, %v2318
      %v2389 = vmax.f32 %v2161, %v2323
      %v2390 = vmax.f32 %v2166, %v2328
      %v2391 = vmax.f32 %v2171, %v2333
      %v2392 = vmax.f32 %v2176, %v2338
      %v2393 = vmax.f32 %v2181, %v2343
      %v2394 = vmax.f32 %v2186, %v2348
      %v2395 = vmax.f32 %v2191, %v2353
      %v2396 = vmax.f32 %v2196, %v2358
      %v2397 = vmax.f32 %v2201, %v2363
      %v2398 = vmax.f32 %v2206, %v2368
      %v2399 = vmax.f32 %v2211, %v2373
      %v2400 = vmax.f32 %v2216, %v2378
      %v2401 = vmax.f32 %v2221, %v2383
      %v2403 = vrot.slane %v2401, 7
      %v2420 = vrot.slane %v2386, 7
      %v2421 = vrot.slane %v2387, 7
      %v2422 = vsel %vm510, %v2420, %v2421
      %v2423 = vrot.slane %v2388, 7
      %v2424 = vsel %vm510, %v2421, %v2423
      %v2425 = vrot.slane %v2389, 7
      %v2426 = vsel %vm510, %v2423, %v2425
      %v2427 = vrot.slane %v2390, 7
      %v2428 = vsel %vm510, %v2425, %v2427
      %v2429 = vrot.slane %v2391, 7
      %v2430 = vsel %vm510, %v2427, %v2429
      %v2431 = vrot.slane %v2392, 7
      %v2432 = vsel %vm510, %v2429, %v2431
      %v2433 = vrot.slane %v2393, 7
      %v2434 = vsel %vm510, %v2431, %v2433
      %v2435 = vrot.slane %v2394, 7
      %v2436 = vsel %vm510, %v2433, %v2435
      %v2437 = vrot.slane %v2395, 7
      %v2438 = vsel %vm510, %v2435, %v2437
      %v2439 = vrot.slane %v2396, 7
      %v2440 = vsel %vm510, %v2437, %v2439
      %v2441 = vrot.slane %v2397, 7
      %v2442 = vsel %vm510, %v2439, %v2441
      %v2443 = vrot.slane %v2398, 7
      %v2444 = vsel %vm510, %v2441, %v2443
      %v2445 = vrot.slane %v2399, 7
      %v2446 = vsel %vm510, %v2443, %v2445
      %v2447 = vrot.slane %v2400, 7
      %v2448 = vsel %vm510, %v2445, %v2447
      %v2449 = vsel %vm510, %v2447, %v2403
      %v2466 = vsel %vm510, %v2403, %v2420
      %v2467 = vand.u32 %v607, 7
      %v2468 = vand.u32 %v608, 7
      %v2469 = vand.u32 %v609, 7
      %v2470 = vand.u32 %v610, 7
      %v2471 = vand.u32 %v611, 7
      %v2472 = vand.u32 %v612, 7
      %v2473 = vand.u32 %v613, 7
      %v2474 = vand.u32 %v614, 7
      %v2475 = vand.u32 %v615, 7
      %v2476 = vand.u32 %v616, 7
      %v2477 = vand.u32 %v617, 7
      %v2478 = vand.u32 %v618, 7
      %v2479 = vand.u32 %v619, 7
      %v2480 = vand.u32 %v620, 7
      %v2481 = vand.u32 %v621, 7
      %v2482 = vand.u32 %v622, 7
      %vm2483 = vcmp.ge.s32.totalorder %v2467, 1
      %vm2484 = vcmp.ge.s32.totalorder %v2468, 1
      %vm2485 = vcmp.ge.s32.totalorder %v2469, 1
      %vm2486 = vcmp.ge.s32.totalorder %v2470, 1
      %vm2487 = vcmp.ge.s32.totalorder %v2471, 1
      %vm2488 = vcmp.ge.s32.totalorder %v2472, 1
      %vm2489 = vcmp.ge.s32.totalorder %v2473, 1
      %vm2490 = vcmp.ge.s32.totalorder %v2474, 1
      %vm2491 = vcmp.ge.s32.totalorder %v2475, 1
      %vm2492 = vcmp.ge.s32.totalorder %v2476, 1
      %vm2493 = vcmp.ge.s32.totalorder %v2477, 1
      %vm2494 = vcmp.ge.s32.totalorder %v2478, 1
      %vm2495 = vcmp.ge.s32.totalorder %v2479, 1
      %vm2496 = vcmp.ge.s32.totalorder %v2480, 1
      %vm2497 = vcmp.ge.s32.totalorder %v2481, 1
      %vm2498 = vcmp.ge.s32.totalorder %v2482, 1
      %v2499 = vsel %vm2483, %v2466, 0.0
      %v2500 = vsel %vm2484, %v2422, 0.0
      %v2501 = vsel %vm2485, %v2424, 0.0
      %v2502 = vsel %vm2486, %v2426, 0.0
      %v2503 = vsel %vm2487, %v2428, 0.0
      %v2504 = vsel %vm2488, %v2430, 0.0
      %v2505 = vsel %vm2489, %v2432, 0.0
      %v2506 = vsel %vm2490, %v2434, 0.0
      %v2507 = vsel %vm2491, %v2436, 0.0
      %v2508 = vsel %vm2492, %v2438, 0.0
      %v2509 = vsel %vm2493, %v2440, 0.0
      %v2510 = vsel %vm2494, %v2442, 0.0
      %v2511 = vsel %vm2495, %v2444, 0.0
      %v2512 = vsel %vm2496, %v2446, 0.0
      %v2513 = vsel %vm2497, %v2448, 0.0
      %v2514 = vsel %vm2498, %v2449, 0.0
      %v2515 = vld [vmem:[%s4] sm:$0xff]
      %v2516 = vld [vmem:[%s4 + $0x8] sm:$0xff]
      %v2517 = vld [vmem:[%s4 + $0x10] sm:$0xff]
      %v2518 = vld [vmem:[%s4 + $0x18] sm:$0xff]
      %v2519 = vld [vmem:[%s4 + $0x20] sm:$0xff]
      %v2520 = vld [vmem:[%s4 + $0x28] sm:$0xff]
      %v2521 = vld [vmem:[%s4 + $0x30] sm:$0xff]
      %v2522 = vld [vmem:[%s4 + $0x38] sm:$0xff]
      %s2523 = scalar_lea.vmem %s4, 64
      %v2524 = vld [vmem:[%s2523] sm:$0xff]
      %v2525 = vld [vmem:[%s2523 + $0x8] sm:$0xff]
      %v2526 = vld [vmem:[%s2523 + $0x10] sm:$0xff]
      %v2527 = vld [vmem:[%s2523 + $0x18] sm:$0xff]
      %v2528 = vld [vmem:[%s2523 + $0x20] sm:$0xff]
      %v2529 = vld [vmem:[%s2523 + $0x28] sm:$0xff]
      %v2530 = vld [vmem:[%s2523 + $0x30] sm:$0xff]
      %v2531 = vld [vmem:[%s2523 + $0x38] sm:$0xff]
      %vm2532 = vcmask 523264
      %v2533 = vsel %vm2532, %v2386, 0
      %v2535 = vsel %vm2532, %v2387, 0
      %v2537 = vsel %vm2532, %v2388, 0
      %v2539 = vsel %vm2532, %v2389, 0
      %v2541 = vsel %vm2532, %v2390, 0
      %v2543 = vsel %vm2532, %v2391, 0
      %v2545 = vsel %vm2532, %v2392, 0
      %v2547 = vsel %vm2532, %v2393, 0
      %v2549 = vsel %vm2532, %v2394, 0
      %v2551 = vsel %vm2532, %v2395, 0
      %v2553 = vsel %vm2532, %v2396, 0
      %v2555 = vsel %vm2532, %v2397, 0
      %v2557 = vsel %vm2532, %v2398, 0
      %v2559 = vsel %vm2532, %v2399, 0
      %v2561 = vsel %vm2532, %v2400, 0
      %v2563 = vsel %vm2532, %v2401, 0
      %2565 = vmatprep.subr.mxu0 0.0
      %2566 = vmatpush1.msra.mxu0 %v2524
      %2567 = vmatprep.subr.mxu0 0.0
      %2568 = vmatpush1.msra.mxu0 %v2525
      %2569 = vmatprep.subr.mxu0 0.0
      %2570 = vmatpush1.msra.mxu0 %v2526
      %2571 = vmatprep.subr.mxu0 0.0
      %2572 = vmatpush1.msra.mxu0 %v2527
      %2573 = vmatprep.subr.mxu0 0.0
      %2574 = vmatpush1.msra.mxu0 %v2528
      %2575 = vmatprep.subr.mxu0 0.0
      %2576 = vmatpush1.msra.mxu0 %v2529
      %2577 = vmatprep.subr.mxu0 0.0
      %2578 = vmatpush1.msra.mxu0 %v2530
      %2579 = vmatprep.subr.mxu0 0.0
      %2580 = vmatpush1.msra.mxu0 %v2531
      %2581 = vmatprep.subr.mxu0 0.0
      %2582 = vmatpush1.msra.mxu0 0.0
      %2583 = vmatprep.subr.mxu0 0.0
      %2584 = vmatpush1.msra.mxu0 0.0
      %2585 = vmatprep.subr.mxu0 0.0
      %2586 = vmatpush1.msra.mxu0 0.0
      %2587 = vmatprep.subr.mxu0 0.0
      %2588 = vmatpush1.msra.mxu0 0.0
      %2589 = vmatprep.subr.mxu0 0.0
      %2590 = vmatpush1.msra.mxu0 0.0
      %2591 = vmatprep.subr.mxu0 0.0
      %2592 = vmatpush1.msra.mxu0 0.0
      %2593 = vmatprep.subr.mxu0 0.0
      %2594 = vmatpush1.msra.mxu0 0.0
      %2595 = vmatprep.subr.mxu0 0.0
      %2596 = vmatpush1.msra.mxu0 0.0
      %2597 = vmatprep.subr.mxu0 0.0
      %2598 = vmatpush1.msra.mxu0 0.0
      %2599 = vmatprep.subr.mxu0 0.0
      %2600 = vmatpush1.msra.mxu0 0.0
      %2601 = vmatprep.subr.mxu0 0.0
      %2602 = vmatpush1.msra.mxu0 0.0
      %2603 = vmatprep.subr.mxu0 0.0
      %2604 = vmatpush1.msra.mxu0 0.0
      %2605 = vmatprep.subr.mxu0 0.0
      %2606 = vmatpush1.msra.mxu0 0.0
      %2607 = vmatprep.subr.mxu0 0.0
      %2608 = vmatpush1.msra.mxu0 0.0
      %2609 = vmatprep.subr.mxu0 0.0
      %2610 = vmatpush1.msra.mxu0 0.0
      %2611 = vmatprep.subr.mxu0 0.0
      %2612 = vmatpush1.msra.mxu0 0.0
      %2613 = vmatprep.subr.mxu0 0.0
      %2614 = vmatpush1.msra.mxu0 0.0
      %2615 = vmatprep.subr.mxu0 0.0
      %2616 = vmatpush1.msra.mxu0 0.0
      %2617 = vmatprep.subr.mxu0 0.0
      %2618 = vmatpush1.msra.mxu0 0.0
      %2619 = vmatprep.subr.mxu0 0.0
      %2620 = vmatpush1.msra.mxu0 0.0
      %2621 = vmatprep.subr.mxu0 0.0
      %2622 = vmatpush1.msra.mxu0 0.0
      %2623 = vmatprep.subr.mxu0 0.0
      %2624 = vmatpush1.msra.mxu0 0.0
      %2625 = vmatprep.subr.mxu0 0.0
      %2626 = vmatpush1.msra.mxu0 0.0
      %2627 = vmatprep.subr.mxu0 0.0
      %2628 = vmatpush1.msra.mxu0 0.0
      %2629 = vmatprep.mubr.f32.mxu0 0.0
      %2630 = vmatmul.mubr.f32.gmra.mrb[0].mxu0 %v2533
      %v2631 = vpop.f32.mrb[0].mxu0
      %v2632 = vadd.f32 0.0, %v2631
      %v2633 = vpop.f32.mrb[0].mxu0
      %2634 = vmatprep.mubr.f32.mxu0 0.0
      %2635 = vmatmul.mubr.f32.gmra.mrb[0].mxu0 %v2535
      %v2636 = vpop.f32.mrb[0].mxu0
      %v2637 = vadd.f32 0.0, %v2636
      %v2638 = vpop.f32.mrb[0].mxu0
      %2639 = vmatprep.mubr.f32.mxu0 0.0
      %2640 = vmatmul.mubr.f32.gmra.mrb[0].mxu0 %v2537
      %v2641 = vpop.f32.mrb[0].mxu0
      %v2642 = vadd.f32 0.0, %v2641
      %v2643 = vpop.f32.mrb[0].mxu0
      %2644 = vmatprep.mubr.f32.mxu0 0.0
      %2645 = vmatmul.mubr.f32.gmra.mrb[0].mxu0 %v2539
      %v2646 = vpop.f32.mrb[0].mxu0
      %v2647 = vadd.f32 0.0, %v2646
      %v2648 = vpop.f32.mrb[0].mxu0
      %2649 = vmatprep.mubr.f32.mxu0 0.0
      %2650 = vmatmul.mubr.f32.gmra.mrb[0].mxu0 %v2541
      %v2651 = vpop.f32.mrb[0].mxu0
      %v2652 = vadd.f32 0.0, %v2651
      %v2653 = vpop.f32.mrb[0].mxu0
      %2654 = vmatprep.mubr.f32.mxu0 0.0
      %2655 = vmatmul.mubr.f32.gmra.mrb[0].mxu0 %v2543
      %v2656 = vpop.f32.mrb[0].mxu0
      %v2657 = vadd.f32 0.0, %v2656
      %v2658 = vpop.f32.mrb[0].mxu0
      %2659 = vmatprep.mubr.f32.mxu0 0.0
      %2660 = vmatmul.mubr.f32.gmra.mrb[0].mxu0 %v2545
      %v2661 = vpop.f32.mrb[0].mxu0
      %v2662 = vadd.f32 0.0, %v2661
      %v2663 = vpop.f32.mrb[0].mxu0
      %2664 = vmatprep.mubr.f32.mxu0 0.0
      %2665 = vmatmul.mubr.f32.gmra.mrb[0].mxu0 %v2547
      %v2666 = vpop.f32.mrb[0].mxu0
      %v2667 = vadd.f32 0.0, %v2666
      %v2668 = vpop.f32.mrb[0].mxu0
      %2669 = vmatprep.mubr.f32.mxu0 0.0
      %2670 = vmatmul.mubr.f32.gmra.mrb[0].mxu0 %v2549
      %v2671 = vpop.f32.mrb[0].mxu0
      %v2672 = vadd.f32 0.0, %v2671
      %v2673 = vpop.f32.mrb[0].mxu0
      %2674 = vmatprep.mubr.f32.mxu0 0.0
      %2675 = vmatmul.mubr.f32.gmra.mrb[0].mxu0 %v2551
      %v2676 = vpop.f32.mrb[0].mxu0
      %v2677 = vadd.f32 0.0, %v2676
      %v2678 = vpop.f32.mrb[0].mxu0
      %2679 = vmatprep.mubr.f32.mxu0 0.0
      %2680 = vmatmul.mubr.f32.gmra.mrb[0].mxu0 %v2553
      %v2681 = vpop.f32.mrb[0].mxu0
      %v2682 = vadd.f32 0.0, %v2681
      %v2683 = vpop.f32.mrb[0].mxu0
      %2684 = vmatprep.mubr.f32.mxu0 0.0
      %2685 = vmatmul.mubr.f32.gmra.mrb[0].mxu0 %v2555
      %v2686 = vpop.f32.mrb[0].mxu0
      %v2687 = vadd.f32 0.0, %v2686
      %v2688 = vpop.f32.mrb[0].mxu0
      %2689 = vmatprep.mubr.f32.mxu0 0.0
      %2690 = vmatmul.mubr.f32.gmra.mrb[0].mxu0 %v2557
      %v2691 = vpop.f32.mrb[0].mxu0
      %v2692 = vadd.f32 0.0, %v2691
      %v2693 = vpop.f32.mrb[0].mxu0
      %2694 = vmatprep.mubr.f32.mxu0 0.0
      %2695 = vmatmul.mubr.f32.gmra.mrb[0].mxu0 %v2559
      %v2696 = vpop.f32.mrb[0].mxu0
      %v2697 = vadd.f32 0.0, %v2696
      %v2698 = vpop.f32.mrb[0].mxu0
      %2699 = vmatprep.mubr.f32.mxu0 0.0
      %2700 = vmatmul.mubr.f32.gmra.mrb[0].mxu0 %v2561
      %v2701 = vpop.f32.mrb[0].mxu0
      %v2702 = vadd.f32 0.0, %v2701
      %v2703 = vpop.f32.mrb[0].mxu0
      %2704 = vmatprep.mubr.f32.mxu0 0.0
      %2705 = vmatmul.mubr.f32.gmra.mrb[0].mxu0 %v2563
      %v2706 = vpop.f32.mrb[0].mxu0
      %v2707 = vadd.f32 0.0, %v2706
      %v2708 = vpop.f32.mrb[0].mxu0
      %2709 = vdwg.mxu0
      %v2711 = vsel %vm2532, %v2499, 0
      %v2714 = vsel %vm2532, %v2500, 0
      %v2717 = vsel %vm2532, %v2501, 0
      %v2720 = vsel %vm2532, %v2502, 0
      %v2723 = vsel %vm2532, %v2503, 0
      %v2726 = vsel %vm2532, %v2504, 0
      %v2729 = vsel %vm2532, %v2505, 0
      %v2732 = vsel %vm2532, %v2506, 0
      %v2735 = vsel %vm2532, %v2507, 0
      %v2738 = vsel %vm2532, %v2508, 0
      %v2741 = vsel %vm2532, %v2509, 0
      %v2744 = vsel %vm2532, %v2510, 0
      %v2747 = vsel %vm2532, %v2511, 0
      %v2750 = vsel %vm2532, %v2512, 0
      %v2753 = vsel %vm2532, %v2513, 0
      %v2756 = vsel %vm2532, %v2514, 0
      %2758 = vmatprep.subr.mxu0 0.0
      %2759 = vmatpush1.msra.mxu0 %v2515
      %2760 = vmatprep.subr.mxu0 0.0
      %2761 = vmatpush1.msra.mxu0 %v2516
      %2762 = vmatprep.subr.mxu0 0.0
      %2763 = vmatpush1.msra.mxu0 %v2517
      %2764 = vmatprep.subr.mxu0 0.0
      %2765 = vmatpush1.msra.mxu0 %v2518
      %2766 = vmatprep.subr.mxu0 0.0
      %2767 = vmatpush1.msra.mxu0 %v2519
      %2768 = vmatprep.subr.mxu0 0.0
      %2769 = vmatpush1.msra.mxu0 %v2520
      %2770 = vmatprep.subr.mxu0 0.0
      %2771 = vmatpush1.msra.mxu0 %v2521
      %2772 = vmatprep.subr.mxu0 0.0
      %2773 = vmatpush1.msra.mxu0 %v2522
      %2774 = vmatprep.subr.mxu0 0.0
      %2775 = vmatpush1.msra.mxu0 0.0
      %2776 = vmatprep.subr.mxu0 0.0
      %2777 = vmatpush1.msra.mxu0 0.0
      %2778 = vmatprep.subr.mxu0 0.0
      %2779 = vmatpush1.msra.mxu0 0.0
      %2780 = vmatprep.subr.mxu0 0.0
      %2781 = vmatpush1.msra.mxu0 0.0
      %2782 = vmatprep.subr.mxu0 0.0
      %2783 = vmatpush1.msra.mxu0 0.0
      %2784 = vmatprep.subr.mxu0 0.0
      %2785 = vmatpush1.msra.mxu0 0.0
      %2786 = vmatprep.subr.mxu0 0.0
      %2787 = vmatpush1.msra.mxu0 0.0
      %2788 = vmatprep.subr.mxu0 0.0
      %2789 = vmatpush1.msra.mxu0 0.0
      %2790 = vmatprep.subr.mxu0 0.0
      %2791 = vmatpush1.msra.mxu0 0.0
      %2792 = vmatprep.subr.mxu0 0.0
      %2793 = vmatpush1.msra.mxu0 0.0
      %2794 = vmatprep.subr.mxu0 0.0
      %2795 = vmatpush1.msra.mxu0 0.0
      %2796 = vmatprep.subr.mxu0 0.0
      %2797 = vmatpush1.msra.mxu0 0.0
      %2798 = vmatprep.subr.mxu0 0.0
      %2799 = vmatpush1.msra.mxu0 0.0
      %2800 = vmatprep.subr.mxu0 0.0
      %2801 = vmatpush1.msra.mxu0 0.0
      %2802 = vmatprep.subr.mxu0 0.0
      %2803 = vmatpush1.msra.mxu0 0.0
      %2804 = vmatprep.subr.mxu0 0.0
      %2805 = vmatpush1.msra.mxu0 0.0
      %2806 = vmatprep.subr.mxu0 0.0
      %2807 = vmatpush1.msra.mxu0 0.0
      %2808 = vmatprep.subr.mxu0 0.0
      %2809 = vmatpush1.msra.mxu0 0.0
      %2810 = vmatprep.subr.mxu0 0.0
      %2811 = vmatpush1.msra.mxu0 0.0
      %2812 = vmatprep.subr.mxu0 0.0
      %2813 = vmatpush1.msra.mxu0 0.0
      %2814 = vmatprep.subr.mxu0 0.0
      %2815 = vmatpush1.msra.mxu0 0.0
      %2816 = vmatprep.subr.mxu0 0.0
      %2817 = vmatpush1.msra.mxu0 0.0
      %2818 = vmatprep.subr.mxu0 0.0
      %2819 = vmatpush1.msra.mxu0 0.0
      %2820 = vmatprep.subr.mxu0 0.0
      %2821 = vmatpush1.msra.mxu0 0.0
      %2822 = vmatprep.mubr.f32.mxu0 0.0
      %2823 = vmatmul.mubr.f32.gmra.mrb[0].mxu0 %v2711
      %v2824 = vpop.f32.mrb[0].mxu0
      %v2825 = vadd.f32 %v2632, %v2824
      %v2826 = vpop.f32.mrb[0].mxu0
      %2827 = vmatprep.mubr.f32.mxu0 0.0
      %2828 = vmatmul.mubr.f32.gmra.mrb[0].mxu0 %v2714
      %v2829 = vpop.f32.mrb[0].mxu0
      %v2830 = vadd.f32 %v2637, %v2829
      %v2831 = vpop.f32.mrb[0].mxu0
      %2832 = vmatprep.mubr.f32.mxu0 0.0
      %2833 = vmatmul.mubr.f32.gmra.mrb[0].mxu0 %v2717
      %v2834 = vpop.f32.mrb[0].mxu0
      %v2835 = vadd.f32 %v2642, %v2834
      %v2836 = vpop.f32.mrb[0].mxu0
      %2837 = vmatprep.mubr.f32.mxu0 0.0
      %2838 = vmatmul.mubr.f32.gmra.mrb[0].mxu0 %v2720
      %v2839 = vpop.f32.mrb[0].mxu0
      %v2840 = vadd.f32 %v2647, %v2839
      %v2841 = vpop.f32.mrb[0].mxu0
      %2842 = vmatprep.mubr.f32.mxu0 0.0
      %2843 = vmatmul.mubr.f32.gmra.mrb[0].mxu0 %v2723
      %v2844 = vpop.f32.mrb[0].mxu0
      %v2845 = vadd.f32 %v2652, %v2844
      %v2846 = vpop.f32.mrb[0].mxu0
      %2847 = vmatprep.mubr.f32.mxu0 0.0
      %2848 = vmatmul.mubr.f32.gmra.mrb[0].mxu0 %v2726
      %v2849 = vpop.f32.mrb[0].mxu0
      %v2850 = vadd.f32 %v2657, %v2849
      %v2851 = vpop.f32.mrb[0].mxu0
      %2852 = vmatprep.mubr.f32.mxu0 0.0
      %2853 = vmatmul.mubr.f32.gmra.mrb[0].mxu0 %v2729
      %v2854 = vpop.f32.mrb[0].mxu0
      %v2855 = vadd.f32 %v2662, %v2854
      %v2856 = vpop.f32.mrb[0].mxu0
      %2857 = vmatprep.mubr.f32.mxu0 0.0
      %2858 = vmatmul.mubr.f32.gmra.mrb[0].mxu0 %v2732
      %v2859 = vpop.f32.mrb[0].mxu0
      %v2860 = vadd.f32 %v2667, %v2859
      %v2861 = vpop.f32.mrb[0].mxu0
      %2862 = vmatprep.mubr.f32.mxu0 0.0
      %2863 = vmatmul.mubr.f32.gmra.mrb[0].mxu0 %v2735
      %v2864 = vpop.f32.mrb[0].mxu0
      %v2865 = vadd.f32 %v2672, %v2864
      %v2866 = vpop.f32.mrb[0].mxu0
      %2867 = vmatprep.mubr.f32.mxu0 0.0
      %2868 = vmatmul.mubr.f32.gmra.mrb[0].mxu0 %v2738
      %v2869 = vpop.f32.mrb[0].mxu0
      %v2870 = vadd.f32 %v2677, %v2869
      %v2871 = vpop.f32.mrb[0].mxu0
      %2872 = vmatprep.mubr.f32.mxu0 0.0
      %2873 = vmatmul.mubr.f32.gmra.mrb[0].mxu0 %v2741
      %v2874 = vpop.f32.mrb[0].mxu0
      %v2875 = vadd.f32 %v2682, %v2874
      %v2876 = vpop.f32.mrb[0].mxu0
      %2877 = vmatprep.mubr.f32.mxu0 0.0
      %2878 = vmatmul.mubr.f32.gmra.mrb[0].mxu0 %v2744
      %v2879 = vpop.f32.mrb[0].mxu0
      %v2880 = vadd.f32 %v2687, %v2879
      %v2881 = vpop.f32.mrb[0].mxu0
      %2882 = vmatprep.mubr.f32.mxu0 0.0
      %2883 = vmatmul.mubr.f32.gmra.mrb[0].mxu0 %v2747
      %v2884 = vpop.f32.mrb[0].mxu0
      %v2885 = vadd.f32 %v2692, %v2884
      %v2886 = vpop.f32.mrb[0].mxu0
      %2887 = vmatprep.mubr.f32.mxu0 0.0
      %2888 = vmatmul.mubr.f32.gmra.mrb[0].mxu0 %v2750
      %v2889 = vpop.f32.mrb[0].mxu0
      %v2890 = vadd.f32 %v2697, %v2889
      %v2891 = vpop.f32.mrb[0].mxu0
      %2892 = vmatprep.mubr.f32.mxu0 0.0
      %2893 = vmatmul.mubr.f32.gmra.mrb[0].mxu0 %v2753
      %v2894 = vpop.f32.mrb[0].mxu0
      %v2895 = vadd.f32 %v2702, %v2894
      %v2896 = vpop.f32.mrb[0].mxu0
      %2897 = vmatprep.mubr.f32.mxu0 0.0
      %2898 = vmatmul.mubr.f32.gmra.mrb[0].mxu0 %v2756
      %v2899 = vpop.f32.mrb[0].mxu0
      %v2900 = vadd.f32 %v2707, %v2899
      %v2901 = vpop.f32.mrb[0].mxu0
      %2902 = vdwg.mxu0
      %v2903 = vrot.slane %v2386, 1
      %v2904 = vrot.slane %v2387, 1
      %v2905 = vsel %vm1359, %v2903, %v2904
      %v2906 = vrot.slane %v2388, 1
      %v2907 = vsel %vm1359, %v2904, %v2906
      %v2908 = vrot.slane %v2389, 1
      %v2909 = vsel %vm1359, %v2906, %v2908
      %v2910 = vrot.slane %v2390, 1
      %v2911 = vsel %vm1359, %v2908, %v2910
      %v2912 = vrot.slane %v2391, 1
      %v2913 = vsel %vm1359, %v2910, %v2912
      %v2914 = vrot.slane %v2392, 1
      %v2915 = vsel %vm1359, %v2912, %v2914
      %v2916 = vrot.slane %v2393, 1
      %v2917 = vsel %vm1359, %v2914, %v2916
      %v2918 = vrot.slane %v2394, 1
      %v2919 = vsel %vm1359, %v2916, %v2918
      %v2920 = vrot.slane %v2395, 1
      %v2921 = vsel %vm1359, %v2918, %v2920
      %v2922 = vrot.slane %v2396, 1
      %v2923 = vsel %vm1359, %v2920, %v2922
      %v2924 = vrot.slane %v2397, 1
      %v2925 = vsel %vm1359, %v2922, %v2924
      %v2926 = vrot.slane %v2398, 1
      %v2927 = vsel %vm1359, %v2924, %v2926
      %v2928 = vrot.slane %v2399, 1
      %v2929 = vsel %vm1359, %v2926, %v2928
      %v2930 = vrot.slane %v2400, 1
      %v2931 = vsel %vm1359, %v2928, %v2930
      %v2932 = vrot.slane %v2401, 1
      %v2933 = vsel %vm1359, %v2930, %v2932
      %v2951 = vsel %vm1359, %v2932, %v2903
      %vm2952 = vcmp.lt.s32.totalorder %v2467, 7
      %vm2953 = vcmp.lt.s32.totalorder %v2468, 7
      %vm2954 = vcmp.lt.s32.totalorder %v2469, 7
      %vm2955 = vcmp.lt.s32.totalorder %v2470, 7
      %vm2956 = vcmp.lt.s32.totalorder %v2471, 7
      %vm2957 = vcmp.lt.s32.totalorder %v2472, 7
      %vm2958 = vcmp.lt.s32.totalorder %v2473, 7
      %vm2959 = vcmp.lt.s32.totalorder %v2474, 7
      %vm2960 = vcmp.lt.s32.totalorder %v2475, 7
      %vm2961 = vcmp.lt.s32.totalorder %v2476, 7
      %vm2962 = vcmp.lt.s32.totalorder %v2477, 7
      %vm2963 = vcmp.lt.s32.totalorder %v2478, 7
      %vm2964 = vcmp.lt.s32.totalorder %v2479, 7
      %vm2965 = vcmp.lt.s32.totalorder %v2480, 7
      %vm2966 = vcmp.lt.s32.totalorder %v2481, 7
      %vm2967 = vcmp.lt.s32.totalorder %v2482, 7
      %v2968 = vsel %vm2952, %v2905, 0.0
      %v2969 = vsel %vm2953, %v2907, 0.0
      %v2970 = vsel %vm2954, %v2909, 0.0
      %v2971 = vsel %vm2955, %v2911, 0.0
      %v2972 = vsel %vm2956, %v2913, 0.0
      %v2973 = vsel %vm2957, %v2915, 0.0
      %v2974 = vsel %vm2958, %v2917, 0.0
      %v2975 = vsel %vm2959, %v2919, 0.0
      %v2976 = vsel %vm2960, %v2921, 0.0
      %v2977 = vsel %vm2961, %v2923, 0.0
      %v2978 = vsel %vm2962, %v2925, 0.0
      %v2979 = vsel %vm2963, %v2927, 0.0
      %v2980 = vsel %vm2964, %v2929, 0.0
      %v2981 = vsel %vm2965, %v2931, 0.0
      %v2982 = vsel %vm2966, %v2933, 0.0
      %v2983 = vsel %vm2967, %v2951, 0.0
      %s2984 = scalar_lea.vmem %s4, 128
      %v2985 = vld [vmem:[%s2984] sm:$0xff]
      %v2986 = vld [vmem:[%s2984 + $0x8] sm:$0xff]
      %v2987 = vld [vmem:[%s2984 + $0x10] sm:$0xff]
      %v2988 = vld [vmem:[%s2984 + $0x18] sm:$0xff]
      %v2989 = vld [vmem:[%s2984 + $0x20] sm:$0xff]
      %v2990 = vld [vmem:[%s2984 + $0x28] sm:$0xff]
      %v2991 = vld [vmem:[%s2984 + $0x30] sm:$0xff]
      %v2992 = vld [vmem:[%s2984 + $0x38] sm:$0xff]
      %v2994 = vsel %vm2532, %v2968, 0
      %v2997 = vsel %vm2532, %v2969, 0
      %v3000 = vsel %vm2532, %v2970, 0
      %v3003 = vsel %vm2532, %v2971, 0
      %v3006 = vsel %vm2532, %v2972, 0
      %v3009 = vsel %vm2532, %v2973, 0
      %v3012 = vsel %vm2532, %v2974, 0
      %v3015 = vsel %vm2532, %v2975, 0
      %v3018 = vsel %vm2532, %v2976, 0
      %v3021 = vsel %vm2532, %v2977, 0
      %v3024 = vsel %vm2532, %v2978, 0
      %v3027 = vsel %vm2532, %v2979, 0
      %v3030 = vsel %vm2532, %v2980, 0
      %v3033 = vsel %vm2532, %v2981, 0
      %v3036 = vsel %vm2532, %v2982, 0
      %v3039 = vsel %vm2532, %v2983, 0
      %3041 = vmatprep.subr.mxu0 0.0
      %3042 = vmatpush1.msra.mxu0 %v2985
      %3043 = vmatprep.subr.mxu0 0.0
      %3044 = vmatpush1.msra.mxu0 %v2986
      %3045 = vmatprep.subr.mxu0 0.0
      %3046 = vmatpush1.msra.mxu0 %v2987
      %3047 = vmatprep.subr.mxu0 0.0
      %3048 = vmatpush1.msra.mxu0 %v2988
      %3049 = vmatprep.subr.mxu0 0.0
      %3050 = vmatpush1.msra.mxu0 %v2989
      %3051 = vmatprep.subr.mxu0 0.0
      %3052 = vmatpush1.msra.mxu0 %v2990
      %3053 = vmatprep.subr.mxu0 0.0
      %3054 = vmatpush1.msra.mxu0 %v2991
      %3055 = vmatprep.subr.mxu0 0.0
      %3056 = vmatpush1.msra.mxu0 %v2992
      %3057 = vmatprep.subr.mxu0 0.0
      %3058 = vmatpush1.msra.mxu0 0.0
      %3059 = vmatprep.subr.mxu0 0.0
      %3060 = vmatpush1.msra.mxu0 0.0
      %3061 = vmatprep.subr.mxu0 0.0
      %3062 = vmatpush1.msra.mxu0 0.0
      %3063 = vmatprep.subr.mxu0 0.0
      %3064 = vmatpush1.msra.mxu0 0.0
      %3065 = vmatprep.subr.mxu0 0.0
      %3066 = vmatpush1.msra.mxu0 0.0
      %3067 = vmatprep.subr.mxu0 0.0
      %3068 = vmatpush1.msra.mxu0 0.0
      %3069 = vmatprep.subr.mxu0 0.0
      %3070 = vmatpush1.msra.mxu0 0.0
      %3071 = vmatprep.subr.mxu0 0.0
      %3072 = vmatpush1.msra.mxu0 0.0
      %3073 = vmatprep.subr.mxu0 0.0
      %3074 = vmatpush1.msra.mxu0 0.0
      %3075 = vmatprep.subr.mxu0 0.0
      %3076 = vmatpush1.msra.mxu0 0.0
      %3077 = vmatprep.subr.mxu0 0.0
      %3078 = vmatpush1.msra.mxu0 0.0
      %3079 = vmatprep.subr.mxu0 0.0
      %3080 = vmatpush1.msra.mxu0 0.0
      %3081 = vmatprep.subr.mxu0 0.0
      %3082 = vmatpush1.msra.mxu0 0.0
      %3083 = vmatprep.subr.mxu0 0.0
      %3084 = vmatpush1.msra.mxu0 0.0
      %3085 = vmatprep.subr.mxu0 0.0
      %3086 = vmatpush1.msra.mxu0 0.0
      %3087 = vmatprep.subr.mxu0 0.0
      %3088 = vmatpush1.msra.mxu0 0.0
      %3089 = vmatprep.subr.mxu0 0.0
      %3090 = vmatpush1.msra.mxu0 0.0
      %3091 = vmatprep.subr.mxu0 0.0
      %3092 = vmatpush1.msra.mxu0 0.0
      %3093 = vmatprep.subr.mxu0 0.0
      %3094 = vmatpush1.msra.mxu0 0.0
      %3095 = vmatprep.subr.mxu0 0.0
      %3096 = vmatpush1.msra.mxu0 0.0
      %3097 = vmatprep.subr.mxu0 0.0
      %3098 = vmatpush1.msra.mxu0 0.0
      %3099 = vmatprep.subr.mxu0 0.0
      %3100 = vmatpush1.msra.mxu0 0.0
      %3101 = vmatprep.subr.mxu0 0.0
      %3102 = vmatpush1.msra.mxu0 0.0
      %3103 = vmatprep.subr.mxu0 0.0
      %3104 = vmatpush1.msra.mxu0 0.0
      %3105 = vmatprep.mubr.f32.mxu0 0.0
      %3106 = vmatmul.mubr.f32.gmra.mrb[0].mxu0 %v2994
      %v3107 = vpop.f32.mrb[0].mxu0
      %v3108 = vadd.f32 0.0, %v3107
      %v3109 = vpop.f32.mrb[0].mxu0
      %3110 = vmatprep.mubr.f32.mxu0 0.0
      %3111 = vmatmul.mubr.f32.gmra.mrb[0].mxu0 %v2997
      %v3112 = vpop.f32.mrb[0].mxu0
      %v3113 = vadd.f32 0.0, %v3112
      %v3114 = vpop.f32.mrb[0].mxu0
      %3115 = vmatprep.mubr.f32.mxu0 0.0
      %3116 = vmatmul.mubr.f32.gmra.mrb[0].mxu0 %v3000
      %v3117 = vpop.f32.mrb[0].mxu0
      %v3118 = vadd.f32 0.0, %v3117
      %v3119 = vpop.f32.mrb[0].mxu0
      %3120 = vmatprep.mubr.f32.mxu0 0.0
      %3121 = vmatmul.mubr.f32.gmra.mrb[0].mxu0 %v3003
      %v3122 = vpop.f32.mrb[0].mxu0
      %v3123 = vadd.f32 0.0, %v3122
      %v3124 = vpop.f32.mrb[0].mxu0
      %3125 = vmatprep.mubr.f32.mxu0 0.0
      %3126 = vmatmul.mubr.f32.gmra.mrb[0].mxu0 %v3006
      %v3127 = vpop.f32.mrb[0].mxu0
      %v3128 = vadd.f32 0.0, %v3127
      %v3129 = vpop.f32.mrb[0].mxu0
      %3130 = vmatprep.mubr.f32.mxu0 0.0
      %3131 = vmatmul.mubr.f32.gmra.mrb[0].mxu0 %v3009
      %v3132 = vpop.f32.mrb[0].mxu0
      %v3133 = vadd.f32 0.0, %v3132
      %v3134 = vpop.f32.mrb[0].mxu0
      %3135 = vmatprep.mubr.f32.mxu0 0.0
      %3136 = vmatmul.mubr.f32.gmra.mrb[0].mxu0 %v3012
      %v3137 = vpop.f32.mrb[0].mxu0
      %v3138 = vadd.f32 0.0, %v3137
      %v3139 = vpop.f32.mrb[0].mxu0
      %3140 = vmatprep.mubr.f32.mxu0 0.0
      %3141 = vmatmul.mubr.f32.gmra.mrb[0].mxu0 %v3015
      %v3142 = vpop.f32.mrb[0].mxu0
      %v3143 = vadd.f32 0.0, %v3142
      %v3144 = vpop.f32.mrb[0].mxu0
      %3145 = vmatprep.mubr.f32.mxu0 0.0
      %3146 = vmatmul.mubr.f32.gmra.mrb[0].mxu0 %v3018
      %v3147 = vpop.f32.mrb[0].mxu0
      %v3148 = vadd.f32 0.0, %v3147
      %v3149 = vpop.f32.mrb[0].mxu0
      %3150 = vmatprep.mubr.f32.mxu0 0.0
      %3151 = vmatmul.mubr.f32.gmra.mrb[0].mxu0 %v3021
      %v3152 = vpop.f32.mrb[0].mxu0
      %v3153 = vadd.f32 0.0, %v3152
      %v3154 = vpop.f32.mrb[0].mxu0
      %3155 = vmatprep.mubr.f32.mxu0 0.0
      %3156 = vmatmul.mubr.f32.gmra.mrb[0].mxu0 %v3024
      %v3157 = vpop.f32.mrb[0].mxu0
      %v3158 = vadd.f32 0.0, %v3157
      %v3159 = vpop.f32.mrb[0].mxu0
      %3160 = vmatprep.mubr.f32.mxu0 0.0
      %3161 = vmatmul.mubr.f32.gmra.mrb[0].mxu0 %v3027
      %v3162 = vpop.f32.mrb[0].mxu0
      %v3163 = vadd.f32 0.0, %v3162
      %v3164 = vpop.f32.mrb[0].mxu0
      %3165 = vmatprep.mubr.f32.mxu0 0.0
      %3166 = vmatmul.mubr.f32.gmra.mrb[0].mxu0 %v3030
      %v3167 = vpop.f32.mrb[0].mxu0
      %v3168 = vadd.f32 0.0, %v3167
      %v3169 = vpop.f32.mrb[0].mxu0
      %3170 = vmatprep.mubr.f32.mxu0 0.0
      %3171 = vmatmul.mubr.f32.gmra.mrb[0].mxu0 %v3033
      %v3172 = vpop.f32.mrb[0].mxu0
      %v3173 = vadd.f32 0.0, %v3172
      %v3174 = vpop.f32.mrb[0].mxu0
      %3175 = vmatprep.mubr.f32.mxu0 0.0
      %3176 = vmatmul.mubr.f32.gmra.mrb[0].mxu0 %v3036
      %v3177 = vpop.f32.mrb[0].mxu0
      %v3178 = vadd.f32 0.0, %v3177
      %v3179 = vpop.f32.mrb[0].mxu0
      %3180 = vmatprep.mubr.f32.mxu0 0.0
      %3181 = vmatmul.mubr.f32.gmra.mrb[0].mxu0 %v3039
      %v3182 = vpop.f32.mrb[0].mxu0
      %v3183 = vadd.f32 0.0, %v3182
      %v3184 = vpop.f32.mrb[0].mxu0
      %3185 = vdwg.mxu0
      %v3186 = vadd.f32 %v2825, %v3108
      %v3187 = vadd.f32 %v2830, %v3113
      %v3188 = vadd.f32 %v2835, %v3118
      %v3189 = vadd.f32 %v2840, %v3123
      %v3190 = vadd.f32 %v2845, %v3128
      %v3191 = vadd.f32 %v2850, %v3133
      %v3192 = vadd.f32 %v2855, %v3138
      %v3193 = vadd.f32 %v2860, %v3143
      %v3194 = vadd.f32 %v2865, %v3148
      %v3195 = vadd.f32 %v2870, %v3153
      %v3196 = vadd.f32 %v2875, %v3158
      %v3197 = vadd.f32 %v2880, %v3163
      %v3198 = vadd.f32 %v2885, %v3168
      %v3199 = vadd.f32 %v2890, %v3173
      %v3200 = vadd.f32 %v2895, %v3178
      %v3201 = vadd.f32 %v2900, %v3183
      %v3202 = vld [vmem:[%s5] sm:$0x1]
      %v3204 = vlaneseq
      %v3205 = vshrl.u32 %v3204, 7
      %v3206 = vsub.s32 0, %v3205
      %v3207 = vrot.slane %v3202, %v3206
      %v3209 = vadd.f32 %v3186, %v3207
      %v3210 = vadd.f32 %v3187, %v3207
      %v3211 = vadd.f32 %v3188, %v3207
      %v3212 = vadd.f32 %v3189, %v3207
      %v3213 = vadd.f32 %v3190, %v3207
      %v3214 = vadd.f32 %v3191, %v3207
      %v3215 = vadd.f32 %v3192, %v3207
      %v3216 = vadd.f32 %v3193, %v3207
      %v3217 = vadd.f32 %v3194, %v3207
      %v3218 = vadd.f32 %v3195, %v3207
      %v3219 = vadd.f32 %v3196, %v3207
      %v3220 = vadd.f32 %v3197, %v3207
      %v3221 = vadd.f32 %v3198, %v3207
      %v3222 = vadd.f32 %v3199, %v3207
      %v3223 = vadd.f32 %v3200, %v3207
      %v3224 = vadd.f32 %v3201, %v3207
      %v3225 = vmax.f32 %v3209, 0.0
      %v3226 = vmax.f32 %v3210, 0.0
      %v3227 = vmax.f32 %v3211, 0.0
      %v3228 = vmax.f32 %v3212, 0.0
      %v3229 = vmax.f32 %v3213, 0.0
      %v3230 = vmax.f32 %v3214, 0.0
      %v3231 = vmax.f32 %v3215, 0.0
      %v3232 = vmax.f32 %v3216, 0.0
      %v3233 = vmax.f32 %v3217, 0.0
      %v3234 = vmax.f32 %v3218, 0.0
      %v3235 = vmax.f32 %v3219, 0.0
      %v3236 = vmax.f32 %v3220, 0.0
      %v3237 = vmax.f32 %v3221, 0.0
      %v3238 = vmax.f32 %v3222, 0.0
      %v3239 = vmax.f32 %v3223, 0.0
      %v3240 = vmax.f32 %v3224, 0.0
      %3241 = vst [vmem:[#allocation3] sm:$0xff] %v3225
      %3242 = vst [vmem:[#allocation3 + $0x8] sm:$0xff] %v3226
      %3243 = vst [vmem:[#allocation3 + $0x10] sm:$0xff] %v3227
      %3244 = vst [vmem:[#allocation3 + $0x18] sm:$0xff] %v3228
      %3245 = vst [vmem:[#allocation3 + $0x20] sm:$0xff] %v3229
      %3246 = vst [vmem:[#allocation3 + $0x28] sm:$0xff] %v3230
      %3247 = vst [vmem:[#allocation3 + $0x30] sm:$0xff] %v3231
      %3248 = vst [vmem:[#allocation3 + $0x38] sm:$0xff] %v3232
      %3249 = vst [vmem:[#allocation3 + $0x40] sm:$0xff] %v3233
      %3250 = vst [vmem:[#allocation3 + $0x48] sm:$0xff] %v3234
      %3251 = vst [vmem:[#allocation3 + $0x50] sm:$0xff] %v3235
      %3252 = vst [vmem:[#allocation3 + $0x58] sm:$0xff] %v3236
      %3253 = vst [vmem:[#allocation3 + $0x60] sm:$0xff] %v3237
      %3254 = vst [vmem:[#allocation3 + $0x68] sm:$0xff] %v3238
      %3255 = vst [vmem:[#allocation3 + $0x70] sm:$0xff] %v3239
      %3256 = vst [vmem:[#allocation3 + $0x78] sm:$0xff] %v3240
      %v3257 = vld [vmem:[#allocation3] ss:$2 sm:$0xff]
      %s3258 = scalar_lea.vmem [#allocation3], 16
      %v3259 = vld [vmem:[%s3258] ss:$2 sm:$0xff]
      %s3260 = scalar_lea.vmem [#allocation3], 32
      %v3261 = vld [vmem:[%s3260] ss:$2 sm:$0xff]
      %s3262 = scalar_lea.vmem [#allocation3], 48
      %v3263 = vld [vmem:[%s3262] ss:$2 sm:$0xff]
      %s3264 = scalar_lea.vmem [#allocation3], 64
      %v3265 = vld [vmem:[%s3264] ss:$2 sm:$0xff]
      %s3266 = scalar_lea.vmem [#allocation3], 80
      %v3267 = vld [vmem:[%s3266] ss:$2 sm:$0xff]
      %s3268 = scalar_lea.vmem [#allocation3], 96
      %v3269 = vld [vmem:[%s3268] ss:$2 sm:$0xff]
      %s3270 = scalar_lea.vmem [#allocation3], 112
      %v3271 = vld [vmem:[%s3270] ss:$2 sm:$0xff]
      %s3272 = scalar_lea.vmem [#allocation3], 1
      %v3273 = vld [vmem:[%s3272] ss:$2 sm:$0xff]
      %s3274 = scalar_lea.vmem [#allocation3], 17
      %v3275 = vld [vmem:[%s3274] ss:$2 sm:$0xff]
      %s3276 = scalar_lea.vmem [#allocation3], 33
      %v3277 = vld [vmem:[%s3276] ss:$2 sm:$0xff]
      %s3278 = scalar_lea.vmem [#allocation3], 49
      %v3279 = vld [vmem:[%s3278] ss:$2 sm:$0xff]
      %s3280 = scalar_lea.vmem [#allocation3], 65
      %v3281 = vld [vmem:[%s3280] ss:$2 sm:$0xff]
      %s3282 = scalar_lea.vmem [#allocation3], 81
      %v3283 = vld [vmem:[%s3282] ss:$2 sm:$0xff]
      %s3284 = scalar_lea.vmem [#allocation3], 97
      %v3285 = vld [vmem:[%s3284] ss:$2 sm:$0xff]
      %s3286 = scalar_lea.vmem [#allocation3], 113
      %v3287 = vld [vmem:[%s3286] ss:$2 sm:$0xff]
      %v3288 = vmax.f32 %v3257, %v3273
      %v3289 = vmax.f32 %v3259, %v3275
      %v3290 = vmax.f32 %v3261, %v3277
      %v3291 = vmax.f32 %v3263, %v3279
      %v3292 = vmax.f32 %v3265, %v3281
      %v3293 = vmax.f32 %v3267, %v3283
      %v3294 = vmax.f32 %v3269, %v3285
      %v3295 = vmax.f32 %v3271, %v3287
      %v3296 = vld [vmem:[%s6] sm:$0xff]
      %v3297 = vld [vmem:[%s6 + $0x8] sm:$0xff]
      %v3298 = vld [vmem:[%s6 + $0x10] sm:$0xff]
      %v3299 = vld [vmem:[%s6 + $0x18] sm:$0xff]
      %v3300 = vld [vmem:[%s6 + $0x20] sm:$0xff]
      %v3301 = vld [vmem:[%s6 + $0x28] sm:$0xff]
      %v3302 = vld [vmem:[%s6 + $0x30] sm:$0xff]
      %v3303 = vld [vmem:[%s6 + $0x38] sm:$0xff]
      %v3304 = vld [vmem:[%s6 + $0x40] sm:$0xff]
      %v3305 = vld [vmem:[%s6 + $0x48] sm:$0xff]
      %v3306 = vld [vmem:[%s6 + $0x50] sm:$0xff]
      %v3307 = vld [vmem:[%s6 + $0x58] sm:$0xff]
      %v3308 = vld [vmem:[%s6 + $0x60] sm:$0xff]
      %v3309 = vld [vmem:[%s6 + $0x68] sm:$0xff]
      %v3310 = vld [vmem:[%s6 + $0x70] sm:$0xff]
      %v3311 = vld [vmem:[%s6 + $0x78] sm:$0xff]
      %3312 = vmatprep.subr.mxu0 0.0
      %3313 = vmatpush1.msra.mxu0 %v3296
      %3314 = vmatprep.subr.mxu0 0.0
      %3315 = vmatpush1.msra.mxu0 %v3297
      %3316 = vmatprep.subr.mxu0 0.0
      %3317 = vmatpush1.msra.mxu0 %v3298
      %3318 = vmatprep.subr.mxu0 0.0
      %3319 = vmatpush1.msra.mxu0 %v3299
      %3320 = vmatprep.subr.mxu0 0.0
      %3321 = vmatpush1.msra.mxu0 %v3300
      %3322 = vmatprep.subr.mxu0 0.0
      %3323 = vmatpush1.msra.mxu0 %v3301
      %3324 = vmatprep.subr.mxu0 0.0
      %3325 = vmatpush1.msra.mxu0 %v3302
      %3326 = vmatprep.subr.mxu0 0.0
      %3327 = vmatpush1.msra.mxu0 %v3303
      %3328 = vmatprep.subr.mxu0 0.0
      %3329 = vmatpush1.msra.mxu0 %v3304
      %3330 = vmatprep.subr.mxu0 0.0
      %3331 = vmatpush1.msra.mxu0 %v3305
      %3332 = vmatprep.subr.mxu0 0.0
      %3333 = vmatpush1.msra.mxu0 %v3306
      %3334 = vmatprep.subr.mxu0 0.0
      %3335 = vmatpush1.msra.mxu0 %v3307
      %3336 = vmatprep.subr.mxu0 0.0
      %3337 = vmatpush1.msra.mxu0 %v3308
      %3338 = vmatprep.subr.mxu0 0.0
      %3339 = vmatpush1.msra.mxu0 %v3309
      %3340 = vmatprep.subr.mxu0 0.0
      %3341 = vmatpush1.msra.mxu0 %v3310
      %3342 = vmatprep.subr.mxu0 0.0
      %3343 = vmatpush1.msra.mxu0 %v3311
      %3344 = vmatprep.subr.mxu0 0.0
      %3345 = vmatpush1.msra.mxu0 0.0
      %3346 = vmatprep.subr.mxu0 0.0
      %3347 = vmatpush1.msra.mxu0 0.0
      %3348 = vmatprep.subr.mxu0 0.0
      %3349 = vmatpush1.msra.mxu0 0.0
      %3350 = vmatprep.subr.mxu0 0.0
      %3351 = vmatpush1.msra.mxu0 0.0
      %3352 = vmatprep.subr.mxu0 0.0
      %3353 = vmatpush1.msra.mxu0 0.0
      %3354 = vmatprep.subr.mxu0 0.0
      %3355 = vmatpush1.msra.mxu0 0.0
      %3356 = vmatprep.subr.mxu0 0.0
      %3357 = vmatpush1.msra.mxu0 0.0
      %3358 = vmatprep.subr.mxu0 0.0
      %3359 = vmatpush1.msra.mxu0 0.0
      %3360 = vmatprep.subr.mxu0 0.0
      %3361 = vmatpush1.msra.mxu0 0.0
      %3362 = vmatprep.subr.mxu0 0.0
      %3363 = vmatpush1.msra.mxu0 0.0
      %3364 = vmatprep.subr.mxu0 0.0
      %3365 = vmatpush1.msra.mxu0 0.0
      %3366 = vmatprep.subr.mxu0 0.0
      %3367 = vmatpush1.msra.mxu0 0.0
      %3368 = vmatprep.subr.mxu0 0.0
      %3369 = vmatpush1.msra.mxu0 0.0
      %3370 = vmatprep.subr.mxu0 0.0
      %3371 = vmatpush1.msra.mxu0 0.0
      %3372 = vmatprep.subr.mxu0 0.0
      %3373 = vmatpush1.msra.mxu0 0.0
      %3374 = vmatprep.subr.mxu0 0.0
      %3375 = vmatpush1.msra.mxu0 0.0
      %3376 = vmatprep.mubr.f32.mxu0 0.0
      %3377 = vmatmul.mubr.f32.gmra.mrb[0].mxu0 %v3288
      %v3378 = vpop.f32.mrb[0].mxu0
      %v3379 = vadd.f32 0.0, %v3378
      %v3380 = vpop.f32.mrb[0].mxu0
      %3381 = vmatprep.mubr.f32.mxu0 0.0
      %3382 = vmatmul.mubr.f32.gmra.mrb[0].mxu0 %v3289
      %v3383 = vpop.f32.mrb[0].mxu0
      %v3384 = vadd.f32 0.0, %v3383
      %v3385 = vpop.f32.mrb[0].mxu0
      %3386 = vmatprep.mubr.f32.mxu0 0.0
      %3387 = vmatmul.mubr.f32.gmra.mrb[0].mxu0 %v3290
      %v3388 = vpop.f32.mrb[0].mxu0
      %v3389 = vadd.f32 0.0, %v3388
      %v3390 = vpop.f32.mrb[0].mxu0
      %3391 = vmatprep.mubr.f32.mxu0 0.0
      %3392 = vmatmul.mubr.f32.gmra.mrb[0].mxu0 %v3291
      %v3393 = vpop.f32.mrb[0].mxu0
      %v3394 = vadd.f32 0.0, %v3393
      %v3395 = vpop.f32.mrb[0].mxu0
      %3396 = vmatprep.mubr.f32.mxu0 0.0
      %3397 = vmatmul.mubr.f32.gmra.mrb[0].mxu0 %v3292
      %v3398 = vpop.f32.mrb[0].mxu0
      %v3399 = vadd.f32 0.0, %v3398
      %v3400 = vpop.f32.mrb[0].mxu0
      %3401 = vmatprep.mubr.f32.mxu0 0.0
      %3402 = vmatmul.mubr.f32.gmra.mrb[0].mxu0 %v3293
      %v3403 = vpop.f32.mrb[0].mxu0
      %v3404 = vadd.f32 0.0, %v3403
      %v3405 = vpop.f32.mrb[0].mxu0
      %3406 = vmatprep.mubr.f32.mxu0 0.0
      %3407 = vmatmul.mubr.f32.gmra.mrb[0].mxu0 %v3294
      %v3408 = vpop.f32.mrb[0].mxu0
      %v3409 = vadd.f32 0.0, %v3408
      %v3410 = vpop.f32.mrb[0].mxu0
      %3411 = vmatprep.mubr.f32.mxu0 0.0
      %3412 = vmatmul.mubr.f32.gmra.mrb[0].mxu0 %v3295
      %v3413 = vpop.f32.mrb[0].mxu0
      %v3414 = vadd.f32 0.0, %v3413
      %v3415 = vpop.f32.mrb[0].mxu0
      %3416 = vdwg.mxu0
      %s3417 = scalar_lea.vmem %s6, 128
      %v3418 = vld [vmem:[%s3417] sm:$0xff]
      %v3419 = vld [vmem:[%s3417 + $0x8] sm:$0xff]
      %v3420 = vld [vmem:[%s3417 + $0x10] sm:$0xff]
      %v3421 = vld [vmem:[%s3417 + $0x18] sm:$0xff]
      %v3422 = vld [vmem:[%s3417 + $0x20] sm:$0xff]
      %v3423 = vld [vmem:[%s3417 + $0x28] sm:$0xff]
      %v3424 = vld [vmem:[%s3417 + $0x30] sm:$0xff]
      %v3425 = vld [vmem:[%s3417 + $0x38] sm:$0xff]
      %v3426 = vld [vmem:[%s3417 + $0x40] sm:$0xff]
      %v3427 = vld [vmem:[%s3417 + $0x48] sm:$0xff]
      %v3428 = vld [vmem:[%s3417 + $0x50] sm:$0xff]
      %v3429 = vld [vmem:[%s3417 + $0x58] sm:$0xff]
      %v3430 = vld [vmem:[%s3417 + $0x60] sm:$0xff]
      %v3431 = vld [vmem:[%s3417 + $0x68] sm:$0xff]
      %v3432 = vld [vmem:[%s3417 + $0x70] sm:$0xff]
      %v3433 = vld [vmem:[%s3417 + $0x78] sm:$0xff]
      %3434 = vmatprep.subr.mxu0 0.0
      %3435 = vmatpush1.msra.mxu0 %v3418
      %3436 = vmatprep.subr.mxu0 0.0
      %3437 = vmatpush1.msra.mxu0 %v3419
      %3438 = vmatprep.subr.mxu0 0.0
      %3439 = vmatpush1.msra.mxu0 %v3420
      %3440 = vmatprep.subr.mxu0 0.0
      %3441 = vmatpush1.msra.mxu0 %v3421
      %3442 = vmatprep.subr.mxu0 0.0
      %3443 = vmatpush1.msra.mxu0 %v3422
      %3444 = vmatprep.subr.mxu0 0.0
      %3445 = vmatpush1.msra.mxu0 %v3423
      %3446 = vmatprep.subr.mxu0 0.0
      %3447 = vmatpush1.msra.mxu0 %v3424
      %3448 = vmatprep.subr.mxu0 0.0
      %3449 = vmatpush1.msra.mxu0 %v3425
      %3450 = vmatprep.subr.mxu0 0.0
      %3451 = vmatpush1.msra.mxu0 %v3426
      %3452 = vmatprep.subr.mxu0 0.0
      %3453 = vmatpush1.msra.mxu0 %v3427
      %3454 = vmatprep.subr.mxu0 0.0
      %3455 = vmatpush1.msra.mxu0 %v3428
      %3456 = vmatprep.subr.mxu0 0.0
      %3457 = vmatpush1.msra.mxu0 %v3429
      %3458 = vmatprep.subr.mxu0 0.0
      %3459 = vmatpush1.msra.mxu0 %v3430
      %3460 = vmatprep.subr.mxu0 0.0
      %3461 = vmatpush1.msra.mxu0 %v3431
      %3462 = vmatprep.subr.mxu0 0.0
      %3463 = vmatpush1.msra.mxu0 %v3432
      %3464 = vmatprep.subr.mxu0 0.0
      %3465 = vmatpush1.msra.mxu0 %v3433
      %3466 = vmatprep.subr.mxu0 0.0
      %3467 = vmatpush1.msra.mxu0 0.0
      %3468 = vmatprep.subr.mxu0 0.0
      %3469 = vmatpush1.msra.mxu0 0.0
      %3470 = vmatprep.subr.mxu0 0.0
      %3471 = vmatpush1.msra.mxu0 0.0
      %3472 = vmatprep.subr.mxu0 0.0
      %3473 = vmatpush1.msra.mxu0 0.0
      %3474 = vmatprep.subr.mxu0 0.0
      %3475 = vmatpush1.msra.mxu0 0.0
      %3476 = vmatprep.subr.mxu0 0.0
      %3477 = vmatpush1.msra.mxu0 0.0
      %3478 = vmatprep.subr.mxu0 0.0
      %3479 = vmatpush1.msra.mxu0 0.0
      %3480 = vmatprep.subr.mxu0 0.0
      %3481 = vmatpush1.msra.mxu0 0.0
      %3482 = vmatprep.subr.mxu0 0.0
      %3483 = vmatpush1.msra.mxu0 0.0
      %3484 = vmatprep.subr.mxu0 0.0
      %3485 = vmatpush1.msra.mxu0 0.0
      %3486 = vmatprep.subr.mxu0 0.0
      %3487 = vmatpush1.msra.mxu0 0.0
      %3488 = vmatprep.subr.mxu0 0.0
      %3489 = vmatpush1.msra.mxu0 0.0
      %3490 = vmatprep.subr.mxu0 0.0
      %3491 = vmatpush1.msra.mxu0 0.0
      %3492 = vmatprep.subr.mxu0 0.0
      %3493 = vmatpush1.msra.mxu0 0.0
      %3494 = vmatprep.subr.mxu0 0.0
      %3495 = vmatpush1.msra.mxu0 0.0
      %3496 = vmatprep.subr.mxu0 0.0
      %3497 = vmatpush1.msra.mxu0 0.0
      %3498 = vmatprep.mubr.f32.mxu0 0.0
      %3499 = vmatmul.mubr.f32.gmra.mrb[0].mxu0 %v3288
      %v3500 = vpop.f32.mrb[0].mxu0
      %v3501 = vadd.f32 0.0, %v3500
      %v3502 = vpop.f32.mrb[0].mxu0
      %3503 = vmatprep.mubr.f32.mxu0 0.0
      %3504 = vmatmul.mubr.f32.gmra.mrb[0].mxu0 %v3289
      %v3505 = vpop.f32.mrb[0].mxu0
      %v3506 = vadd.f32 0.0, %v3505
      %v3507 = vpop.f32.mrb[0].mxu0
      %3508 = vmatprep.mubr.f32.mxu0 0.0
      %3509 = vmatmul.mubr.f32.gmra.mrb[0].mxu0 %v3290
      %v3510 = vpop.f32.mrb[0].mxu0
      %v3511 = vadd.f32 0.0, %v3510
      %v3512 = vpop.f32.mrb[0].mxu0
      %3513 = vmatprep.mubr.f32.mxu0 0.0
      %3514 = vmatmul.mubr.f32.gmra.mrb[0].mxu0 %v3291
      %v3515 = vpop.f32.mrb[0].mxu0
      %v3516 = vadd.f32 0.0, %v3515
      %v3517 = vpop.f32.mrb[0].mxu0
      %3518 = vmatprep.mubr.f32.mxu0 0.0
      %3519 = vmatmul.mubr.f32.gmra.mrb[0].mxu0 %v3292
      %v3520 = vpop.f32.mrb[0].mxu0
      %v3521 = vadd.f32 0.0, %v3520
      %v3522 = vpop.f32.mrb[0].mxu0
      %3523 = vmatprep.mubr.f32.mxu0 0.0
      %3524 = vmatmul.mubr.f32.gmra.mrb[0].mxu0 %v3293
      %v3525 = vpop.f32.mrb[0].mxu0
      %v3526 = vadd.f32 0.0, %v3525
      %v3527 = vpop.f32.mrb[0].mxu0
      %3528 = vmatprep.mubr.f32.mxu0 0.0
      %3529 = vmatmul.mubr.f32.gmra.mrb[0].mxu0 %v3294
      %v3530 = vpop.f32.mrb[0].mxu0
      %v3531 = vadd.f32 0.0, %v3530
      %v3532 = vpop.f32.mrb[0].mxu0
      %3533 = vmatprep.mubr.f32.mxu0 0.0
      %3534 = vmatmul.mubr.f32.gmra.mrb[0].mxu0 %v3295
      %v3535 = vpop.f32.mrb[0].mxu0
      %v3536 = vadd.f32 0.0, %v3535
      %v3537 = vpop.f32.mrb[0].mxu0
      %3538 = vdwg.mxu0
      %v3539 = vmax.f32 %v3379, %v3501
      %v3540 = vmax.f32 %v3384, %v3506
      %v3541 = vmax.f32 %v3389, %v3511
      %v3542 = vmax.f32 %v3394, %v3516
      %v3543 = vmax.f32 %v3399, %v3521
      %v3544 = vmax.f32 %v3404, %v3526
      %v3545 = vmax.f32 %v3409, %v3531
      %v3546 = vmax.f32 %v3414, %v3536
      %3547 = vst.msk [vmem:[#allocation4] sm:$0xff] %vm2532, %v3539
      %3548 = vst.msk [vmem:[#allocation4 + $0x8] sm:$0xff] %vm2532, %v3540
      %3549 = vst.msk [vmem:[#allocation4 + $0x10] sm:$0xff] %vm2532, %v3541
      %3550 = vst.msk [vmem:[#allocation4 + $0x18] sm:$0xff] %vm2532, %v3542
      %3551 = vst.msk [vmem:[#allocation4 + $0x20] sm:$0xff] %vm2532, %v3543
      %3552 = vst.msk [vmem:[#allocation4 + $0x28] sm:$0xff] %vm2532, %v3544
      %3553 = vst.msk [vmem:[#allocation4 + $0x30] sm:$0xff] %vm2532, %v3545
      %3554 = vst.msk [vmem:[#allocation4 + $0x38] sm:$0xff] %vm2532, %v3546
      %v3555 = vld [vmem:[#allocation4] ss:$4 sm:$0xff]
      %s3556 = scalar_lea.vmem [#allocation4], 32
      %v3557 = vld [vmem:[%s3556] ss:$4 sm:$0xff]
      %s3558 = scalar_lea.vmem [#allocation4], 1
      %v3559 = vld [vmem:[%s3558] ss:$4 sm:$0xff]
      %s3560 = scalar_lea.vmem [#allocation4], 33
      %v3561 = vld [vmem:[%s3560] ss:$4 sm:$0xff]
      %v3562 = vadd.f32 %v3555, %v3559
      %v3563 = vadd.f32 %v3557, %v3561
      %s3564 = scalar_lea.vmem [#allocation4], 2
      %v3565 = vld [vmem:[%s3564] ss:$4 sm:$0xff]
      %s3566 = scalar_lea.vmem [#allocation4], 34
      %v3567 = vld [vmem:[%s3566] ss:$4 sm:$0xff]
      %s3568 = scalar_lea.vmem [#allocation4], 3
      %v3569 = vld [vmem:[%s3568] ss:$4 sm:$0xff]
      %s3570 = scalar_lea.vmem [#allocation4], 35
      %v3571 = vld [vmem:[%s3570] ss:$4 sm:$0xff]
      %v3572 = vadd.f32 %v3565, %v3569
      %v3573 = vadd.f32 %v3567, %v3571
      %v3574 = vld [vmem:[%s7] sm:$0xff]
      %v3575 = vld [vmem:[%s7 + $0x8] sm:$0xff]
      %v3576 = vld [vmem:[%s7 + $0x10] sm:$0xff]
      %v3577 = vld [vmem:[%s7 + $0x18] sm:$0xff]
      %v3578 = vld [vmem:[%s7 + $0x20] sm:$0xff]
      %v3579 = vld [vmem:[%s7 + $0x28] sm:$0xff]
      %v3580 = vld [vmem:[%s7 + $0x30] sm:$0xff]
      %v3581 = vld [vmem:[%s7 + $0x38] sm:$0xff]
      %s3582 = scalar_lea.vmem %s7, 64
      %v3583 = vld [vmem:[%s3582] sm:$0xff]
      %v3584 = vld [vmem:[%s3582 + $0x8] sm:$0xff]
      %v3585 = vld [vmem:[%s3582 + $0x10] sm:$0xff]
      %v3586 = vld [vmem:[%s3582 + $0x18] sm:$0xff]
      %v3587 = vld [vmem:[%s3582 + $0x20] sm:$0xff]
      %v3588 = vld [vmem:[%s3582 + $0x28] sm:$0xff]
      %v3589 = vld [vmem:[%s3582 + $0x30] sm:$0xff]
      %v3590 = vld [vmem:[%s3582 + $0x38] sm:$0xff]
      %v3592 = vsel %vm2532, %v3572, 0
      %v3595 = vsel %vm2532, %v3573, 0
      %3597 = vmatprep.subr.mxu0 0.0
      %3598 = vmatpush1.msra.mxu0 %v3583
      %3599 = vmatprep.subr.mxu0 0.0
      %3600 = vmatpush1.msra.mxu0 %v3584
      %3601 = vmatprep.subr.mxu0 0.0
      %3602 = vmatpush1.msra.mxu0 %v3585
      %3603 = vmatprep.subr.mxu0 0.0
      %3604 = vmatpush1.msra.mxu0 %v3586
      %3605 = vmatprep.subr.mxu0 0.0
      %3606 = vmatpush1.msra.mxu0 %v3587
      %3607 = vmatprep.subr.mxu0 0.0
      %3608 = vmatpush1.msra.mxu0 %v3588
      %3609 = vmatprep.subr.mxu0 0.0
      %3610 = vmatpush1.msra.mxu0 %v3589
      %3611 = vmatprep.subr.mxu0 0.0
      %3612 = vmatpush1.msra.mxu0 %v3590
      %3613 = vmatprep.subr.mxu0 0.0
      %3614 = vmatpush1.msra.mxu0 0.0
      %3615 = vmatprep.subr.mxu0 0.0
      %3616 = vmatpush1.msra.mxu0 0.0
      %3617 = vmatprep.subr.mxu0 0.0
      %3618 = vmatpush1.msra.mxu0 0.0
      %3619 = vmatprep.subr.mxu0 0.0
      %3620 = vmatpush1.msra.mxu0 0.0
      %3621 = vmatprep.subr.mxu0 0.0
      %3622 = vmatpush1.msra.mxu0 0.0
      %3623 = vmatprep.subr.mxu0 0.0
      %3624 = vmatpush1.msra.mxu0 0.0
      %3625 = vmatprep.subr.mxu0 0.0
      %3626 = vmatpush1.msra.mxu0 0.0
      %3627 = vmatprep.subr.mxu0 0.0
      %3628 = vmatpush1.msra.mxu0 0.0
      %3629 = vmatprep.subr.mxu0 0.0
      %3630 = vmatpush1.msra.mxu0 0.0
      %3631 = vmatprep.subr.mxu0 0.0
      %3632 = vmatpush1.msra.mxu0 0.0
      %3633 = vmatprep.subr.mxu0 0.0
      %3634 = vmatpush1.msra.mxu0 0.0
      %3635 = vmatprep.subr.mxu0 0.0
      %3636 = vmatpush1.msra.mxu0 0.0
      %3637 = vmatprep.subr.mxu0 0.0
      %3638 = vmatpush1.msra.mxu0 0.0
      %3639 = vmatprep.subr.mxu0 0.0
      %3640 = vmatpush1.msra.mxu0 0.0
      %3641 = vmatprep.subr.mxu0 0.0
      %3642 = vmatpush1.msra.mxu0 0.0
      %3643 = vmatprep.subr.mxu0 0.0
      %3644 = vmatpush1.msra.mxu0 0.0
      %3645 = vmatprep.subr.mxu0 0.0
      %3646 = vmatpush1.msra.mxu0 0.0
      %3647 = vmatprep.subr.mxu0 0.0
      %3648 = vmatpush1.msra.mxu0 0.0
      %3649 = vmatprep.subr.mxu0 0.0
      %3650 = vmatpush1.msra.mxu0 0.0
      %3651 = vmatprep.subr.mxu0 0.0
      %3652 = vmatpush1.msra.mxu0 0.0
      %3653 = vmatprep.subr.mxu0 0.0
      %3654 = vmatpush1.msra.mxu0 0.0
      %3655 = vmatprep.subr.mxu0 0.0
      %3656 = vmatpush1.msra.mxu0 0.0
      %3657 = vmatprep.subr.mxu0 0.0
      %3658 = vmatpush1.msra.mxu0 0.0
      %3659 = vmatprep.subr.mxu0 0.0
      %3660 = vmatpush1.msra.mxu0 0.0
      %3661 = vmatprep.mubr.f32.mxu0 0.0
      %3662 = vmatmul.mubr.f32.gmra.mrb[0].mxu0 %v3592
      %v3663 = vpop.f32.mrb[0].mxu0
      %v3664 = vadd.f32 0.0, %v3663
      %v3665 = vpop.f32.mrb[0].mxu0
      %3666 = vmatprep.mubr.f32.mxu0 0.0
      %3667 = vmatmul.mubr.f32.gmra.mrb[0].mxu0 %v3595
      %v3668 = vpop.f32.mrb[0].mxu0
      %v3669 = vadd.f32 0.0, %v3668
      %v3670 = vpop.f32.mrb[0].mxu0
      %3671 = vdwg.mxu0
      %v3673 = vsel %vm2532, %v3562, 0
      %v3676 = vsel %vm2532, %v3563, 0
      %3678 = vmatprep.subr.mxu0 0.0
      %3679 = vmatpush1.msra.mxu0 %v3574
      %3680 = vmatprep.subr.mxu0 0.0
      %3681 = vmatpush1.msra.mxu0 %v3575
      %3682 = vmatprep.subr.mxu0 0.0
      %3683 = vmatpush1.msra.mxu0 %v3576
      %3684 = vmatprep.subr.mxu0 0.0
      %3685 = vmatpush1.msra.mxu0 %v3577
      %3686 = vmatprep.subr.mxu0 0.0
      %3687 = vmatpush1.msra.mxu0 %v3578
      %3688 = vmatprep.subr.mxu0 0.0
      %3689 = vmatpush1.msra.mxu0 %v3579
      %3690 = vmatprep.subr.mxu0 0.0
      %3691 = vmatpush1.msra.mxu0 %v3580
      %3692 = vmatprep.subr.mxu0 0.0
      %3693 = vmatpush1.msra.mxu0 %v3581
      %3694 = vmatprep.subr.mxu0 0.0
      %3695 = vmatpush1.msra.mxu0 0.0
      %3696 = vmatprep.subr.mxu0 0.0
      %3697 = vmatpush1.msra.mxu0 0.0
      %3698 = vmatprep.subr.mxu0 0.0
      %3699 = vmatpush1.msra.mxu0 0.0
      %3700 = vmatprep.subr.mxu0 0.0
      %3701 = vmatpush1.msra.mxu0 0.0
      %3702 = vmatprep.subr.mxu0 0.0
      %3703 = vmatpush1.msra.mxu0 0.0
      %3704 = vmatprep.subr.mxu0 0.0
      %3705 = vmatpush1.msra.mxu0 0.0
      %3706 = vmatprep.subr.mxu0 0.0
      %3707 = vmatpush1.msra.mxu0 0.0
      %3708 = vmatprep.subr.mxu0 0.0
      %3709 = vmatpush1.msra.mxu0 0.0
      %3710 = vmatprep.subr.mxu0 0.0
      %3711 = vmatpush1.msra.mxu0 0.0
      %3712 = vmatprep.subr.mxu0 0.0
      %3713 = vmatpush1.msra.mxu0 0.0
      %3714 = vmatprep.subr.mxu0 0.0
      %3715 = vmatpush1.msra.mxu0 0.0
      %3716 = vmatprep.subr.mxu0 0.0
      %3717 = vmatpush1.msra.mxu0 0.0
      %3718 = vmatprep.subr.mxu0 0.0
      %3719 = vmatpush1.msra.mxu0 0.0
      %3720 = vmatprep.subr.mxu0 0.0
      %3721 = vmatpush1.msra.mxu0 0.0
      %3722 = vmatprep.subr.mxu0 0.0
      %3723 = vmatpush1.msra.mxu0 0.0
      %3724 = vmatprep.subr.mxu0 0.0
      %3725 = vmatpush1.msra.mxu0 0.0
      %3726 = vmatprep.subr.mxu0 0.0
      %3727 = vmatpush1.msra.mxu0 0.0
      %3728 = vmatprep.subr.mxu0 0.0
      %3729 = vmatpush1.msra.mxu0 0.0
      %3730 = vmatprep.subr.mxu0 0.0
      %3731 = vmatpush1.msra.mxu0 0.0
      %3732 = vmatprep.subr.mxu0 0.0
      %3733 = vmatpush1.msra.mxu0 0.0
      %3734 = vmatprep.subr.mxu0 0.0
      %3735 = vmatpush1.msra.mxu0 0.0
      %3736 = vmatprep.subr.mxu0 0.0
      %3737 = vmatpush1.msra.mxu0 0.0
      %3738 = vmatprep.subr.mxu0 0.0
      %3739 = vmatpush1.msra.mxu0 0.0
      %3740 = vmatprep.subr.mxu0 0.0
      %3741 = vmatpush1.msra.mxu0 0.0
      %3742 = vmatprep.mubr.f32.mxu0 0.0
      %3743 = vmatmul.mubr.f32.gmra.mrb[0].mxu0 %v3673
      %v3744 = vpop.f32.mrb[0].mxu0
      %v3745 = vadd.f32 %v3664, %v3744
      %v3746 = vpop.f32.mrb[0].mxu0
      %3747 = vmatprep.mubr.f32.mxu0 0.0
      %3748 = vmatmul.mubr.f32.gmra.mrb[0].mxu0 %v3676
      %v3749 = vpop.f32.mrb[0].mxu0
      %v3750 = vadd.f32 %v3669, %v3749
      %v3751 = vpop.f32.mrb[0].mxu0
      %3752 = vdwg.mxu0
      %v3753 = vld [vmem:[%s8] sm:$0x1]
      %v3755 = vlaneseq
      %v3756 = vshrl.u32 %v3755, 7
      %v3757 = vsub.s32 0, %v3756
      %v3758 = vrot.slane %v3753, %v3757
      %v3760 = vadd.f32 %v3745, %v3758
      %v3761 = vadd.f32 %v3750, %v3758
      %v3762 = vmax.f32 %v3760, 0.0
      %v3763 = vmax.f32 %v3761, 0.0
      %v3764 = vld [vmem:[%s9] sm:$0xff]
      %v3765 = vld [vmem:[%s9 + $0x8] sm:$0xff]
      %v3766 = vld [vmem:[%s9 + $0x10] sm:$0xff]
      %v3767 = vld [vmem:[%s9 + $0x18] sm:$0xff]
      %v3768 = vld [vmem:[%s10] sm:$0x1]
      %v3770 = vlaneseq
      %v3771 = vshrl.u32 %v3770, 7
      %v3772 = vsub.s32 0, %v3771
      %v3773 = vrot.slane %v3768, %v3772
      %vm3775 = vcmask 261120
      %v3777 = vsel %vm3775, %v3762, 0
      %v3780 = vsel %vm3775, %v3763, 0
      %3782 = vmatprep.subr.mxu0 0.0
      %3783 = vmatpush1.msra.mxu0 %v3764
      %3784 = vmatprep.subr.mxu0 0.0
      %3785 = vmatpush1.msra.mxu0 %v3765
      %3786 = vmatprep.subr.mxu0 0.0
      %3787 = vmatpush1.msra.mxu0 %v3766
      %3788 = vmatprep.subr.mxu0 0.0
      %3789 = vmatpush1.msra.mxu0 %v3767
      %3790 = vmatprep.subr.mxu0 0.0
      %3791 = vmatpush1.msra.mxu0 0.0
      %3792 = vmatprep.subr.mxu0 0.0
      %3793 = vmatpush1.msra.mxu0 0.0
      %3794 = vmatprep.subr.mxu0 0.0
      %3795 = vmatpush1.msra.mxu0 0.0
      %3796 = vmatprep.subr.mxu0 0.0
      %3797 = vmatpush1.msra.mxu0 0.0
      %3798 = vmatprep.subr.mxu0 0.0
      %3799 = vmatpush1.msra.mxu0 0.0
      %3800 = vmatprep.subr.mxu0 0.0
      %3801 = vmatpush1.msra.mxu0 0.0
      %3802 = vmatprep.subr.mxu0 0.0
      %3803 = vmatpush1.msra.mxu0 0.0
      %3804 = vmatprep.subr.mxu0 0.0
      %3805 = vmatpush1.msra.mxu0 0.0
      %3806 = vmatprep.subr.mxu0 0.0
      %3807 = vmatpush1.msra.mxu0 0.0
      %3808 = vmatprep.subr.mxu0 0.0
      %3809 = vmatpush1.msra.mxu0 0.0
      %3810 = vmatprep.subr.mxu0 0.0
      %3811 = vmatpush1.msra.mxu0 0.0
      %3812 = vmatprep.subr.mxu0 0.0
      %3813 = vmatpush1.msra.mxu0 0.0
      %3814 = vmatprep.subr.mxu0 0.0
      %3815 = vmatpush1.msra.mxu0 0.0
      %3816 = vmatprep.subr.mxu0 0.0
      %3817 = vmatpush1.msra.mxu0 0.0
      %3818 = vmatprep.subr.mxu0 0.0
      %3819 = vmatpush1.msra.mxu0 0.0
      %3820 = vmatprep.subr.mxu0 0.0
      %3821 = vmatpush1.msra.mxu0 0.0
      %3822 = vmatprep.subr.mxu0 0.0
      %3823 = vmatpush1.msra.mxu0 0.0
      %3824 = vmatprep.subr.mxu0 0.0
      %3825 = vmatpush1.msra.mxu0 0.0
      %3826 = vmatprep.subr.mxu0 0.0
      %3827 = vmatpush1.msra.mxu0 0.0
      %3828 = vmatprep.subr.mxu0 0.0
      %3829 = vmatpush1.msra.mxu0 0.0
      %3830 = vmatprep.subr.mxu0 0.0
      %3831 = vmatpush1.msra.mxu0 0.0
      %3832 = vmatprep.subr.mxu0 0.0
      %3833 = vmatpush1.msra.mxu0 0.0
      %3834 = vmatprep.subr.mxu0 0.0
      %3835 = vmatpush1.msra.mxu0 0.0
      %3836 = vmatprep.subr.mxu0 0.0
      %3837 = vmatpush1.msra.mxu0 0.0
      %3838 = vmatprep.subr.mxu0 0.0
      %3839 = vmatpush1.msra.mxu0 0.0
      %3840 = vmatprep.subr.mxu0 0.0
      %3841 = vmatpush1.msra.mxu0 0.0
      %3842 = vmatprep.subr.mxu0 0.0
      %3843 = vmatpush1.msra.mxu0 0.0
      %3844 = vmatprep.subr.mxu0 0.0
      %3845 = vmatpush1.msra.mxu0 0.0
      %3846 = vmatprep.mubr.f32.mxu0 0.0
      %3847 = vmatmul.mubr.f32.gmra.mrb[0].mxu0 %v3777
      %v3848 = vpop.f32.mrb[0].mxu0
      %v3849 = vadd.f32 %v3773, %v3848
      %v3850 = vpop.f32.mrb[0].mxu0
      %3851 = vmatprep.mubr.f32.mxu0 0.0
      %3852 = vmatmul.mubr.f32.gmra.mrb[0].mxu0 %v3780
      %v3853 = vpop.f32.mrb[0].mxu0
      %v3854 = vadd.f32 %v3773, %v3853
      %v3855 = vpop.f32.mrb[0].mxu0
      %3856 = vdwg.mxu0
      %v3857 = vmax.f32 %v3849, 0.0
      %v3858 = vmax.f32 %v3854, 0.0
      %v3859 = vld [vmem:[%s11] sm:$0xff]
      %v3860 = vld [vmem:[%s11 + $0x8] sm:$0xff]
      %v3861 = vld [vmem:[%s11 + $0x10] sm:$0xff]
      %v3862 = vld [vmem:[%s11 + $0x18] sm:$0xff]
      %v3863 = vld [vmem:[%s12] sm:$0x1]
      %v3865 = vlaneseq
      %v3866 = vshrl.u32 %v3865, 7
      %v3867 = vsub.s32 0, %v3866
      %v3868 = vrot.slane %v3863, %v3867
      %v3871 = vsel %vm3775, %v3857, 0
      %v3874 = vsel %vm3775, %v3858, 0
      %3876 = vmatprep.subr.mxu0 0.0
      %3877 = vmatpush1.msra.mxu0 %v3859
      %3878 = vmatprep.subr.mxu0 0.0
      %3879 = vmatpush1.msra.mxu0 %v3860
      %3880 = vmatprep.subr.mxu0 0.0
      %3881 = vmatpush1.msra.mxu0 %v3861
      %3882 = vmatprep.subr.mxu0 0.0
      %3883 = vmatpush1.msra.mxu0 %v3862
      %3884 = vmatprep.subr.mxu0 0.0
      %3885 = vmatpush1.msra.mxu0 0.0
      %3886 = vmatprep.subr.mxu0 0.0
      %3887 = vmatpush1.msra.mxu0 0.0
      %3888 = vmatprep.subr.mxu0 0.0
      %3889 = vmatpush1.msra.mxu0 0.0
      %3890 = vmatprep.subr.mxu0 0.0
      %3891 = vmatpush1.msra.mxu0 0.0
      %3892 = vmatprep.subr.mxu0 0.0
      %3893 = vmatpush1.msra.mxu0 0.0
      %3894 = vmatprep.subr.mxu0 0.0
      %3895 = vmatpush1.msra.mxu0 0.0
      %3896 = vmatprep.subr.mxu0 0.0
      %3897 = vmatpush1.msra.mxu0 0.0
      %3898 = vmatprep.subr.mxu0 0.0
      %3899 = vmatpush1.msra.mxu0 0.0
      %3900 = vmatprep.subr.mxu0 0.0
      %3901 = vmatpush1.msra.mxu0 0.0
      %3902 = vmatprep.subr.mxu0 0.0
      %3903 = vmatpush1.msra.mxu0 0.0
      %3904 = vmatprep.subr.mxu0 0.0
      %3905 = vmatpush1.msra.mxu0 0.0
      %3906 = vmatprep.subr.mxu0 0.0
      %3907 = vmatpush1.msra.mxu0 0.0
      %3908 = vmatprep.subr.mxu0 0.0
      %3909 = vmatpush1.msra.mxu0 0.0
      %3910 = vmatprep.subr.mxu0 0.0
      %3911 = vmatpush1.msra.mxu0 0.0
      %3912 = vmatprep.subr.mxu0 0.0
      %3913 = vmatpush1.msra.mxu0 0.0
      %3914 = vmatprep.subr.mxu0 0.0
      %3915 = vmatpush1.msra.mxu0 0.0
      %3916 = vmatprep.subr.mxu0 0.0
      %3917 = vmatpush1.msra.mxu0 0.0
      %3918 = vmatprep.subr.mxu0 0.0
      %3919 = vmatpush1.msra.mxu0 0.0
      %3920 = vmatprep.subr.mxu0 0.0
      %3921 = vmatpush1.msra.mxu0 0.0
      %3922 = vmatprep.subr.mxu0 0.0
      %3923 = vmatpush1.msra.mxu0 0.0
      %3924 = vmatprep.subr.mxu0 0.0
      %3925 = vmatpush1.msra.mxu0 0.0
      %3926 = vmatprep.subr.mxu0 0.0
      %3927 = vmatpush1.msra.mxu0 0.0
      %3928 = vmatprep.subr.mxu0 0.0
      %3929 = vmatpush1.msra.mxu0 0.0
      %3930 = vmatprep.subr.mxu0 0.0
      %3931 = vmatpush1.msra.mxu0 0.0
      %3932 = vmatprep.subr.mxu0 0.0
      %3933 = vmatpush1.msra.mxu0 0.0
      %3934 = vmatprep.subr.mxu0 0.0
      %3935 = vmatpush1.msra.mxu0 0.0
      %3936 = vmatprep.subr.mxu0 0.0
      %3937 = vmatpush1.msra.mxu0 0.0
      %3938 = vmatprep.subr.mxu0 0.0
      %3939 = vmatpush1.msra.mxu0 0.0
      %3940 = vmatprep.mubr.f32.mxu0 0.0
      %3941 = vmatmul.mubr.f32.gmra.mrb[0].mxu0 %v3871
      %v3942 = vpop.f32.mrb[0].mxu0
      %v3943 = vadd.f32 %v3868, %v3942
      %v3944 = vpop.f32.mrb[0].mxu0
      %3945 = vmatprep.mubr.f32.mxu0 0.0
      %3946 = vmatmul.mubr.f32.gmra.mrb[0].mxu0 %v3874
      %v3947 = vpop.f32.mrb[0].mxu0
      %v3948 = vadd.f32 %v3868, %v3947
      %v3949 = vpop.f32.mrb[0].mxu0
      %3950 = vdwg.mxu0
      %3951 = vst [vmem:[%s442] sm:$0xff] %v3943
      %3952 = vst [vmem:[%s442 + $0x8] sm:$0xff] %v3948
      %s3953 = smul.u32 2, %s24
      %p3954 = scmp.lt.s32.totalorder %s3953, 3
      %s3955 = scalar_select %p3954, %s3953, 3
      %s3956 = smul.addr %s3955, 8
      %s3957 = scalar_lea.vmem %s13, %s3956
      // Predicated region
      $region73: #{stanford_base_forward.1} parent=71 // pred_check
        %p3958 = pneg %p320
      $region74: #{stanford_base_forward.1} parent=71 // pred_check_branch
        %3960 = sbr.rel (%p3958) target = $region76
      $region75: #{stanford_base_forward.1} parent=71 // pred_region
        %s3961 = smul.u32 2, %s24
      $region76: #{stanford_base_forward.1} parent=71 // pred_fallthru
        _
    $region72: #{stanford_base_forward.1} parent=5 // pred_fallthru
      _
    %p3962 = scmp.le.s32.totalorder 2, %s19
    // Predicated region
    $region77: #{stanford_base_forward.1} parent=5 // pred_check
      %p3963 = pneg %p3962
    $region78: #{stanford_base_forward.1} parent=5 // pred_check_branch
      %3965 = sbr.rel (%p3963) target = $region80
    $region79: #{stanford_base_forward.1} parent=5 // pred_region
      %s3966 = ssub.s32 %s19, 2
      // Predicated region
      $region81: #{stanford_base_forward.1} parent=79 // pred_check
        %p3967 = pneg %p326
      $region82: #{stanford_base_forward.1} parent=79 // pred_check_branch
        %3969 = sbr.rel (%p3967) target = $region84
      $region83: #{stanford_base_forward.1} parent=79 // pred_region
        %s3970 = smul.u32 2, %s25
        %p3971 = scmp.lt.s32.totalorder %s3970, 3
        %s3972 = scalar_select %p3971, %s3970, 3
        %s3973 = smul.addr %s3972, 8
        %s3974 = scalar_lea.vmem %s13, %s3973
      $region84: #{stanford_base_forward.1} parent=79 // pred_fallthru
        _
    $region80: #{stanford_base_forward.1} parent=5 // pred_fallthru
      _
  $region6: #{stanford_base_forward.1} parent=0 // loop_footer
    %s23 = sadd.s32 1, %s19
  $region7: #{stanford_base_forward.1} parent=0 // loop_footer_branch
    %18 = sbr.rel target = $region3
  $region8: #{stanford_base_forward.1} parent=0 // loop_exit
    _

</llo_original>
